<compile_context>
chip_gen: v6e
topology: v6e:2x2x1
jax: 0.10.0
libtpu: 0.0.40
codegen_flags: <defaults>
</compile_context>

<pallas_src>
import math
import jax
import jax.numpy as jnp
from jax.experimental import pallas as pl
from jax.experimental.pallas import tpu as pltpu


# --------------------------- tiled matmul + bias ------------------------------
# Shared by the hoisted LSTM input projection and the FC vocab projection.
def _matmul_bias_kernel(x_ref, w_ref, b_ref, o_ref, acc_ref):
    @pl.when(pl.program_id(2) == 0)
    def _():
        acc_ref[...] = jnp.zeros_like(acc_ref)

    acc_ref[...] += jnp.dot(x_ref[...], w_ref[...],
                            preferred_element_type=jnp.float32)

    @pl.when(pl.program_id(2) == pl.num_programs(2) - 1)
    def _():
        o_ref[...] = (acc_ref[...] + b_ref[...]).astype(o_ref.dtype)


def matmul_bias(x, w, b, *, tm=256, tn=512, tk=512, out_dtype=jnp.float32):
    """(M,K) @ (K,N) + b -> (M,N). x/w are bf16, accumulation is f32."""
    M, K = x.shape
    N = w.shape[-1]
    tm, tn, tk = min(tm, M), min(tn, N), min(tk, K)
    assert M % tm == 0 and N % tn == 0 and K % tk == 0, (M, N, K, tm, tn, tk)
    return pl.pallas_call(
        _matmul_bias_kernel,
        out_shape=jax.ShapeDtypeStruct((M, N), out_dtype),
        grid=(M // tm, N // tn, K // tk),
        in_specs=[pl.BlockSpec((tm, tk), lambda i, j, k: (i, k)),
                  pl.BlockSpec((tk, tn), lambda i, j, k: (k, j)),
                  pl.BlockSpec((1, tn), lambda i, j, k: (0, j))],
        out_specs=pl.BlockSpec((tm, tn), lambda i, j, k: (i, j)),
        scratch_shapes=[pltpu.VMEM((tm, tn), jnp.float32)],
        compiler_params=pltpu.CompilerParams(
            dimension_semantics=("parallel", "parallel", "arbitrary")),
    )(x, w, b.reshape(1, N))


# ----------------------------- LSTM layer kernel -----------------------------
def _sigmoid(x):
    # sigmoid(x) = 1 / (1 + exp(-x)); approx reciprocal runs on the EUP
    # reciprocal path, cheaper than a full logistic lowering.
    return pl.reciprocal(1.0 + jnp.exp(-x), approx=True)


def _lstm_layer_kernel(gx_ref, w_hh_ref, h0_ref, c0_ref,
                       y_ref, hT_ref, cT_ref, h_sc, c_sc):
    t = pl.program_id(1)                       # time-tile index (sequential)

    @pl.when(t == 0)
    def _():
        h_sc[...] = h0_ref[...]
        c_sc[...] = c0_ref[...]

    H = h_sc.shape[-1]
    TT = gx_ref.shape[0]

    def step(s, carry):
        # Only the recurrent part lives in the serial loop; the input
        # projection (x @ W_ih + biases) was hoisted and arrives via gx_ref.
        gates = gx_ref[s] + jnp.dot(h_sc[...].astype(w_hh_ref.dtype),
                                    w_hh_ref[...],
                                    preferred_element_type=jnp.float32)
        i = _sigmoid(gates[:, 0 * H:1 * H])
        f = _sigmoid(gates[:, 1 * H:2 * H])
        g = jnp.tanh(gates[:, 2 * H:3 * H])
        o = _sigmoid(gates[:, 3 * H:4 * H])
        c_new = f * c_sc[...] + i * g
        h_new = o * jnp.tanh(c_new)
        c_sc[...] = c_new
        h_sc[...] = h_new
        y_ref[s] = h_new.astype(y_ref.dtype)
        return carry

    jax.lax.fori_loop(0, TT, step, 0, unroll=True)

    # Final hidden/cell state written once, on the last time tile only.
    @pl.when(t == pl.num_programs(1) - 1)
    def _():
        hT_ref[...] = h_sc[...]
        cT_ref[...] = c_sc[...]


def lstm_layer(gates_x, w_hh, h0, c0, *, tt=8, bb=16):
    """gates_x: (T,B,4H) f32; w_hh: (H,4H) bf16; h0/c0: (B,H) f32."""
    T, B, H4 = gates_x.shape
    H = h0.shape[-1]
    tt, bb = min(tt, T), min(bb, B)
    assert T % tt == 0 and B % bb == 0, (T, B, tt, bb)
    return pl.pallas_call(
        _lstm_layer_kernel,
        out_shape=(jax.ShapeDtypeStruct((T, B, H), jnp.bfloat16),
                   jax.ShapeDtypeStruct((B, H), jnp.float32),
                   jax.ShapeDtypeStruct((B, H), jnp.float32)),
        grid=(B // bb, T // tt),
        in_specs=[pl.BlockSpec((tt, bb, H4), lambda b, t: (t, b, 0)),
                  pl.BlockSpec((H, H4), lambda b, t: (0, 0)),
                  pl.BlockSpec((bb, H), lambda b, t: (b, 0)),
                  pl.BlockSpec((bb, H), lambda b, t: (b, 0))],
        out_specs=(pl.BlockSpec((tt, bb, H), lambda b, t: (t, b, 0)),
                   pl.BlockSpec((bb, H), lambda b, t: (b, 0)),
                   pl.BlockSpec((bb, H), lambda b, t: (b, 0))),
        scratch_shapes=[pltpu.VMEM((bb, H), jnp.float32),
                        pltpu.VMEM((bb, H), jnp.float32)],
        compiler_params=pltpu.CompilerParams(
            # batch tiles are independent (sharded across v7x TensorCores);
            # the time axis carries the recurrence -> sequential.
            dimension_semantics=("parallel", "arbitrary")),
    )(gates_x, w_hh, h0, c0)


# ------------------------------ parameter setup ------------------------------
def init_params(key, vocab_size, emb_dim, hid_dim, num_layers):
    r = 1.0 / math.sqrt(hid_dim)
    keys = jax.random.split(key, 3 + 4 * num_layers)
    params = {
        # matches init_weights(): embedding uniform(-0.1, 1/sqrt(H))
        "embedding": jax.random.uniform(keys[0], (vocab_size, emb_dim),
                                        jnp.float32, -0.1, r),
        "fc_w": jax.random.uniform(keys[1], (hid_dim, vocab_size),
                                   jnp.float32, -r, r).astype(jnp.bfloat16),
        "fc_b": jnp.zeros((vocab_size,), jnp.float32),
    }
    layers = []
    for l in range(num_layers):
        din = emb_dim if l == 0 else hid_dim
        k = keys[3 + 4 * l: 3 + 4 * (l + 1)]
        # stored transposed vs PyTorch: (in_features, 4H) so kernels do x @ W.
        w_ih = jax.random.uniform(k[0], (din, 4 * hid_dim), jnp.float32, -r, r)
        w_hh = jax.random.uniform(k[1], (hid_dim, 4 * hid_dim),
                                  jnp.float32, -r, r)
        b_ih = jax.random.uniform(k[2], (4 * hid_dim,), jnp.float32, -r, r)
        b_hh = jax.random.uniform(k[3], (4 * hid_dim,), jnp.float32, -r, r)
        layers.append({"w_ih": w_ih.astype(jnp.bfloat16),
                       "w_hh": w_hh.astype(jnp.bfloat16),
                       "b": b_ih + b_hh})        # biases folded together (f32)
    params["lstm"] = layers
    return params


# ---------------------------------- forward ----------------------------------
def forward(params, src, hidden):
    """src: [B, T] int32 tokens; hidden: (h0, c0) each [L, B, H]."""
    h0_all, c0_all = hidden
    B, T = src.shape
    # TODO(synk): dropout layers (input / inter-layer / output) are identity
    # here (eval-mode semantics); no RNG mask is applied.
    emb = params["embedding"][src]                           # [B,T,E] gather
    x = jnp.transpose(emb, (1, 0, 2)).astype(jnp.bfloat16)   # [T,B,E] time-major
    h_fin, c_fin = [], []
    for l, lp in enumerate(params["lstm"]):
        din = x.shape[-1]
        h4 = lp["w_hh"].shape[-1]
        # Hoisted input projection: one big MXU matmul over all timesteps.
        gx = matmul_bias(x.reshape(T * B, din), lp["w_ih"], lp["b"])
        x, hT, cT = lstm_layer(gx.reshape(T, B, h4), lp["w_hh"],
                               h0_all[l], c0_all[l])
        h_fin.append(hT)
        c_fin.append(cT)
    out2d = jnp.transpose(x, (1, 0, 2)).reshape(B * T, -1)   # [B*T, H] bf16
    logits = matmul_bias(out2d, params["fc_w"], params["fc_b"])
    prediction = logits.reshape(B, T, -1)                    # [B, T, vocab]
    return prediction, (jnp.stack(h_fin), jnp.stack(c_fin))


if __name__ == "__main__":
    # Small but TPU-aligned shapes: B multiple of 8, H/E/vocab multiples of 128.
    vocab_size, emb_dim, hid_dim, num_layers = 256, 128, 128, 2
    B, T = 8, 16

    key = jax.random.PRNGKey(0)
    pkey, skey = jax.random.split(key)
    params = init_params(pkey, vocab_size, emb_dim, hid_dim, num_layers)

    src = jax.random.randint(skey, (B, T), 0, vocab_size, dtype=jnp.int32)
    hidden = (jnp.zeros((num_layers, B, hid_dim), jnp.float32),
              jnp.zeros((num_layers, B, hid_dim), jnp.float32))

    fwd = jax.jit(forward)
    prediction, (hT, cT) = fwd(params, src, hidden)
    jax.block_until_ready((prediction, hT, cT))

    assert prediction.shape == (B, T, vocab_size)
    assert hT.shape == (num_layers, B, hid_dim)
    assert cT.shape == (num_layers, B, hid_dim)
    assert bool(jnp.all(jnp.isfinite(prediction)))
    print("KERNEL_OK")
</pallas_src>

<mosaic_0001>
module attributes {stable_mosaic.version = 11 : i64} {
  func.func @_matmul_bias_kernel(%arg0: i32, %arg1: i32, %arg2: i32, %arg3: memref<128x128xbf16, #tpu.memory_space<vmem>>, %arg4: memref<128x512xbf16, #tpu.memory_space<vmem>>, %arg5: memref<1x512xf32, #tpu.memory_space<vmem>>, %arg6: memref<128x512xf32, #tpu.memory_space<vmem>>, %arg7: memref<128x512xf32, #tpu.memory_space<vmem>>) attributes {dimension_semantics = [#tpu.dimension_semantics<parallel>, #tpu.dimension_semantics<parallel>, #tpu.dimension_semantics<arbitrary>], iteration_bounds = array<i64: 1, 1, 1>, scalar_prefetch = 0 : i64, scratch_operands = 1 : i64, tpu.core_type = #tpu.core_type<tc>, window_params = [{transform_indices = @transform_0, window_bounds = array<i64: 128, 128>}, {transform_indices = @transform_1, window_bounds = array<i64: 128, 512>}, {transform_indices = @transform_2, window_bounds = array<i64: 1, 512>}, {transform_indices = @transform_3, window_bounds = array<i64: 128, 512>}]} {
    %c0_i32 = arith.constant 0 : i32
    %0 = arith.cmpi eq, %arg2, %c0_i32 : i32
    %1 = arith.extui %0 : i1 to i32
    %c0_i32_0 = arith.constant 0 : i32
    %2 = arith.cmpi ne, %1, %c0_i32_0 : i32
    scf.if %2 {
      %cst_10 = arith.constant 0.000000e+00 : f32
      %12 = vector.broadcast %cst_10 : f32 to vector<128x512xf32>
      %c0_11 = arith.constant 0 : index
      %c0_12 = arith.constant 0 : index
      %13 = vector.load %arg7[%c0_11, %c0_12] : memref<128x512xf32, #tpu.memory_space<vmem>>, vector<128x512xf32>
      tpu.vector_store %arg7[%c0_11, %c0_12], %12 {strides = array<i32>} : memref<128x512xf32, #tpu.memory_space<vmem>>, vector<128x512xf32>,
    } else {
    }
    %c0 = arith.constant 0 : index
    %c0_1 = arith.constant 0 : index
    %3 = vector.load %arg7[%c0, %c0_1] : memref<128x512xf32, #tpu.memory_space<vmem>>, vector<128x512xf32>
    %c0_2 = arith.constant 0 : index
    %c0_3 = arith.constant 0 : index
    %4 = vector.load %arg3[%c0_2, %c0_3] : memref<128x128xbf16, #tpu.memory_space<vmem>>, vector<128x128xbf16>
    %c0_4 = arith.constant 0 : index
    %c0_5 = arith.constant 0 : index
    %5 = vector.load %arg4[%c0_4, %c0_5] : memref<128x512xbf16, #tpu.memory_space<vmem>>, vector<128x512xbf16>
    %cst = arith.constant dense<0.000000e+00> : vector<128x512xf32>
    %6 = tpu.matmul %4, %5, %cst {dimension_numbers = #tpu.dot_dimension_numbers<[1], [0], [0], [1], [0, 0, 1, 1], [], []>} : vector<128x128xbf16>, vector<128x512xbf16>, vector<128x512xf32> -> vector<128x512xf32>
    %7 = arith.addf %3, %6 : vector<128x512xf32>
    %c0_6 = arith.constant 0 : index
    %c0_7 = arith.constant 0 : index
    %8 = vector.load %arg7[%c0_6, %c0_7] : memref<128x512xf32, #tpu.memory_space<vmem>>, vector<128x512xf32>
    tpu.vector_store %arg7[%c0_6, %c0_7], %7 {strides = array<i32>} : memref<128x512xf32, #tpu.memory_space<vmem>>, vector<128x512xf32>,
    %c0_i32_8 = arith.constant 0 : i32
    %9 = arith.cmpi eq, %arg2, %c0_i32_8 : i32
    %10 = arith.extui %9 : i1 to i32
    %c0_i32_9 = arith.constant 0 : i32
    %11 = arith.cmpi ne, %10, %c0_i32_9 : i32
    scf.if %11 {
      %c0_10 = arith.constant 0 : index
      %c0_11 = arith.constant 0 : index
      %12 = vector.load %arg7[%c0_10, %c0_11] : memref<128x512xf32, #tpu.memory_space<vmem>>, vector<128x512xf32>
      %c0_12 = arith.constant 0 : index
      %c0_13 = arith.constant 0 : index
      %13 = vector.load %arg5[%c0_12, %c0_13] : memref<1x512xf32, #tpu.memory_space<vmem>>, vector<1x512xf32>
      %14 = vector.broadcast %13 : vector<1x512xf32> to vector<128x512xf32>
      %15 = arith.addf %12, %14 : vector<128x512xf32>
      %c0_14 = arith.constant 0 : index
      %c0_15 = arith.constant 0 : index
      %16 = vector.load %arg6[%c0_14, %c0_15] : memref<128x512xf32, #tpu.memory_space<vmem>>, vector<128x512xf32>
      tpu.vector_store %arg6[%c0_14, %c0_15], %15 {strides = array<i32>} : memref<128x512xf32, #tpu.memory_space<vmem>>, vector<128x512xf32>,
    } else {
    }
    return
  }
  func.func @transform_0(%arg0: i32, %arg1: i32, %arg2: i32) -> (i32, i32) {
    %c0_i32 = arith.constant 0 : i32
    return %arg0, %arg2 : i32, i32
  }
  func.func @transform_1(%arg0: i32, %arg1: i32, %arg2: i32) -> (i32, i32) {
    %c0_i32 = arith.constant 0 : i32
    return %arg2, %arg1 : i32, i32
  }
  func.func @transform_2(%arg0: i32, %arg1: i32, %arg2: i32) -> (i32, i32) {
    %c0_i32 = arith.constant 0 : i32
    %c0_i32_0 = arith.constant 0 : i32
    return %c0_i32, %arg1 : i32, i32
  }
  func.func @transform_3(%arg0: i32, %arg1: i32, %arg2: i32) -> (i32, i32) {
    %c0_i32 = arith.constant 0 : i32
    return %arg0, %arg1 : i32, i32
  }
}

module attributes {stable_mosaic.version = 11 : i64} {
  func.func @_lstm_layer_kernel(%arg0: i32, %arg1: i32, %arg2: memref<8x8x512xf32, #tpu.memory_space<vmem>>, %arg3: memref<128x512xbf16, #tpu.memory_space<vmem>>, %arg4: memref<8x128xf32, #tpu.memory_space<vmem>>, %arg5: memref<8x128xf32, #tpu.memory_space<vmem>>, %arg6: memref<8x8x128xbf16, #tpu.memory_space<vmem>>, %arg7: memref<8x128xf32, #tpu.memory_space<vmem>>, %arg8: memref<8x128xf32, #tpu.memory_space<vmem>>, %arg9: memref<8x128xf32, #tpu.memory_space<vmem>>, %arg10: memref<8x128xf32, #tpu.memory_space<vmem>>) attributes {dimension_semantics = [#tpu.dimension_semantics<parallel>, #tpu.dimension_semantics<arbitrary>], iteration_bounds = array<i64: 1, 2>, scalar_prefetch = 0 : i64, scratch_operands = 2 : i64, tpu.core_type = #tpu.core_type<tc>, window_params = [{transform_indices = @transform_0, window_bounds = array<i64: 8, 8, 512>}, {pipeline_mode = #tpu.pipeline_mode<synchronous>, transform_indices = @transform_1, window_bounds = array<i64: 128, 512>}, {transform_indices = @transform_2, window_bounds = array<i64: 8, 128>}, {transform_indices = @transform_3, window_bounds = array<i64: 8, 128>}, {transform_indices = @transform_4, window_bounds = array<i64: 8, 8, 128>}, {transform_indices = @transform_5, window_bounds = array<i64: 8, 128>}, {transform_indices = @transform_6, window_bounds = array<i64: 8, 128>}]} {
    %c0_i32 = arith.constant 0 : i32
    %0 = arith.cmpi eq, %arg1, %c0_i32 : i32
    %1 = arith.extui %0 : i1 to i32
    %c0_i32_0 = arith.constant 0 : i32
    %2 = arith.cmpi ne, %1, %c0_i32_0 : i32
    scf.if %2 {
      %c0_170 = arith.constant 0 : index
      %c0_171 = arith.constant 0 : index
      %358 = vector.load %arg4[%c0_170, %c0_171] : memref<8x128xf32, #tpu.memory_space<vmem>>, vector<8x128xf32>
      %c0_172 = arith.constant 0 : index
      %c0_173 = arith.constant 0 : index
      %359 = vector.load %arg9[%c0_172, %c0_173] : memref<8x128xf32, #tpu.memory_space<vmem>>, vector<8x128xf32>
      tpu.vector_store %arg9[%c0_172, %c0_173], %358 {strides = array<i32>} : memref<8x128xf32, #tpu.memory_space<vmem>>, vector<8x128xf32>,
      %c0_174 = arith.constant 0 : index
      %c0_175 = arith.constant 0 : index
      %360 = vector.load %arg5[%c0_174, %c0_175] : memref<8x128xf32, #tpu.memory_space<vmem>>, vector<8x128xf32>
      %c0_176 = arith.constant 0 : index
      %c0_177 = arith.constant 0 : index
      %361 = vector.load %arg10[%c0_176, %c0_177] : memref<8x128xf32, #tpu.memory_space<vmem>>, vector<8x128xf32>
      tpu.vector_store %arg10[%c0_176, %c0_177], %360 {strides = array<i32>} : memref<8x128xf32, #tpu.memory_space<vmem>>, vector<8x128xf32>,
    } else {
    }
    %c0_i32_1 = arith.constant 0 : i32
    %3 = arith.index_cast %c0_i32_1 : i32 to index
    %c0 = arith.constant 0 : index
    %c0_2 = arith.constant 0 : index
    %4 = vector.load %arg2[%3, %c0, %c0_2] : memref<8x8x512xf32, #tpu.memory_space<vmem>>, vector<1x8x512xf32>
    %5 = vector.shape_cast %4 : vector<1x8x512xf32> to vector<8x512xf32>
    %c0_3 = arith.constant 0 : index
    %c0_4 = arith.constant 0 : index
    %6 = vector.load %arg9[%c0_3, %c0_4] : memref<8x128xf32, #tpu.memory_space<vmem>>, vector<8x128xf32>
    %7 = arith.truncf %6 : vector<8x128xf32> to vector<8x128xbf16>
    %c0_5 = arith.constant 0 : index
    %c0_6 = arith.constant 0 : index
    %8 = vector.load %arg3[%c0_5, %c0_6] : memref<128x512xbf16, #tpu.memory_space<vmem>>, vector<128x512xbf16>
    %cst = arith.constant dense<0.000000e+00> : vector<8x512xf32>
    %9 = tpu.matmul %7, %8, %cst {dimension_numbers = #tpu.dot_dimension_numbers<[1], [0], [0], [1], [0, 0, 1, 1], [], []>} : vector<8x128xbf16>, vector<128x512xbf16>, vector<8x512xf32> -> vector<8x512xf32>
    %10 = arith.addf %5, %9 : vector<8x512xf32>
    %11 = vector.extract_strided_slice %10 {offsets = [0, 0], sizes = [8, 128], strides = [1, 1]} : vector<8x512xf32> to vector<8x128xf32>
    %cst_7 = arith.constant 0.000000e+00 : f32
    %12 = vector.broadcast %cst_7 : f32 to vector<8x128xf32>
    %13 = arith.subf %12, %11 : vector<8x128xf32>
    %14 = math.exp %13 : vector<8x128xf32>
    %cst_8 = arith.constant 1.000000e+00 : f32
    %15 = vector.broadcast %cst_8 : f32 to vector<8x128xf32>
    %16 = arith.addf %15, %14 : vector<8x128xf32>
    %17 = tpu.reciprocal %16 {approx = true} : vector<8x128xf32> -> vector<8x128xf32>
    %18 = vector.extract_strided_slice %10 {offsets = [0, 128], sizes = [8, 128], strides = [1, 1]} : vector<8x512xf32> to vector<8x128xf32>
    %cst_9 = arith.constant 0.000000e+00 : f32
    %19 = vector.broadcast %cst_9 : f32 to vector<8x128xf32>
    %20 = arith.subf %19, %18 : vector<8x128xf32>
    %21 = math.exp %20 : vector<8x128xf32>
    %cst_10 = arith.constant 1.000000e+00 : f32
    %22 = vector.broadcast %cst_10 : f32 to vector<8x128xf32>
    %23 = arith.addf %22, %21 : vector<8x128xf32>
    %24 = tpu.reciprocal %23 {approx = true} : vector<8x128xf32> -> vector<8x128xf32>
    %25 = vector.extract_strided_slice %10 {offsets = [0, 256], sizes = [8, 128], strides = [1, 1]} : vector<8x512xf32> to vector<8x128xf32>
    %26 = math.tanh %25 : vector<8x128xf32>
    %27 = vector.extract_strided_slice %10 {offsets = [0, 384], sizes = [8, 128], strides = [1, 1]} : vector<8x512xf32> to vector<8x128xf32>
    %cst_11 = arith.constant 0.000000e+00 : f32
    %28 = vector.broadcast %cst_11 : f32 to vector<8x128xf32>
    %29 = arith.subf %28, %27 : vector<8x128xf32>
    %30 = math.exp %29 : vector<8x128xf32>
    %cst_12 = arith.constant 1.000000e+00 : f32
    %31 = vector.broadcast %cst_12 : f32 to vector<8x128xf32>
    %32 = arith.addf %31, %30 : vector<8x128xf32>
    %33 = tpu.reciprocal %32 {approx = true} : vector<8x128xf32> -> vector<8x128xf32>
    %c0_13 = arith.constant 0 : index
    %c0_14 = arith.constant 0 : index
    %34 = vector.load %arg10[%c0_13, %c0_14] : memref<8x128xf32, #tpu.memory_space<vmem>>, vector<8x128xf32>
    %35 = arith.mulf %24, %34 : vector<8x128xf32>
    %36 = arith.mulf %17, %26 : vector<8x128xf32>
    %37 = arith.addf %35, %36 : vector<8x128xf32>
    %38 = math.tanh %37 : vector<8x128xf32>
    %39 = arith.mulf %33, %38 : vector<8x128xf32>
    %c0_15 = arith.constant 0 : index
    %c0_16 = arith.constant 0 : index
    %40 = vector.load %arg10[%c0_15, %c0_16] : memref<8x128xf32, #tpu.memory_space<vmem>>, vector<8x128xf32>
    tpu.vector_store %arg10[%c0_15, %c0_16], %37 {strides = array<i32>} : memref<8x128xf32, #tpu.memory_space<vmem>>, vector<8x128xf32>,
    %c0_17 = arith.constant 0 : index
    %c0_18 = arith.constant 0 : index
    %41 = vector.load %arg9[%c0_17, %c0_18] : memref<8x128xf32, #tpu.memory_space<vmem>>, vector<8x128xf32>
    tpu.vector_store %arg9[%c0_17, %c0_18], %39 {strides = array<i32>} : memref<8x128xf32, #tpu.memory_space<vmem>>, vector<8x128xf32>,
    %42 = arith.truncf %39 : vector<8x128xf32> to vector<8x128xbf16>
    %43 = arith.index_cast %c0_i32_1 : i32 to index
    %c0_19 = arith.constant 0 : index
    %c0_20 = arith.constant 0 : index
    %44 = vector.load %arg6[%43, %c0_19, %c0_20] : memref<8x8x128xbf16, #tpu.memory_space<vmem>>, vector<1x8x128xbf16>
    %45 = vector.shape_cast %44 : vector<1x8x128xbf16> to vector<8x128xbf16>
    %46 = vector.shape_cast %42 : vector<8x128xbf16> to vector<1x8x128xbf16>
    tpu.vector_store %arg6[%43, %c0_19, %c0_20], %46 {strides = array<i32>} : memref<8x8x128xbf16, #tpu.memory_space<vmem>>, vector<1x8x128xbf16>,
    %c1_i32 = arith.constant 1 : i32
    %47 = arith.index_cast %c1_i32 : i32 to index
    %c0_21 = arith.constant 0 : index
    %c0_22 = arith.constant 0 : index
    %48 = vector.load %arg2[%47, %c0_21, %c0_22] : memref<8x8x512xf32, #tpu.memory_space<vmem>>, vector<1x8x512xf32>
    %49 = vector.shape_cast %48 : vector<1x8x512xf32> to vector<8x512xf32>
    %c0_23 = arith.constant 0 : index
    %c0_24 = arith.constant 0 : index
    %50 = vector.load %arg9[%c0_23, %c0_24] : memref<8x128xf32, #tpu.memory_space<vmem>>, vector<8x128xf32>
    %51 = arith.truncf %50 : vector<8x128xf32> to vector<8x128xbf16>
    %c0_25 = arith.constant 0 : index
    %c0_26 = arith.constant 0 : index
    %52 = vector.load %arg3[%c0_25, %c0_26] : memref<128x512xbf16, #tpu.memory_space<vmem>>, vector<128x512xbf16>
    %cst_27 = arith.constant dense<0.000000e+00> : vector<8x512xf32>
    %53 = tpu.matmul %51, %52, %cst_27 {dimension_numbers = #tpu.dot_dimension_numbers<[1], [0], [0], [1], [0, 0, 1, 1], [], []>} : vector<8x128xbf16>, vector<128x512xbf16>, vector<8x512xf32> -> vector<8x512xf32>
    %54 = arith.addf %49, %53 : vector<8x512xf32>
    %55 = vector.extract_strided_slice %54 {offsets = [0, 0], sizes = [8, 128], strides = [1, 1]} : vector<8x512xf32> to vector<8x128xf32>
    %cst_28 = arith.constant 0.000000e+00 : f32
    %56 = vector.broadcast %cst_28 : f32 to vector<8x128xf32>
    %57 = arith.subf %56, %55 : vector<8x128xf32>
    %58 = math.exp %57 : vector<8x128xf32>
    %cst_29 = arith.constant 1.000000e+00 : f32
    %59 = vector.broadcast %cst_29 : f32 to vector<8x128xf32>
    %60 = arith.addf %59, %58 : vector<8x128xf32>
    %61 = tpu.reciprocal %60 {approx = true} : vector<8x128xf32> -> vector<8x128xf32>
    %62 = vector.extract_strided_slice %54 {offsets = [0, 128], sizes = [8, 128], strides = [1, 1]} : vector<8x512xf32> to vector<8x128xf32>
    %cst_30 = arith.constant 0.000000e+00 : f32
    %63 = vector.broadcast %cst_30 : f32 to vector<8x128xf32>
    %64 = arith.subf %63, %62 : vector<8x128xf32>
    %65 = math.exp %64 : vector<8x128xf32>
    %cst_31 = arith.constant 1.000000e+00 : f32
    %66 = vector.broadcast %cst_31 : f32 to vector<8x128xf32>
    %67 = arith.addf %66, %65 : vector<8x128xf32>
    %68 = tpu.reciprocal %67 {approx = true} : vector<8x128xf32> -> vector<8x128xf32>
    %69 = vector.extract_strided_slice %54 {offsets = [0, 256], sizes = [8, 128], strides = [1, 1]} : vector<8x512xf32> to vector<8x128xf32>
    %70 = math.tanh %69 : vector<8x128xf32>
    %71 = vector.extract_strided_slice %54 {offsets = [0, 384], sizes = [8, 128], strides = [1, 1]} : vector<8x512xf32> to vector<8x128xf32>
    %cst_32 = arith.constant 0.000000e+00 : f32
    %72 = vector.broadcast %cst_32 : f32 to vector<8x128xf32>
    %73 = arith.subf %72, %71 : vector<8x128xf32>
    %74 = math.exp %73 : vector<8x128xf32>
    %cst_33 = arith.constant 1.000000e+00 : f32
    %75 = vector.broadcast %cst_33 : f32 to vector<8x128xf32>
    %76 = arith.addf %75, %74 : vector<8x128xf32>
    %77 = tpu.reciprocal %76 {approx = true} : vector<8x128xf32> -> vector<8x128xf32>
    %c0_34 = arith.constant 0 : index
    %c0_35 = arith.constant 0 : index
    %78 = vector.load %arg10[%c0_34, %c0_35] : memref<8x128xf32, #tpu.memory_space<vmem>>, vector<8x128xf32>
    %79 = arith.mulf %68, %78 : vector<8x128xf32>
    %80 = arith.mulf %61, %70 : vector<8x128xf32>
    %81 = arith.addf %79, %80 : vector<8x128xf32>
    %82 = math.tanh %81 : vector<8x128xf32>
    %83 = arith.mulf %77, %82 : vector<8x128xf32>
    %c0_36 = arith.constant 0 : index
    %c0_37 = arith.constant 0 : index
    %84 = vector.load %arg10[%c0_36, %c0_37] : memref<8x128xf32, #tpu.memory_space<vmem>>, vector<8x128xf32>
    tpu.vector_store %arg10[%c0_36, %c0_37], %81 {strides = array<i32>} : memref<8x128xf32, #tpu.memory_space<vmem>>, vector<8x128xf32>,
    %c0_38 = arith.constant 0 : index
    %c0_39 = arith.constant 0 : index
    %85 = vector.load %arg9[%c0_38, %c0_39] : memref<8x128xf32, #tpu.memory_space<vmem>>, vector<8x128xf32>
    tpu.vector_store %arg9[%c0_38, %c0_39], %83 {strides = array<i32>} : memref<8x128xf32, #tpu.memory_space<vmem>>, vector<8x128xf32>,
    %86 = arith.truncf %83 : vector<8x128xf32> to vector<8x128xbf16>
    %87 = arith.index_cast %c1_i32 : i32 to index
    %c0_40 = arith.constant 0 : index
    %c0_41 = arith.constant 0 : index
    %88 = vector.load %arg6[%87, %c0_40, %c0_41] : memref<8x8x128xbf16, #tpu.memory_space<vmem>>, vector<1x8x128xbf16>
    %89 = vector.shape_cast %88 : vector<1x8x128xbf16> to vector<8x128xbf16>
    %90 = vector.shape_cast %86 : vector<8x128xbf16> to vector<1x8x128xbf16>
    tpu.vector_store %arg6[%87, %c0_40, %c0_41], %90 {strides = array<i32>} : memref<8x8x128xbf16, #tpu.memory_space<vmem>>, vector<1x8x128xbf16>,
    %c2_i32 = arith.constant 2 : i32
    %91 = arith.index_cast %c2_i32 : i32 to index
    %c0_42 = arith.constant 0 : index
    %c0_43 = arith.constant 0 : index
    %92 = vector.load %arg2[%91, %c0_42, %c0_43] : memref<8x8x512xf32, #tpu.memory_space<vmem>>, vector<1x8x512xf32>
    %93 = vector.shape_cast %92 : vector<1x8x512xf32> to vector<8x512xf32>
    %c0_44 = arith.constant 0 : index
    %c0_45 = arith.constant 0 : index
    %94 = vector.load %arg9[%c0_44, %c0_45] : memref<8x128xf32, #tpu.memory_space<vmem>>, vector<8x128xf32>
    %95 = arith.truncf %94 : vector<8x128xf32> to vector<8x128xbf16>
    %c0_46 = arith.constant 0 : index
    %c0_47 = arith.constant 0 : index
    %96 = vector.load %arg3[%c0_46, %c0_47] : memref<128x512xbf16, #tpu.memory_space<vmem>>, vector<128x512xbf16>
    %cst_48 = arith.constant dense<0.000000e+00> : vector<8x512xf32>
    %97 = tpu.matmul %95, %96, %cst_48 {dimension_numbers = #tpu.dot_dimension_numbers<[1], [0], [0], [1], [0, 0, 1, 1], [], []>} : vector<8x128xbf16>, vector<128x512xbf16>, vector<8x512xf32> -> vector<8x512xf32>
    %98 = arith.addf %93, %97 : vector<8x512xf32>
    %99 = vector.extract_strided_slice %98 {offsets = [0, 0], sizes = [8, 128], strides = [1, 1]} : vector<8x512xf32> to vector<8x128xf32>
    %cst_49 = arith.constant 0.000000e+00 : f32
    %100 = vector.broadcast %cst_49 : f32 to vector<8x128xf32>
    %101 = arith.subf %100, %99 : vector<8x128xf32>
    %102 = math.exp %101 : vector<8x128xf32>
    %cst_50 = arith.constant 1.000000e+00 : f32
    %103 = vector.broadcast %cst_50 : f32 to vector<8x128xf32>
    %104 = arith.addf %103, %102 : vector<8x128xf32>
    %105 = tpu.reciprocal %104 {approx = true} : vector<8x128xf32> -> vector<8x128xf32>
    %106 = vector.extract_strided_slice %98 {offsets = [0, 128], sizes = [8, 128], strides = [1, 1]} : vector<8x512xf32> to vector<8x128xf32>
    %cst_51 = arith.constant 0.000000e+00 : f32
    %107 = vector.broadcast %cst_51 : f32 to vector<8x128xf32>
    %108 = arith.subf %107, %106 : vector<8x128xf32>
    %109 = math.exp %108 : vector<8x128xf32>
    %cst_52 = arith.constant 1.000000e+00 : f32
    %110 = vector.broadcast %cst_52 : f32 to vector<8x128xf32>
    %111 = arith.addf %110, %109 : vector<8x128xf32>
    %112 = tpu.reciprocal %111 {approx = true} : vector<8x128xf32> -> vector<8x128xf32>
    %113 = vector.extract_strided_slice %98 {offsets = [0, 256], sizes = [8, 128], strides = [1, 1]} : vector<8x512xf32> to vector<8x128xf32>
    %114 = math.tanh %113 : vector<8x128xf32>
    %115 = vector.extract_strided_slice %98 {offsets = [0, 384], sizes = [8, 128], strides = [1, 1]} : vector<8x512xf32> to vector<8x128xf32>
    %cst_53 = arith.constant 0.000000e+00 : f32
    %116 = vector.broadcast %cst_53 : f32 to vector<8x128xf32>
    %117 = arith.subf %116, %115 : vector<8x128xf32>
    %118 = math.exp %117 : vector<8x128xf32>
    %cst_54 = arith.constant 1.000000e+00 : f32
    %119 = vector.broadcast %cst_54 : f32 to vector<8x128xf32>
    %120 = arith.addf %119, %118 : vector<8x128xf32>
    %121 = tpu.reciprocal %120 {approx = true} : vector<8x128xf32> -> vector<8x128xf32>
    %c0_55 = arith.constant 0 : index
    %c0_56 = arith.constant 0 : index
    %122 = vector.load %arg10[%c0_55, %c0_56] : memref<8x128xf32, #tpu.memory_space<vmem>>, vector<8x128xf32>
    %123 = arith.mulf %112, %122 : vector<8x128xf32>
    %124 = arith.mulf %105, %114 : vector<8x128xf32>
    %125 = arith.addf %123, %124 : vector<8x128xf32>
    %126 = math.tanh %125 : vector<8x128xf32>
    %127 = arith.mulf %121, %126 : vector<8x128xf32>
    %c0_57 = arith.constant 0 : index
    %c0_58 = arith.constant 0 : index
    %128 = vector.load %arg10[%c0_57, %c0_58] : memref<8x128xf32, #tpu.memory_space<vmem>>, vector<8x128xf32>
    tpu.vector_store %arg10[%c0_57, %c0_58], %125 {strides = array<i32>} : memref<8x128xf32, #tpu.memory_space<vmem>>, vector<8x128xf32>,
    %c0_59 = arith.constant 0 : index
    %c0_60 = arith.constant 0 : index
    %129 = vector.load %arg9[%c0_59, %c0_60] : memref<8x128xf32, #tpu.memory_space<vmem>>, vector<8x128xf32>
    tpu.vector_store %arg9[%c0_59, %c0_60], %127 {strides = array<i32>} : memref<8x128xf32, #tpu.memory_space<vmem>>, vector<8x128xf32>,
    %130 = arith.truncf %127 : vector<8x128xf32> to vector<8x128xbf16>
    %131 = arith.index_cast %c2_i32 : i32 to index
    %c0_61 = arith.constant 0 : index
    %c0_62 = arith.constant 0 : index
    %132 = vector.load %arg6[%131, %c0_61, %c0_62] : memref<8x8x128xbf16, #tpu.memory_space<vmem>>, vector<1x8x128xbf16>
    %133 = vector.shape_cast %132 : vector<1x8x128xbf16> to vector<8x128xbf16>
    %134 = vector.shape_cast %130 : vector<8x128xbf16> to vector<1x8x128xbf16>
    tpu.vector_store %arg6[%131, %c0_61, %c0_62], %134 {strides = array<i32>} : memref<8x8x128xbf16, #tpu.memory_space<vmem>>, vector<1x8x128xbf16>,
    %c3_i32 = arith.constant 3 : i32
    %135 = arith.index_cast %c3_i32 : i32 to index
    %c0_63 = arith.constant 0 : index
    %c0_64 = arith.constant 0 : index
    %136 = vector.load %arg2[%135, %c0_63, %c0_64] : memref<8x8x512xf32, #tpu.memory_space<vmem>>, vector<1x8x512xf32>
    %137 = vector.shape_cast %136 : vector<1x8x512xf32> to vector<8x512xf32>
    %c0_65 = arith.constant 0 : index
    %c0_66 = arith.constant 0 : index
    %138 = vector.load %arg9[%c0_65, %c0_66] : memref<8x128xf32, #tpu.memory_space<vmem>>, vector<8x128xf32>
    %139 = arith.truncf %138 : vector<8x128xf32> to vector<8x128xbf16>
    %c0_67 = arith.constant 0 : index
    %c0_68 = arith.constant 0 : index
    %140 = vector.load %arg3[%c0_67, %c0_68] : memref<128x512xbf16, #tpu.memory_space<vmem>>, vector<128x512xbf16>
    %cst_69 = arith.constant dense<0.000000e+00> : vector<8x512xf32>
    %141 = tpu.matmul %139, %140, %cst_69 {dimension_numbers = #tpu.dot_dimension_numbers<[1], [0], [0], [1], [0, 0, 1, 1], [], []>} : vector<8x128xbf16>, vector<128x512xbf16>, vector<8x512xf32> -> vector<8x512xf32>
    %142 = arith.addf %137, %141 : vector<8x512xf32>
    %143 = vector.extract_strided_slice %142 {offsets = [0, 0], sizes = [8, 128], strides = [1, 1]} : vector<8x512xf32> to vector<8x128xf32>
    %cst_70 = arith.constant 0.000000e+00 : f32
    %144 = vector.broadcast %cst_70 : f32 to vector<8x128xf32>
    %145 = arith.subf %144, %143 : vector<8x128xf32>
    %146 = math.exp %145 : vector<8x128xf32>
    %cst_71 = arith.constant 1.000000e+00 : f32
    %147 = vector.broadcast %cst_71 : f32 to vector<8x128xf32>
    %148 = arith.addf %147, %146 : vector<8x128xf32>
    %149 = tpu.reciprocal %148 {approx = true} : vector<8x128xf32> -> vector<8x128xf32>
    %150 = vector.extract_strided_slice %142 {offsets = [0, 128], sizes = [8, 128], strides = [1, 1]} : vector<8x512xf32> to vector<8x128xf32>
    %cst_72 = arith.constant 0.000000e+00 : f32
    %151 = vector.broadcast %cst_72 : f32 to vector<8x128xf32>
    %152 = arith.subf %151, %150 : vector<8x128xf32>
    %153 = math.exp %152 : vector<8x128xf32>
    %cst_73 = arith.constant 1.000000e+00 : f32
    %154 = vector.broadcast %cst_73 : f32 to vector<8x128xf32>
    %155 = arith.addf %154, %153 : vector<8x128xf32>
    %156 = tpu.reciprocal %155 {approx = true} : vector<8x128xf32> -> vector<8x128xf32>
    %157 = vector.extract_strided_slice %142 {offsets = [0, 256], sizes = [8, 128], strides = [1, 1]} : vector<8x512xf32> to vector<8x128xf32>
    %158 = math.tanh %157 : vector<8x128xf32>
    %159 = vector.extract_strided_slice %142 {offsets = [0, 384], sizes = [8, 128], strides = [1, 1]} : vector<8x512xf32> to vector<8x128xf32>
    %cst_74 = arith.constant 0.000000e+00 : f32
    %160 = vector.broadcast %cst_74 : f32 to vector<8x128xf32>
    %161 = arith.subf %160, %159 : vector<8x128xf32>
    %162 = math.exp %161 : vector<8x128xf32>
    %cst_75 = arith.constant 1.000000e+00 : f32
    %163 = vector.broadcast %cst_75 : f32 to vector<8x128xf32>
    %164 = arith.addf %163, %162 : vector<8x128xf32>
    %165 = tpu.reciprocal %164 {approx = true} : vector<8x128xf32> -> vector<8x128xf32>
    %c0_76 = arith.constant 0 : index
    %c0_77 = arith.constant 0 : index
    %166 = vector.load %arg10[%c0_76, %c0_77] : memref<8x128xf32, #tpu.memory_space<vmem>>, vector<8x128xf32>
    %167 = arith.mulf %156, %166 : vector<8x128xf32>
    %168 = arith.mulf %149, %158 : vector<8x128xf32>
    %169 = arith.addf %167, %168 : vector<8x128xf32>
    %170 = math.tanh %169 : vector<8x128xf32>
    %171 = arith.mulf %165, %170 : vector<8x128xf32>
    %c0_78 = arith.constant 0 : index
    %c0_79 = arith.constant 0 : index
    %172 = vector.load %arg10[%c0_78, %c0_79] : memref<8x128xf32, #tpu.memory_space<vmem>>, vector<8x128xf32>
    tpu.vector_store %arg10[%c0_78, %c0_79], %169 {strides = array<i32>} : memref<8x128xf32, #tpu.memory_space<vmem>>, vector<8x128xf32>,
    %c0_80 = arith.constant 0 : index
    %c0_81 = arith.constant 0 : index
    %173 = vector.load %arg9[%c0_80, %c0_81] : memref<8x128xf32, #tpu.memory_space<vmem>>, vector<8x128xf32>
    tpu.vector_store %arg9[%c0_80, %c0_81], %171 {strides = array<i32>} : memref<8x128xf32, #tpu.memory_space<vmem>>, vector<8x128xf32>,
    %174 = arith.truncf %171 : vector<8x128xf32> to vector<8x128xbf16>
    %175 = arith.index_cast %c3_i32 : i32 to index
    %c0_82 = arith.constant 0 : index
    %c0_83 = arith.constant 0 : index
    %176 = vector.load %arg6[%175, %c0_82, %c0_83] : memref<8x8x128xbf16, #tpu.memory_space<vmem>>, vector<1x8x128xbf16>
    %177 = vector.shape_cast %176 : vector<1x8x128xbf16> to vector<8x128xbf16>
    %178 = vector.shape_cast %174 : vector<8x128xbf16> to vector<1x8x128xbf16>
    tpu.vector_store %arg6[%175, %c0_82, %c0_83], %178 {strides = array<i32>} : memref<8x8x128xbf16, #tpu.memory_space<vmem>>, vector<1x8x128xbf16>,
    %c4_i32 = arith.constant 4 : i32
    %179 = arith.index_cast %c4_i32 : i32 to index
    %c0_84 = arith.constant 0 : index
    %c0_85 = arith.constant 0 : index
    %180 = vector.load %arg2[%179, %c0_84, %c0_85] : memref<8x8x512xf32, #tpu.memory_space<vmem>>, vector<1x8x512xf32>
    %181 = vector.shape_cast %180 : vector<1x8x512xf32> to vector<8x512xf32>
    %c0_86 = arith.constant 0 : index
    %c0_87 = arith.constant 0 : index
    %182 = vector.load %arg9[%c0_86, %c0_87] : memref<8x128xf32, #tpu.memory_space<vmem>>, vector<8x128xf32>
    %183 = arith.truncf %182 : vector<8x128xf32> to vector<8x128xbf16>
    %c0_88 = arith.constant 0 : index
    %c0_89 = arith.constant 0 : index
    %184 = vector.load %arg3[%c0_88, %c0_89] : memref<128x512xbf16, #tpu.memory_space<vmem>>, vector<128x512xbf16>
    %cst_90 = arith.constant dense<0.000000e+00> : vector<8x512xf32>
    %185 = tpu.matmul %183, %184, %cst_90 {dimension_numbers = #tpu.dot_dimension_numbers<[1], [0], [0], [1], [0, 0, 1, 1], [], []>} : vector<8x128xbf16>, vector<128x512xbf16>, vector<8x512xf32> -> vector<8x512xf32>
    %186 = arith.addf %181, %185 : vector<8x512xf32>
    %187 = vector.extract_strided_slice %186 {offsets = [0, 0], sizes = [8, 128], strides = [1, 1]} : vector<8x512xf32> to vector<8x128xf32>
    %cst_91 = arith.constant 0.000000e+00 : f32
    %188 = vector.broadcast %cst_91 : f32 to vector<8x128xf32>
    %189 = arith.subf %188, %187 : vector<8x128xf32>
    %190 = math.exp %189 : vector<8x128xf32>
    %cst_92 = arith.constant 1.000000e+00 : f32
    %191 = vector.broadcast %cst_92 : f32 to vector<8x128xf32>
    %192 = arith.addf %191, %190 : vector<8x128xf32>
    %193 = tpu.reciprocal %192 {approx = true} : vector<8x128xf32> -> vector<8x128xf32>
    %194 = vector.extract_strided_slice %186 {offsets = [0, 128], sizes = [8, 128], strides = [1, 1]} : vector<8x512xf32> to vector<8x128xf32>
    %cst_93 = arith.constant 0.000000e+00 : f32
    %195 = vector.broadcast %cst_93 : f32 to vector<8x128xf32>
    %196 = arith.subf %195, %194 : vector<8x128xf32>
    %197 = math.exp %196 : vector<8x128xf32>
    %cst_94 = arith.constant 1.000000e+00 : f32
    %198 = vector.broadcast %cst_94 : f32 to vector<8x128xf32>
    %199 = arith.addf %198, %197 : vector<8x128xf32>
    %200 = tpu.reciprocal %199 {approx = true} : vector<8x128xf32> -> vector<8x128xf32>
    %201 = vector.extract_strided_slice %186 {offsets = [0, 256], sizes = [8, 128], strides = [1, 1]} : vector<8x512xf32> to vector<8x128xf32>
    %202 = math.tanh %201 : vector<8x128xf32>
    %203 = vector.extract_strided_slice %186 {offsets = [0, 384], sizes = [8, 128], strides = [1, 1]} : vector<8x512xf32> to vector<8x128xf32>
    %cst_95 = arith.constant 0.000000e+00 : f32
    %204 = vector.broadcast %cst_95 : f32 to vector<8x128xf32>
    %205 = arith.subf %204, %203 : vector<8x128xf32>
    %206 = math.exp %205 : vector<8x128xf32>
    %cst_96 = arith.constant 1.000000e+00 : f32
    %207 = vector.broadcast %cst_96 : f32 to vector<8x128xf32>
    %208 = arith.addf %207, %206 : vector<8x128xf32>
    %209 = tpu.reciprocal %208 {approx = true} : vector<8x128xf32> -> vector<8x128xf32>
    %c0_97 = arith.constant 0 : index
    %c0_98 = arith.constant 0 : index
    %210 = vector.load %arg10[%c0_97, %c0_98] : memref<8x128xf32, #tpu.memory_space<vmem>>, vector<8x128xf32>
    %211 = arith.mulf %200, %210 : vector<8x128xf32>
    %212 = arith.mulf %193, %202 : vector<8x128xf32>
    %213 = arith.addf %211, %212 : vector<8x128xf32>
    %214 = math.tanh %213 : vector<8x128xf32>
    %215 = arith.mulf %209, %214 : vector<8x128xf32>
    %c0_99 = arith.constant 0 : index
    %c0_100 = arith.constant 0 : index
    %216 = vector.load %arg10[%c0_99, %c0_100] : memref<8x128xf32, #tpu.memory_space<vmem>>, vector<8x128xf32>
    tpu.vector_store %arg10[%c0_99, %c0_100], %213 {strides = array<i32>} : memref<8x128xf32, #tpu.memory_space<vmem>>, vector<8x128xf32>,
    %c0_101 = arith.constant 0 : index
    %c0_102 = arith.constant 0 : index
    %217 = vector.load %arg9[%c0_101, %c0_102] : memref<8x128xf32, #tpu.memory_space<vmem>>, vector<8x128xf32>
    tpu.vector_store %arg9[%c0_101, %c0_102], %215 {strides = array<i32>} : memref<8x128xf32, #tpu.memory_space<vmem>>, vector<8x128xf32>,
    %218 = arith.truncf %215 : vector<8x128xf32> to vector<8x128xbf16>
    %219 = arith.index_cast %c4_i32 : i32 to index
    %c0_103 = arith.constant 0 : index
    %c0_104 = arith.constant 0 : index
    %220 = vector.load %arg6[%219, %c0_103, %c0_104] : memref<8x8x128xbf16, #tpu.memory_space<vmem>>, vector<1x8x128xbf16>
    %221 = vector.shape_cast %220 : vector<1x8x128xbf16> to vector<8x128xbf16>
    %222 = vector.shape_cast %218 : vector<8x128xbf16> to vector<1x8x128xbf16>
    tpu.vector_store %arg6[%219, %c0_103, %c0_104], %222 {strides = array<i32>} : memref<8x8x128xbf16, #tpu.memory_space<vmem>>, vector<1x8x128xbf16>,
    %c5_i32 = arith.constant 5 : i32
    %223 = arith.index_cast %c5_i32 : i32 to index
    %c0_105 = arith.constant 0 : index
    %c0_106 = arith.constant 0 : index
    %224 = vector.load %arg2[%223, %c0_105, %c0_106] : memref<8x8x512xf32, #tpu.memory_space<vmem>>, vector<1x8x512xf32>
    %225 = vector.shape_cast %224 : vector<1x8x512xf32> to vector<8x512xf32>
    %c0_107 = arith.constant 0 : index
    %c0_108 = arith.constant 0 : index
    %226 = vector.load %arg9[%c0_107, %c0_108] : memref<8x128xf32, #tpu.memory_space<vmem>>, vector<8x128xf32>
    %227 = arith.truncf %226 : vector<8x128xf32> to vector<8x128xbf16>
    %c0_109 = arith.constant 0 : index
    %c0_110 = arith.constant 0 : index
    %228 = vector.load %arg3[%c0_109, %c0_110] : memref<128x512xbf16, #tpu.memory_space<vmem>>, vector<128x512xbf16>
    %cst_111 = arith.constant dense<0.000000e+00> : vector<8x512xf32>
    %229 = tpu.matmul %227, %228, %cst_111 {dimension_numbers = #tpu.dot_dimension_numbers<[1], [0], [0], [1], [0, 0, 1, 1], [], []>} : vector<8x128xbf16>, vector<128x512xbf16>, vector<8x512xf32> -> vector<8x512xf32>
    %230 = arith.addf %225, %229 : vector<8x512xf32>
    %231 = vector.extract_strided_slice %230 {offsets = [0, 0], sizes = [8, 128], strides = [1, 1]} : vector<8x512xf32> to vector<8x128xf32>
    %cst_112 = arith.constant 0.000000e+00 : f32
    %232 = vector.broadcast %cst_112 : f32 to vector<8x128xf32>
    %233 = arith.subf %232, %231 : vector<8x128xf32>
    %234 = math.exp %233 : vector<8x128xf32>
    %cst_113 = arith.constant 1.000000e+00 : f32
    %235 = vector.broadcast %cst_113 : f32 to vector<8x128xf32>
    %236 = arith.addf %235, %234 : vector<8x128xf32>
    %237 = tpu.reciprocal %236 {approx = true} : vector<8x128xf32> -> vector<8x128xf32>
    %238 = vector.extract_strided_slice %230 {offsets = [0, 128], sizes = [8, 128], strides = [1, 1]} : vector<8x512xf32> to vector<8x128xf32>
    %cst_114 = arith.constant 0.000000e+00 : f32
    %239 = vector.broadcast %cst_114 : f32 to vector<8x128xf32>
    %240 = arith.subf %239, %238 : vector<8x128xf32>
    %241 = math.exp %240 : vector<8x128xf32>
    %cst_115 = arith.constant 1.000000e+00 : f32
    %242 = vector.broadcast %cst_115 : f32 to vector<8x128xf32>
    %243 = arith.addf %242, %241 : vector<8x128xf32>
    %244 = tpu.reciprocal %243 {approx = true} : vector<8x128xf32> -> vector<8x128xf32>
    %245 = vector.extract_strided_slice %230 {offsets = [0, 256], sizes = [8, 128], strides = [1, 1]} : vector<8x512xf32> to vector<8x128xf32>
    %246 = math.tanh %245 : vector<8x128xf32>
    %247 = vector.extract_strided_slice %230 {offsets = [0, 384], sizes = [8, 128], strides = [1, 1]} : vector<8x512xf32> to vector<8x128xf32>
    %cst_116 = arith.constant 0.000000e+00 : f32
    %248 = vector.broadcast %cst_116 : f32 to vector<8x128xf32>
    %249 = arith.subf %248, %247 : vector<8x128xf32>
    %250 = math.exp %249 : vector<8x128xf32>
    %cst_117 = arith.constant 1.000000e+00 : f32
    %251 = vector.broadcast %cst_117 : f32 to vector<8x128xf32>
    %252 = arith.addf %251, %250 : vector<8x128xf32>
    %253 = tpu.reciprocal %252 {approx = true} : vector<8x128xf32> -> vector<8x128xf32>
    %c0_118 = arith.constant 0 : index
    %c0_119 = arith.constant 0 : index
    %254 = vector.load %arg10[%c0_118, %c0_119] : memref<8x128xf32, #tpu.memory_space<vmem>>, vector<8x128xf32>
    %255 = arith.mulf %244, %254 : vector<8x128xf32>
    %256 = arith.mulf %237, %246 : vector<8x128xf32>
    %257 = arith.addf %255, %256 : vector<8x128xf32>
    %258 = math.tanh %257 : vector<8x128xf32>
    %259 = arith.mulf %253, %258 : vector<8x128xf32>
    %c0_120 = arith.constant 0 : index
    %c0_121 = arith.constant 0 : index
    %260 = vector.load %arg10[%c0_120, %c0_121] : memref<8x128xf32, #tpu.memory_space<vmem>>, vector<8x128xf32>
    tpu.vector_store %arg10[%c0_120, %c0_121], %257 {strides = array<i32>} : memref<8x128xf32, #tpu.memory_space<vmem>>, vector<8x128xf32>,
    %c0_122 = arith.constant 0 : index
    %c0_123 = arith.constant 0 : index
    %261 = vector.load %arg9[%c0_122, %c0_123] : memref<8x128xf32, #tpu.memory_space<vmem>>, vector<8x128xf32>
    tpu.vector_store %arg9[%c0_122, %c0_123], %259 {strides = array<i32>} : memref<8x128xf32, #tpu.memory_space<vmem>>, vector<8x128xf32>,
    %262 = arith.truncf %259 : vector<8x128xf32> to vector<8x128xbf16>
    %263 = arith.index_cast %c5_i32 : i32 to index
    %c0_124 = arith.constant 0 : index
    %c0_125 = arith.constant 0 : index
    %264 = vector.load %arg6[%263, %c0_124, %c0_125] : memref<8x8x128xbf16, #tpu.memory_space<vmem>>, vector<1x8x128xbf16>
    %265 = vector.shape_cast %264 : vector<1x8x128xbf16> to vector<8x128xbf16>
    %266 = vector.shape_cast %262 : vector<8x128xbf16> to vector<1x8x128xbf16>
    tpu.vector_store %arg6[%263, %c0_124, %c0_125], %266 {strides = array<i32>} : memref<8x8x128xbf16, #tpu.memory_space<vmem>>, vector<1x8x128xbf16>,
    %c6_i32 = arith.constant 6 : i32
    %267 = arith.index_cast %c6_i32 : i32 to index
    %c0_126 = arith.constant 0 : index
    %c0_127 = arith.constant 0 : index
    %268 = vector.load %arg2[%267, %c0_126, %c0_127] : memref<8x8x512xf32, #tpu.memory_space<vmem>>, vector<1x8x512xf32>
    %269 = vector.shape_cast %268 : vector<1x8x512xf32> to vector<8x512xf32>
    %c0_128 = arith.constant 0 : index
    %c0_129 = arith.constant 0 : index
    %270 = vector.load %arg9[%c0_128, %c0_129] : memref<8x128xf32, #tpu.memory_space<vmem>>, vector<8x128xf32>
    %271 = arith.truncf %270 : vector<8x128xf32> to vector<8x128xbf16>
    %c0_130 = arith.constant 0 : index
    %c0_131 = arith.constant 0 : index
    %272 = vector.load %arg3[%c0_130, %c0_131] : memref<128x512xbf16, #tpu.memory_space<vmem>>, vector<128x512xbf16>
    %cst_132 = arith.constant dense<0.000000e+00> : vector<8x512xf32>
    %273 = tpu.matmul %271, %272, %cst_132 {dimension_numbers = #tpu.dot_dimension_numbers<[1], [0], [0], [1], [0, 0, 1, 1], [], []>} : vector<8x128xbf16>, vector<128x512xbf16>, vector<8x512xf32> -> vector<8x512xf32>
    %274 = arith.addf %269, %273 : vector<8x512xf32>
    %275 = vector.extract_strided_slice %274 {offsets = [0, 0], sizes = [8, 128], strides = [1, 1]} : vector<8x512xf32> to vector<8x128xf32>
    %cst_133 = arith.constant 0.000000e+00 : f32
    %276 = vector.broadcast %cst_133 : f32 to vector<8x128xf32>
    %277 = arith.subf %276, %275 : vector<8x128xf32>
    %278 = math.exp %277 : vector<8x128xf32>
    %cst_134 = arith.constant 1.000000e+00 : f32
    %279 = vector.broadcast %cst_134 : f32 to vector<8x128xf32>
    %280 = arith.addf %279, %278 : vector<8x128xf32>
    %281 = tpu.reciprocal %280 {approx = true} : vector<8x128xf32> -> vector<8x128xf32>
    %282 = vector.extract_strided_slice %274 {offsets = [0, 128], sizes = [8, 128], strides = [1, 1]} : vector<8x512xf32> to vector<8x128xf32>
    %cst_135 = arith.constant 0.000000e+00 : f32
    %283 = vector.broadcast %cst_135 : f32 to vector<8x128xf32>
    %284 = arith.subf %283, %282 : vector<8x128xf32>
    %285 = math.exp %284 : vector<8x128xf32>
    %cst_136 = arith.constant 1.000000e+00 : f32
    %286 = vector.broadcast %cst_136 : f32 to vector<8x128xf32>
    %287 = arith.addf %286, %285 : vector<8x128xf32>
    %288 = tpu.reciprocal %287 {approx = true} : vector<8x128xf32> -> vector<8x128xf32>
    %289 = vector.extract_strided_slice %274 {offsets = [0, 256], sizes = [8, 128], strides = [1, 1]} : vector<8x512xf32> to vector<8x128xf32>
    %290 = math.tanh %289 : vector<8x128xf32>
    %291 = vector.extract_strided_slice %274 {offsets = [0, 384], sizes = [8, 128], strides = [1, 1]} : vector<8x512xf32> to vector<8x128xf32>
    %cst_137 = arith.constant 0.000000e+00 : f32
    %292 = vector.broadcast %cst_137 : f32 to vector<8x128xf32>
    %293 = arith.subf %292, %291 : vector<8x128xf32>
    %294 = math.exp %293 : vector<8x128xf32>
    %cst_138 = arith.constant 1.000000e+00 : f32
    %295 = vector.broadcast %cst_138 : f32 to vector<8x128xf32>
    %296 = arith.addf %295, %294 : vector<8x128xf32>
    %297 = tpu.reciprocal %296 {approx = true} : vector<8x128xf32> -> vector<8x128xf32>
    %c0_139 = arith.constant 0 : index
    %c0_140 = arith.constant 0 : index
    %298 = vector.load %arg10[%c0_139, %c0_140] : memref<8x128xf32, #tpu.memory_space<vmem>>, vector<8x128xf32>
    %299 = arith.mulf %288, %298 : vector<8x128xf32>
    %300 = arith.mulf %281, %290 : vector<8x128xf32>
    %301 = arith.addf %299, %300 : vector<8x128xf32>
    %302 = math.tanh %301 : vector<8x128xf32>
    %303 = arith.mulf %297, %302 : vector<8x128xf32>
    %c0_141 = arith.constant 0 : index
    %c0_142 = arith.constant 0 : index
    %304 = vector.load %arg10[%c0_141, %c0_142] : memref<8x128xf32, #tpu.memory_space<vmem>>, vector<8x128xf32>
    tpu.vector_store %arg10[%c0_141, %c0_142], %301 {strides = array<i32>} : memref<8x128xf32, #tpu.memory_space<vmem>>, vector<8x128xf32>,
    %c0_143 = arith.constant 0 : index
    %c0_144 = arith.constant 0 : index
    %305 = vector.load %arg9[%c0_143, %c0_144] : memref<8x128xf32, #tpu.memory_space<vmem>>, vector<8x128xf32>
    tpu.vector_store %arg9[%c0_143, %c0_144], %303 {strides = array<i32>} : memref<8x128xf32, #tpu.memory_space<vmem>>, vector<8x128xf32>,
    %306 = arith.truncf %303 : vector<8x128xf32> to vector<8x128xbf16>
    %307 = arith.index_cast %c6_i32 : i32 to index
    %c0_145 = arith.constant 0 : index
    %c0_146 = arith.constant 0 : index
    %308 = vector.load %arg6[%307, %c0_145, %c0_146] : memref<8x8x128xbf16, #tpu.memory_space<vmem>>, vector<1x8x128xbf16>
    %309 = vector.shape_cast %308 : vector<1x8x128xbf16> to vector<8x128xbf16>
    %310 = vector.shape_cast %306 : vector<8x128xbf16> to vector<1x8x128xbf16>
    tpu.vector_store %arg6[%307, %c0_145, %c0_146], %310 {strides = array<i32>} : memref<8x8x128xbf16, #tpu.memory_space<vmem>>, vector<1x8x128xbf16>,
    %c7_i32 = arith.constant 7 : i32
    %311 = arith.index_cast %c7_i32 : i32 to index
    %c0_147 = arith.constant 0 : index
    %c0_148 = arith.constant 0 : index
    %312 = vector.load %arg2[%311, %c0_147, %c0_148] : memref<8x8x512xf32, #tpu.memory_space<vmem>>, vector<1x8x512xf32>
    %313 = vector.shape_cast %312 : vector<1x8x512xf32> to vector<8x512xf32>
    %c0_149 = arith.constant 0 : index
    %c0_150 = arith.constant 0 : index
    %314 = vector.load %arg9[%c0_149, %c0_150] : memref<8x128xf32, #tpu.memory_space<vmem>>, vector<8x128xf32>
    %315 = arith.truncf %314 : vector<8x128xf32> to vector<8x128xbf16>
    %c0_151 = arith.constant 0 : index
    %c0_152 = arith.constant 0 : index
    %316 = vector.load %arg3[%c0_151, %c0_152] : memref<128x512xbf16, #tpu.memory_space<vmem>>, vector<128x512xbf16>
    %cst_153 = arith.constant dense<0.000000e+00> : vector<8x512xf32>
    %317 = tpu.matmul %315, %316, %cst_153 {dimension_numbers = #tpu.dot_dimension_numbers<[1], [0], [0], [1], [0, 0, 1, 1], [], []>} : vector<8x128xbf16>, vector<128x512xbf16>, vector<8x512xf32> -> vector<8x512xf32>
    %318 = arith.addf %313, %317 : vector<8x512xf32>
    %319 = vector.extract_strided_slice %318 {offsets = [0, 0], sizes = [8, 128], strides = [1, 1]} : vector<8x512xf32> to vector<8x128xf32>
    %cst_154 = arith.constant 0.000000e+00 : f32
    %320 = vector.broadcast %cst_154 : f32 to vector<8x128xf32>
    %321 = arith.subf %320, %319 : vector<8x128xf32>
    %322 = math.exp %321 : vector<8x128xf32>
    %cst_155 = arith.constant 1.000000e+00 : f32
    %323 = vector.broadcast %cst_155 : f32 to vector<8x128xf32>
    %324 = arith.addf %323, %322 : vector<8x128xf32>
    %325 = tpu.reciprocal %324 {approx = true} : vector<8x128xf32> -> vector<8x128xf32>
    %326 = vector.extract_strided_slice %318 {offsets = [0, 128], sizes = [8, 128], strides = [1, 1]} : vector<8x512xf32> to vector<8x128xf32>
    %cst_156 = arith.constant 0.000000e+00 : f32
    %327 = vector.broadcast %cst_156 : f32 to vector<8x128xf32>
    %328 = arith.subf %327, %326 : vector<8x128xf32>
    %329 = math.exp %328 : vector<8x128xf32>
    %cst_157 = arith.constant 1.000000e+00 : f32
    %330 = vector.broadcast %cst_157 : f32 to vector<8x128xf32>
    %331 = arith.addf %330, %329 : vector<8x128xf32>
    %332 = tpu.reciprocal %331 {approx = true} : vector<8x128xf32> -> vector<8x128xf32>
    %333 = vector.extract_strided_slice %318 {offsets = [0, 256], sizes = [8, 128], strides = [1, 1]} : vector<8x512xf32> to vector<8x128xf32>
    %334 = math.tanh %333 : vector<8x128xf32>
    %335 = vector.extract_strided_slice %318 {offsets = [0, 384], sizes = [8, 128], strides = [1, 1]} : vector<8x512xf32> to vector<8x128xf32>
    %cst_158 = arith.constant 0.000000e+00 : f32
    %336 = vector.broadcast %cst_158 : f32 to vector<8x128xf32>
    %337 = arith.subf %336, %335 : vector<8x128xf32>
    %338 = math.exp %337 : vector<8x128xf32>
    %cst_159 = arith.constant 1.000000e+00 : f32
    %339 = vector.broadcast %cst_159 : f32 to vector<8x128xf32>
    %340 = arith.addf %339, %338 : vector<8x128xf32>
    %341 = tpu.reciprocal %340 {approx = true} : vector<8x128xf32> -> vector<8x128xf32>
    %c0_160 = arith.constant 0 : index
    %c0_161 = arith.constant 0 : index
    %342 = vector.load %arg10[%c0_160, %c0_161] : memref<8x128xf32, #tpu.memory_space<vmem>>, vector<8x128xf32>
    %343 = arith.mulf %332, %342 : vector<8x128xf32>
    %344 = arith.mulf %325, %334 : vector<8x128xf32>
    %345 = arith.addf %343, %344 : vector<8x128xf32>
    %346 = math.tanh %345 : vector<8x128xf32>
    %347 = arith.mulf %341, %346 : vector<8x128xf32>
    %c0_162 = arith.constant 0 : index
    %c0_163 = arith.constant 0 : index
    %348 = vector.load %arg10[%c0_162, %c0_163] : memref<8x128xf32, #tpu.memory_space<vmem>>, vector<8x128xf32>
    tpu.vector_store %arg10[%c0_162, %c0_163], %345 {strides = array<i32>} : memref<8x128xf32, #tpu.memory_space<vmem>>, vector<8x128xf32>,
    %c0_164 = arith.constant 0 : index
    %c0_165 = arith.constant 0 : index
    %349 = vector.load %arg9[%c0_164, %c0_165] : memref<8x128xf32, #tpu.memory_space<vmem>>, vector<8x128xf32>
    tpu.vector_store %arg9[%c0_164, %c0_165], %347 {strides = array<i32>} : memref<8x128xf32, #tpu.memory_space<vmem>>, vector<8x128xf32>,
    %350 = arith.truncf %347 : vector<8x128xf32> to vector<8x128xbf16>
    %351 = arith.index_cast %c7_i32 : i32 to index
    %c0_166 = arith.constant 0 : index
    %c0_167 = arith.constant 0 : index
    %352 = vector.load %arg6[%351, %c0_166, %c0_167] : memref<8x8x128xbf16, #tpu.memory_space<vmem>>, vector<1x8x128xbf16>
    %353 = vector.shape_cast %352 : vector<1x8x128xbf16> to vector<8x128xbf16>
    %354 = vector.shape_cast %350 : vector<8x128xbf16> to vector<1x8x128xbf16>
    tpu.vector_store %arg6[%351, %c0_166, %c0_167], %354 {strides = array<i32>} : memref<8x8x128xbf16, #tpu.memory_space<vmem>>, vector<1x8x128xbf16>,
    %c8_i32 = arith.constant 8 : i32
    %c1_i32_168 = arith.constant 1 : i32
    %355 = arith.cmpi eq, %arg1, %c1_i32_168 : i32
    %356 = arith.extui %355 : i1 to i32
    %c0_i32_169 = arith.constant 0 : i32
    %357 = arith.cmpi ne, %356, %c0_i32_169 : i32
    scf.if %357 {
      %c0_170 = arith.constant 0 : index
      %c0_171 = arith.constant 0 : index
      %358 = vector.load %arg9[%c0_170, %c0_171] : memref<8x128xf32, #tpu.memory_space<vmem>>, vector<8x128xf32>
      %c0_172 = arith.constant 0 : index
      %c0_173 = arith.constant 0 : index
      %359 = vector.load %arg7[%c0_172, %c0_173] : memref<8x128xf32, #tpu.memory_space<vmem>>, vector<8x128xf32>
      tpu.vector_store %arg7[%c0_172, %c0_173], %358 {strides = array<i32>} : memref<8x128xf32, #tpu.memory_space<vmem>>, vector<8x128xf32>,
      %c0_174 = arith.constant 0 : index
      %c0_175 = arith.constant 0 : index
      %360 = vector.load %arg10[%c0_174, %c0_175] : memref<8x128xf32, #tpu.memory_space<vmem>>, vector<8x128xf32>
      %c0_176 = arith.constant 0 : index
      %c0_177 = arith.constant 0 : index
      %361 = vector.load %arg8[%c0_176, %c0_177] : memref<8x128xf32, #tpu.memory_space<vmem>>, vector<8x128xf32>
      tpu.vector_store %arg8[%c0_176, %c0_177], %360 {strides = array<i32>} : memref<8x128xf32, #tpu.memory_space<vmem>>, vector<8x128xf32>,
    } else {
    }
    return
  }
  func.func @transform_0(%arg0: i32, %arg1: i32) -> (i32, i32, i32) {
    %c0_i32 = arith.constant 0 : i32
    %c0_i32_0 = arith.constant 0 : i32
    return %arg1, %arg0, %c0_i32 : i32, i32, i32
  }
  func.func @transform_1(%arg0: i32, %arg1: i32) -> (i32, i32) {
    %c0_i32 = arith.constant 0 : i32
    %c0_i32_0 = arith.constant 0 : i32
    %c0_i32_1 = arith.constant 0 : i32
    return %c0_i32, %c0_i32_0 : i32, i32
  }
  func.func @transform_2(%arg0: i32, %arg1: i32) -> (i32, i32) {
    %c0_i32 = arith.constant 0 : i32
    %c0_i32_0 = arith.constant 0 : i32
    return %arg0, %c0_i32 : i32, i32
  }
  func.func @transform_3(%arg0: i32, %arg1: i32) -> (i32, i32) {
    %c0_i32 = arith.constant 0 : i32
    %c0_i32_0 = arith.constant 0 : i32
    return %arg0, %c0_i32 : i32, i32
  }
  func.func @transform_4(%arg0: i32, %arg1: i32) -> (i32, i32, i32) {
    %c0_i32 = arith.constant 0 : i32
    %c0_i32_0 = arith.constant 0 : i32
    return %arg1, %arg0, %c0_i32 : i32, i32, i32
  }
  func.func @transform_5(%arg0: i32, %arg1: i32) -> (i32, i32) {
    %c0_i32 = arith.constant 0 : i32
    %c0_i32_0 = arith.constant 0 : i32
    return %arg0, %c0_i32 : i32, i32
  }
  func.func @transform_6(%arg0: i32, %arg1: i32) -> (i32, i32) {
    %c0_i32 = arith.constant 0 : i32
    %c0_i32_0 = arith.constant 0 : i32
    return %arg0, %c0_i32 : i32, i32
  }
}

module attributes {stable_mosaic.version = 11 : i64} {
  func.func @_matmul_bias_kernel(%arg0: i32, %arg1: i32, %arg2: i32, %arg3: memref<128x128xbf16, #tpu.memory_space<vmem>>, %arg4: memref<128x256xbf16, #tpu.memory_space<vmem>>, %arg5: memref<1x256xf32, #tpu.memory_space<vmem>>, %arg6: memref<128x256xf32, #tpu.memory_space<vmem>>, %arg7: memref<128x256xf32, #tpu.memory_space<vmem>>) attributes {dimension_semantics = [#tpu.dimension_semantics<parallel>, #tpu.dimension_semantics<parallel>, #tpu.dimension_semantics<arbitrary>], iteration_bounds = array<i64: 1, 1, 1>, scalar_prefetch = 0 : i64, scratch_operands = 1 : i64, tpu.core_type = #tpu.core_type<tc>, window_params = [{transform_indices = @transform_0, window_bounds = array<i64: 128, 128>}, {transform_indices = @transform_1, window_bounds = array<i64: 128, 256>}, {transform_indices = @transform_2, window_bounds = array<i64: 1, 256>}, {transform_indices = @transform_3, window_bounds = array<i64: 128, 256>}]} {
    %c0_i32 = arith.constant 0 : i32
    %0 = arith.cmpi eq, %arg2, %c0_i32 : i32
    %1 = arith.extui %0 : i1 to i32
    %c0_i32_0 = arith.constant 0 : i32
    %2 = arith.cmpi ne, %1, %c0_i32_0 : i32
    scf.if %2 {
      %cst_10 = arith.constant 0.000000e+00 : f32
      %12 = vector.broadcast %cst_10 : f32 to vector<128x256xf32>
      %c0_11 = arith.constant 0 : index
      %c0_12 = arith.constant 0 : index
      %13 = vector.load %arg7[%c0_11, %c0_12] : memref<128x256xf32, #tpu.memory_space<vmem>>, vector<128x256xf32>
      tpu.vector_store %arg7[%c0_11, %c0_12], %12 {strides = array<i32>} : memref<128x256xf32, #tpu.memory_space<vmem>>, vector<128x256xf32>,
    } else {
    }
    %c0 = arith.constant 0 : index
    %c0_1 = arith.constant 0 : index
    %3 = vector.load %arg7[%c0, %c0_1] : memref<128x256xf32, #tpu.memory_space<vmem>>, vector<128x256xf32>
    %c0_2 = arith.constant 0 : index
    %c0_3 = arith.constant 0 : index
    %4 = vector.load %arg3[%c0_2, %c0_3] : memref<128x128xbf16, #tpu.memory_space<vmem>>, vector<128x128xbf16>
    %c0_4 = arith.constant 0 : index
    %c0_5 = arith.constant 0 : index
    %5 = vector.load %arg4[%c0_4, %c0_5] : memref<128x256xbf16, #tpu.memory_space<vmem>>, vector<128x256xbf16>
    %cst = arith.constant dense<0.000000e+00> : vector<128x256xf32>
    %6 = tpu.matmul %4, %5, %cst {dimension_numbers = #tpu.dot_dimension_numbers<[1], [0], [0], [1], [0, 0, 1, 1], [], []>} : vector<128x128xbf16>, vector<128x256xbf16>, vector<128x256xf32> -> vector<128x256xf32>
    %7 = arith.addf %3, %6 : vector<128x256xf32>
    %c0_6 = arith.constant 0 : index
    %c0_7 = arith.constant 0 : index
    %8 = vector.load %arg7[%c0_6, %c0_7] : memref<128x256xf32, #tpu.memory_space<vmem>>, vector<128x256xf32>
    tpu.vector_store %arg7[%c0_6, %c0_7], %7 {strides = array<i32>} : memref<128x256xf32, #tpu.memory_space<vmem>>, vector<128x256xf32>,
    %c0_i32_8 = arith.constant 0 : i32
    %9 = arith.cmpi eq, %arg2, %c0_i32_8 : i32
    %10 = arith.extui %9 : i1 to i32
    %c0_i32_9 = arith.constant 0 : i32
    %11 = arith.cmpi ne, %10, %c0_i32_9 : i32
    scf.if %11 {
      %c0_10 = arith.constant 0 : index
      %c0_11 = arith.constant 0 : index
      %12 = vector.load %arg7[%c0_10, %c0_11] : memref<128x256xf32, #tpu.memory_space<vmem>>, vector<128x256xf32>
      %c0_12 = arith.constant 0 : index
      %c0_13 = arith.constant 0 : index
      %13 = vector.load %arg5[%c0_12, %c0_13] : memref<1x256xf32, #tpu.memory_space<vmem>>, vector<1x256xf32>
      %14 = vector.broadcast %13 : vector<1x256xf32> to vector<128x256xf32>
      %15 = arith.addf %12, %14 : vector<128x256xf32>
      %c0_14 = arith.constant 0 : index
      %c0_15 = arith.constant 0 : index
      %16 = vector.load %arg6[%c0_14, %c0_15] : memref<128x256xf32, #tpu.memory_space<vmem>>, vector<128x256xf32>
      tpu.vector_store %arg6[%c0_14, %c0_15], %15 {strides = array<i32>} : memref<128x256xf32, #tpu.memory_space<vmem>>, vector<128x256xf32>,
    } else {
    }
    return
  }
  func.func @transform_0(%arg0: i32, %arg1: i32, %arg2: i32) -> (i32, i32) {
    %c0_i32 = arith.constant 0 : i32
    return %arg0, %arg2 : i32, i32
  }
  func.func @transform_1(%arg0: i32, %arg1: i32, %arg2: i32) -> (i32, i32) {
    %c0_i32 = arith.constant 0 : i32
    return %arg2, %arg1 : i32, i32
  }
  func.func @transform_2(%arg0: i32, %arg1: i32, %arg2: i32) -> (i32, i32) {
    %c0_i32 = arith.constant 0 : i32
    %c0_i32_0 = arith.constant 0 : i32
    return %c0_i32, %arg1 : i32, i32
  }
  func.func @transform_3(%arg0: i32, %arg1: i32, %arg2: i32) -> (i32, i32) {
    %c0_i32 = arith.constant 0 : i32
    return %arg0, %arg1 : i32, i32
  }
}

</mosaic_0001>

<llo_original>
// kernel: forward.9
$region0: #{forward.9}
  #allocation0 [shape = 'u32[]', space=smem, size = 0x4, offset = 0x4, fixed_abs, tag = 'smem constant byte address 0x4 - core index']
  #allocation1 [shape = 'u32[144,128]{1,0:T(1,128)}', space=vmem, size = 0x12000, scoped, tag = 'internal scratch']
  #allocation2 [shape = 'f32[128,256]{1,0:T(8,128)}', space=vmem, size = 0x20000, scoped, tag = 'scratch operand']
  %s0 = inlined_call_operand.vmem [shape: bf16[128,128], index: 0, kind: input, shape index: {}]
  %s1 = inlined_call_operand.vmem [shape: bf16[128,256], index: 1, kind: input, shape index: {}]
  %s2 = inlined_call_operand.vmem [shape: f32[1,256], index: 2, kind: input, shape index: {}]
  %s3 = inlined_call_operand.hbm [shape: f32[128,256], index: 3, kind: output, shape index: {}]
  %s4 = sld [smem:[#allocation0]]
  $region30: #{forward.9} parent=0
    _
  %s6 = ssub.s32 1, %s4
  %s7 = scalar_select 0, %s6, %s4
  $region1: #{forward.9} parent=0
    #allocation3 [shape = 'u8[131072]{0}', space=vmem, size = 0x20000, scoped, tag = 'output window, operand 0, single buffered']
    #allocation4 [shape = 's32[1]{0}', space=sflag, size = 0x4, scoped, tag = 'scoped memory for forward.9']
    %8 = vsyncpa [#allocation4], 0
    // Predicated region
    $region2: #{forward.9} parent=1 // pred_check
      _
    $region3: #{forward.9} parent=1 // pred_check_branch
      %10 = sbr.rel (0) target = $region5
    $region4: #{forward.9} parent=1 // pred_region
      _
    $region5: #{forward.9} parent=1 // pred_fallthru
      _
    // Predicated region
    $region6: #{forward.9} parent=1 // pred_check
      _
    $region7: #{forward.9} parent=1 // pred_check_branch
      %12 = sbr.rel (0) target = $region9
    $region8: #{forward.9} parent=1 // pred_region
      _
    $region9: #{forward.9} parent=1 // pred_fallthru
      _
    // Predicated region
    $region10: #{forward.9} parent=1 // pred_check
      _
    $region11: #{forward.9} parent=1 // pred_check_branch
      %14 = sbr.rel (0) target = $region13
    $region12: #{forward.9} parent=1 // pred_region
      _
    $region13: #{forward.9} parent=1 // pred_fallthru
      _
    %p16 = scmp.eq.s32.totalorder 0, 0
    // Predicated region
    $region14: #{forward.9} parent=1 // pred_check
      %p17 = pneg %p16
    $region15: #{forward.9} parent=1 // pred_check_branch
      %19 = sbr.rel (%p17) target = $region17
    $region16: #{forward.9} parent=1 // pred_region
      %20 = vst [vmem:[#allocation2] sm:$0xff] 0.0
      %21 = vst [vmem:[#allocation2 + $0x8] sm:$0xff] 0.0
      %22 = vst [vmem:[#allocation2 + $0x10] sm:$0xff] 0.0
      %23 = vst [vmem:[#allocation2 + $0x18] sm:$0xff] 0.0
      %24 = vst [vmem:[#allocation2 + $0x20] sm:$0xff] 0.0
      %25 = vst [vmem:[#allocation2 + $0x28] sm:$0xff] 0.0
      %26 = vst [vmem:[#allocation2 + $0x30] sm:$0xff] 0.0
      %27 = vst [vmem:[#allocation2 + $0x38] sm:$0xff] 0.0
      %28 = vst [vmem:[#allocation2 + $0x40] sm:$0xff] 0.0
      %29 = vst [vmem:[#allocation2 + $0x48] sm:$0xff] 0.0
      %30 = vst [vmem:[#allocation2 + $0x50] sm:$0xff] 0.0
      %31 = vst [vmem:[#allocation2 + $0x58] sm:$0xff] 0.0
      %32 = vst [vmem:[#allocation2 + $0x60] sm:$0xff] 0.0
      %33 = vst [vmem:[#allocation2 + $0x68] sm:$0xff] 0.0
      %34 = vst [vmem:[#allocation2 + $0x70] sm:$0xff] 0.0
      %35 = vst [vmem:[#allocation2 + $0x78] sm:$0xff] 0.0
      %36 = vst [vmem:[#allocation2 + $0x80] sm:$0xff] 0.0
      %37 = vst [vmem:[#allocation2 + $0x88] sm:$0xff] 0.0
      %38 = vst [vmem:[#allocation2 + $0x90] sm:$0xff] 0.0
      %39 = vst [vmem:[#allocation2 + $0x98] sm:$0xff] 0.0
      %40 = vst [vmem:[#allocation2 + $0xa0] sm:$0xff] 0.0
      %41 = vst [vmem:[#allocation2 + $0xa8] sm:$0xff] 0.0
      %42 = vst [vmem:[#allocation2 + $0xb0] sm:$0xff] 0.0
      %43 = vst [vmem:[#allocation2 + $0xb8] sm:$0xff] 0.0
      %44 = vst [vmem:[#allocation2 + $0xc0] sm:$0xff] 0.0
      %45 = vst [vmem:[#allocation2 + $0xc8] sm:$0xff] 0.0
      %46 = vst [vmem:[#allocation2 + $0xd0] sm:$0xff] 0.0
      %47 = vst [vmem:[#allocation2 + $0xd8] sm:$0xff] 0.0
      %48 = vst [vmem:[#allocation2 + $0xe0] sm:$0xff] 0.0
      %49 = vst [vmem:[#allocation2 + $0xe8] sm:$0xff] 0.0
      %50 = vst [vmem:[#allocation2 + $0xf0] sm:$0xff] 0.0
      %51 = vst [vmem:[#allocation2 + $0xf8] sm:$0xff] 0.0
    $region17: #{forward.9} parent=1 // pred_fallthru
      _
    %v52 = vld [vmem:[#allocation2] sm:$0xff]
    %v53 = vld [vmem:[#allocation2 + $0x8] sm:$0xff]
    %v54 = vld [vmem:[#allocation2 + $0x10] sm:$0xff]
    %v55 = vld [vmem:[#allocation2 + $0x18] sm:$0xff]
    %v56 = vld [vmem:[#allocation2 + $0x20] sm:$0xff]
    %v57 = vld [vmem:[#allocation2 + $0x28] sm:$0xff]
    %v58 = vld [vmem:[#allocation2 + $0x30] sm:$0xff]
    %v59 = vld [vmem:[#allocation2 + $0x38] sm:$0xff]
    %v60 = vld [vmem:[#allocation2 + $0x40] sm:$0xff]
    %v61 = vld [vmem:[#allocation2 + $0x48] sm:$0xff]
    %v62 = vld [vmem:[#allocation2 + $0x50] sm:$0xff]
    %v63 = vld [vmem:[#allocation2 + $0x58] sm:$0xff]
    %v64 = vld [vmem:[#allocation2 + $0x60] sm:$0xff]
    %v65 = vld [vmem:[#allocation2 + $0x68] sm:$0xff]
    %v66 = vld [vmem:[#allocation2 + $0x70] sm:$0xff]
    %v67 = vld [vmem:[#allocation2 + $0x78] sm:$0xff]
    %v68 = vld [vmem:[#allocation2 + $0x80] sm:$0xff]
    %v69 = vld [vmem:[#allocation2 + $0x88] sm:$0xff]
    %v70 = vld [vmem:[#allocation2 + $0x90] sm:$0xff]
    %v71 = vld [vmem:[#allocation2 + $0x98] sm:$0xff]
    %v72 = vld [vmem:[#allocation2 + $0xa0] sm:$0xff]
    %v73 = vld [vmem:[#allocation2 + $0xa8] sm:$0xff]
    %v74 = vld [vmem:[#allocation2 + $0xb0] sm:$0xff]
    %v75 = vld [vmem:[#allocation2 + $0xb8] sm:$0xff]
    %v76 = vld [vmem:[#allocation2 + $0xc0] sm:$0xff]
    %v77 = vld [vmem:[#allocation2 + $0xc8] sm:$0xff]
    %v78 = vld [vmem:[#allocation2 + $0xd0] sm:$0xff]
    %v79 = vld [vmem:[#allocation2 + $0xd8] sm:$0xff]
    %v80 = vld [vmem:[#allocation2 + $0xe0] sm:$0xff]
    %v81 = vld [vmem:[#allocation2 + $0xe8] sm:$0xff]
    %v82 = vld [vmem:[#allocation2 + $0xf0] sm:$0xff]
    %v83 = vld [vmem:[#allocation2 + $0xf8] sm:$0xff]
    %v84 = vld [vmem:[%s0] sm:$0xf]
    %v85 = vld [vmem:[%s0 + $0x4] sm:$0xf]
    %v86 = vld [vmem:[%s0 + $0x8] sm:$0xf]
    %v87 = vld [vmem:[%s0 + $0xc] sm:$0xf]
    %v88 = vld [vmem:[%s0 + $0x10] sm:$0xf]
    %v89 = vld [vmem:[%s0 + $0x14] sm:$0xf]
    %v90 = vld [vmem:[%s0 + $0x18] sm:$0xf]
    %v91 = vld [vmem:[%s0 + $0x1c] sm:$0xf]
    %v92 = vld [vmem:[%s0 + $0x20] sm:$0xf]
    %v93 = vld [vmem:[%s0 + $0x24] sm:$0xf]
    %v94 = vld [vmem:[%s0 + $0x28] sm:$0xf]
    %v95 = vld [vmem:[%s0 + $0x2c] sm:$0xf]
    %v96 = vld [vmem:[%s0 + $0x30] sm:$0xf]
    %v97 = vld [vmem:[%s0 + $0x34] sm:$0xf]
    %v98 = vld [vmem:[%s0 + $0x38] sm:$0xf]
    %v99 = vld [vmem:[%s0 + $0x3c] sm:$0xf]
    %v100 = vld [vmem:[%s1] sm:$0xff]
    %v101 = vld [vmem:[%s1 + $0x8] sm:$0xff]
    %v102 = vld [vmem:[%s1 + $0x10] sm:$0xff]
    %v103 = vld [vmem:[%s1 + $0x18] sm:$0xff]
    %v104 = vld [vmem:[%s1 + $0x20] sm:$0xff]
    %v105 = vld [vmem:[%s1 + $0x28] sm:$0xff]
    %v106 = vld [vmem:[%s1 + $0x30] sm:$0xff]
    %v107 = vld [vmem:[%s1 + $0x38] sm:$0xff]
    %v108 = vld [vmem:[%s1 + $0x40] sm:$0xff]
    %v109 = vld [vmem:[%s1 + $0x48] sm:$0xff]
    %v110 = vld [vmem:[%s1 + $0x50] sm:$0xff]
    %v111 = vld [vmem:[%s1 + $0x58] sm:$0xff]
    %v112 = vld [vmem:[%s1 + $0x60] sm:$0xff]
    %v113 = vld [vmem:[%s1 + $0x68] sm:$0xff]
    %v114 = vld [vmem:[%s1 + $0x70] sm:$0xff]
    %v115 = vld [vmem:[%s1 + $0x78] sm:$0xff]
    %v132 = vunpack.c.l.b16 %v84
    %v133 = vunpack.c.l.b16 %v85
    %v134 = vunpack.c.l.b16 %v86
    %v135 = vunpack.c.l.b16 %v87
    %v136 = vunpack.c.l.b16 %v88
    %v137 = vunpack.c.l.b16 %v89
    %v138 = vunpack.c.l.b16 %v90
    %v139 = vunpack.c.l.b16 %v91
    %v140 = vunpack.c.l.b16 %v92
    %v141 = vunpack.c.l.b16 %v93
    %v142 = vunpack.c.l.b16 %v94
    %v143 = vunpack.c.l.b16 %v95
    %v144 = vunpack.c.l.b16 %v96
    %v145 = vunpack.c.l.b16 %v97
    %v146 = vunpack.c.l.b16 %v98
    %v147 = vunpack.c.l.b16 %v99
    %v148 = vpack.c.b16 %v133, %v132
    %v149 = vpack.c.b16 %v135, %v134
    %v150 = vpack.c.b16 %v137, %v136
    %v151 = vpack.c.b16 %v139, %v138
    %v152 = vpack.c.b16 %v141, %v140
    %v153 = vpack.c.b16 %v143, %v142
    %v154 = vpack.c.b16 %v145, %v144
    %v155 = vpack.c.b16 %v147, %v146
    %v180 = vunpack.c.l.b16 %v100
    %v181 = vunpack.c.h.b16 %v100
    %v182 = vunpack.c.l.b16 %v101
    %v183 = vunpack.c.h.b16 %v101
    %v184 = vunpack.c.l.b16 %v102
    %v185 = vunpack.c.h.b16 %v102
    %v186 = vunpack.c.l.b16 %v103
    %v187 = vunpack.c.h.b16 %v103
    %v188 = vunpack.c.l.b16 %v104
    %v189 = vunpack.c.h.b16 %v104
    %v190 = vunpack.c.l.b16 %v105
    %v191 = vunpack.c.h.b16 %v105
    %v192 = vunpack.c.l.b16 %v106
    %v193 = vunpack.c.h.b16 %v106
    %v194 = vunpack.c.l.b16 %v107
    %v195 = vunpack.c.h.b16 %v107
    %v196 = vunpack.c.l.b16 %v108
    %v197 = vunpack.c.h.b16 %v108
    %v198 = vunpack.c.l.b16 %v109
    %v199 = vunpack.c.h.b16 %v109
    %v200 = vunpack.c.l.b16 %v110
    %v201 = vunpack.c.h.b16 %v110
    %v202 = vunpack.c.l.b16 %v111
    %v203 = vunpack.c.h.b16 %v111
    %v204 = vunpack.c.l.b16 %v112
    %v205 = vunpack.c.h.b16 %v112
    %v206 = vunpack.c.l.b16 %v113
    %v207 = vunpack.c.h.b16 %v113
    %v208 = vunpack.c.l.b16 %v114
    %v209 = vunpack.c.h.b16 %v114
    %v210 = vunpack.c.l.b16 %v115
    %v211 = vunpack.c.h.b16 %v115
    %v212 = vpack.c.b16 %v182, %v180
    %v213 = vpack.c.b16 %v183, %v181
    %v214 = vpack.c.b16 %v186, %v184
    %v215 = vpack.c.b16 %v187, %v185
    %v216 = vpack.c.b16 %v190, %v188
    %v217 = vpack.c.b16 %v191, %v189
    %v218 = vpack.c.b16 %v194, %v192
    %v219 = vpack.c.b16 %v195, %v193
    %v220 = vpack.c.b16 %v198, %v196
    %v221 = vpack.c.b16 %v199, %v197
    %v222 = vpack.c.b16 %v202, %v200
    %v223 = vpack.c.b16 %v203, %v201
    %v224 = vpack.c.b16 %v206, %v204
    %v225 = vpack.c.b16 %v207, %v205
    %v226 = vpack.c.b16 %v210, %v208
    %v227 = vpack.c.b16 %v211, %v209
    %244 = vmatprep.subr.bf16.mxu0 %v227
    %245 = vmatpush1.bf16.msra.mxu0 %v226
    %246 = vmatprep.subr.bf16.mxu0 %v225
    %247 = vmatpush1.bf16.msra.mxu0 %v224
    %248 = vmatprep.subr.bf16.mxu0 %v223
    %249 = vmatpush1.bf16.msra.mxu0 %v222
    %250 = vmatprep.subr.bf16.mxu0 %v221
    %251 = vmatpush1.bf16.msra.mxu0 %v220
    %252 = vmatprep.subr.bf16.mxu0 %v219
    %253 = vmatpush1.bf16.msra.mxu0 %v218
    %254 = vmatprep.subr.bf16.mxu0 %v217
    %255 = vmatpush1.bf16.msra.mxu0 %v216
    %256 = vmatprep.subr.bf16.mxu0 %v215
    %257 = vmatpush1.bf16.msra.mxu0 %v214
    %258 = vmatprep.subr.bf16.mxu0 %v213
    %259 = vmatpush1.bf16.msra.mxu0 %v212
    %260 = vmatprep.subr.bf16.mxu0 0
    %261 = vmatpush2.bf16.msra.mxu0 0
    %262 = vmatprep.subr.bf16.mxu0 0
    %263 = vmatpush2.bf16.msra.mxu0 0
    %264 = vmatprep.subr.bf16.mxu0 0
    %265 = vmatpush2.bf16.msra.mxu0 0
    %266 = vmatprep.subr.bf16.mxu0 0
    %267 = vmatpush2.bf16.msra.mxu0 0
    %268 = vmatprep.subr.bf16.mxu0 0
    %269 = vmatpush2.bf16.msra.mxu0 0
    %270 = vmatprep.subr.bf16.mxu0 0
    %271 = vmatpush2.bf16.msra.mxu0 0
    %272 = vmatprep.subr.bf16.mxu0 0
    %273 = vmatpush2.bf16.msra.mxu0 0
    %274 = vmatprep.subr.bf16.mxu0 0
    %275 = vmatpush2.bf16.msra.mxu0 0
    %276 = vmatprep.mubr.bf16.mxu0 0
    %277 = vmatmul.mubr.bf16.gmra.mxu0 %v148
    %v278 = vpop.f32.mrf.mxu0
    %v279 = vadd.f32 0.0, %v278
    %v280 = vpop.f32.mrf.mxu0
    %v281 = vadd.f32 0.0, %v280
    %v282 = vpop.f32.mrf.mxu0
    %v283 = vadd.f32 0.0, %v282
    %v284 = vpop.f32.mrf.mxu0
    %v285 = vadd.f32 0.0, %v284
    %286 = vmatprep.mubr.bf16.mxu0 0
    %287 = vmatmul.mubr.bf16.gmra.mxu0 %v149
    %v288 = vpop.f32.mrf.mxu0
    %v289 = vadd.f32 0.0, %v288
    %v290 = vpop.f32.mrf.mxu0
    %v291 = vadd.f32 0.0, %v290
    %v292 = vpop.f32.mrf.mxu0
    %v293 = vadd.f32 0.0, %v292
    %v294 = vpop.f32.mrf.mxu0
    %v295 = vadd.f32 0.0, %v294
    %296 = vmatprep.mubr.bf16.mxu0 0
    %297 = vmatmul.mubr.bf16.gmra.mxu0 %v150
    %v298 = vpop.f32.mrf.mxu0
    %v299 = vadd.f32 0.0, %v298
    %v300 = vpop.f32.mrf.mxu0
    %v301 = vadd.f32 0.0, %v300
    %v302 = vpop.f32.mrf.mxu0
    %v303 = vadd.f32 0.0, %v302
    %v304 = vpop.f32.mrf.mxu0
    %v305 = vadd.f32 0.0, %v304
    %306 = vmatprep.mubr.bf16.mxu0 0
    %307 = vmatmul.mubr.bf16.gmra.mxu0 %v151
    %v308 = vpop.f32.mrf.mxu0
    %v309 = vadd.f32 0.0, %v308
    %v310 = vpop.f32.mrf.mxu0
    %v311 = vadd.f32 0.0, %v310
    %v312 = vpop.f32.mrf.mxu0
    %v313 = vadd.f32 0.0, %v312
    %v314 = vpop.f32.mrf.mxu0
    %v315 = vadd.f32 0.0, %v314
    %316 = vmatprep.mubr.bf16.mxu0 0
    %317 = vmatmul.mubr.bf16.gmra.mxu0 %v152
    %v318 = vpop.f32.mrf.mxu0
    %v319 = vadd.f32 0.0, %v318
    %v320 = vpop.f32.mrf.mxu0
    %v321 = vadd.f32 0.0, %v320
    %v322 = vpop.f32.mrf.mxu0
    %v323 = vadd.f32 0.0, %v322
    %v324 = vpop.f32.mrf.mxu0
    %v325 = vadd.f32 0.0, %v324
    %326 = vmatprep.mubr.bf16.mxu0 0
    %327 = vmatmul.mubr.bf16.gmra.mxu0 %v153
    %v328 = vpop.f32.mrf.mxu0
    %v329 = vadd.f32 0.0, %v328
    %v330 = vpop.f32.mrf.mxu0
    %v331 = vadd.f32 0.0, %v330
    %v332 = vpop.f32.mrf.mxu0
    %v333 = vadd.f32 0.0, %v332
    %v334 = vpop.f32.mrf.mxu0
    %v335 = vadd.f32 0.0, %v334
    %336 = vmatprep.mubr.bf16.mxu0 0
    %337 = vmatmul.mubr.bf16.gmra.mxu0 %v154
    %v338 = vpop.f32.mrf.mxu0
    %v339 = vadd.f32 0.0, %v338
    %v340 = vpop.f32.mrf.mxu0
    %v341 = vadd.f32 0.0, %v340
    %v342 = vpop.f32.mrf.mxu0
    %v343 = vadd.f32 0.0, %v342
    %v344 = vpop.f32.mrf.mxu0
    %v345 = vadd.f32 0.0, %v344
    %346 = vmatprep.mubr.bf16.mxu0 0
    %347 = vmatmul.mubr.bf16.gmra.mxu0 %v155
    %v348 = vpop.f32.mrf.mxu0
    %v349 = vadd.f32 0.0, %v348
    %v350 = vpop.f32.mrf.mxu0
    %v351 = vadd.f32 0.0, %v350
    %v352 = vpop.f32.mrf.mxu0
    %v353 = vadd.f32 0.0, %v352
    %v354 = vpop.f32.mrf.mxu0
    %v355 = vadd.f32 0.0, %v354
    %356 = vdwg.mxu0
    %v357 = vadd.f32 %v52, %v279
    %v358 = vadd.f32 %v53, %v281
    %v359 = vadd.f32 %v54, %v283
    %v360 = vadd.f32 %v55, %v285
    %v361 = vadd.f32 %v56, %v289
    %v362 = vadd.f32 %v57, %v291
    %v363 = vadd.f32 %v58, %v293
    %v364 = vadd.f32 %v59, %v295
    %v365 = vadd.f32 %v60, %v299
    %v366 = vadd.f32 %v61, %v301
    %v367 = vadd.f32 %v62, %v303
    %v368 = vadd.f32 %v63, %v305
    %v369 = vadd.f32 %v64, %v309
    %v370 = vadd.f32 %v65, %v311
    %v371 = vadd.f32 %v66, %v313
    %v372 = vadd.f32 %v67, %v315
    %v373 = vadd.f32 %v68, %v319
    %v374 = vadd.f32 %v69, %v321
    %v375 = vadd.f32 %v70, %v323
    %v376 = vadd.f32 %v71, %v325
    %v377 = vadd.f32 %v72, %v329
    %v378 = vadd.f32 %v73, %v331
    %v379 = vadd.f32 %v74, %v333
    %v380 = vadd.f32 %v75, %v335
    %v381 = vadd.f32 %v76, %v339
    %v382 = vadd.f32 %v77, %v341
    %v383 = vadd.f32 %v78, %v343
    %v384 = vadd.f32 %v79, %v345
    %v385 = vadd.f32 %v80, %v349
    %v386 = vadd.f32 %v81, %v351
    %v387 = vadd.f32 %v82, %v353
    %v388 = vadd.f32 %v83, %v355
    %389 = vst [vmem:[#allocation2] sm:$0xff] %v357
    %390 = vst [vmem:[#allocation2 + $0x8] sm:$0xff] %v358
    %391 = vst [vmem:[#allocation2 + $0x10] sm:$0xff] %v359
    %392 = vst [vmem:[#allocation2 + $0x18] sm:$0xff] %v360
    %393 = vst [vmem:[#allocation2 + $0x20] sm:$0xff] %v361
    %394 = vst [vmem:[#allocation2 + $0x28] sm:$0xff] %v362
    %395 = vst [vmem:[#allocation2 + $0x30] sm:$0xff] %v363
    %396 = vst [vmem:[#allocation2 + $0x38] sm:$0xff] %v364
    %397 = vst [vmem:[#allocation2 + $0x40] sm:$0xff] %v365
    %398 = vst [vmem:[#allocation2 + $0x48] sm:$0xff] %v366
    %399 = vst [vmem:[#allocation2 + $0x50] sm:$0xff] %v367
    %400 = vst [vmem:[#allocation2 + $0x58] sm:$0xff] %v368
    %401 = vst [vmem:[#allocation2 + $0x60] sm:$0xff] %v369
    %402 = vst [vmem:[#allocation2 + $0x68] sm:$0xff] %v370
    %403 = vst [vmem:[#allocation2 + $0x70] sm:$0xff] %v371
    %404 = vst [vmem:[#allocation2 + $0x78] sm:$0xff] %v372
    %405 = vst [vmem:[#allocation2 + $0x80] sm:$0xff] %v373
    %406 = vst [vmem:[#allocation2 + $0x88] sm:$0xff] %v374
    %407 = vst [vmem:[#allocation2 + $0x90] sm:$0xff] %v375
    %408 = vst [vmem:[#allocation2 + $0x98] sm:$0xff] %v376
    %409 = vst [vmem:[#allocation2 + $0xa0] sm:$0xff] %v377
    %410 = vst [vmem:[#allocation2 + $0xa8] sm:$0xff] %v378
    %411 = vst [vmem:[#allocation2 + $0xb0] sm:$0xff] %v379
    %412 = vst [vmem:[#allocation2 + $0xb8] sm:$0xff] %v380
    %413 = vst [vmem:[#allocation2 + $0xc0] sm:$0xff] %v381
    %414 = vst [vmem:[#allocation2 + $0xc8] sm:$0xff] %v382
    %415 = vst [vmem:[#allocation2 + $0xd0] sm:$0xff] %v383
    %416 = vst [vmem:[#allocation2 + $0xd8] sm:$0xff] %v384
    %417 = vst [vmem:[#allocation2 + $0xe0] sm:$0xff] %v385
    %418 = vst [vmem:[#allocation2 + $0xe8] sm:$0xff] %v386
    %419 = vst [vmem:[#allocation2 + $0xf0] sm:$0xff] %v387
    %420 = vst [vmem:[#allocation2 + $0xf8] sm:$0xff] %v388
    // Predicated region
    $region18: #{forward.9} parent=1 // pred_check
      %p421 = pneg %p16
    $region19: #{forward.9} parent=1 // pred_check_branch
      %423 = sbr.rel (%p421) target = $region21
    $region20: #{forward.9} parent=1 // pred_region
      %v424 = vld [vmem:[#allocation2] sm:$0xff]
      %v425 = vld [vmem:[#allocation2 + $0x8] sm:$0xff]
      %v426 = vld [vmem:[#allocation2 + $0x10] sm:$0xff]
      %v427 = vld [vmem:[#allocation2 + $0x18] sm:$0xff]
      %v428 = vld [vmem:[#allocation2 + $0x20] sm:$0xff]
      %v429 = vld [vmem:[#allocation2 + $0x28] sm:$0xff]
      %v430 = vld [vmem:[#allocation2 + $0x30] sm:$0xff]
      %v431 = vld [vmem:[#allocation2 + $0x38] sm:$0xff]
      %v432 = vld [vmem:[#allocation2 + $0x40] sm:$0xff]
      %v433 = vld [vmem:[#allocation2 + $0x48] sm:$0xff]
      %v434 = vld [vmem:[#allocation2 + $0x50] sm:$0xff]
      %v435 = vld [vmem:[#allocation2 + $0x58] sm:$0xff]
      %v436 = vld [vmem:[#allocation2 + $0x60] sm:$0xff]
      %v437 = vld [vmem:[#allocation2 + $0x68] sm:$0xff]
      %v438 = vld [vmem:[#allocation2 + $0x70] sm:$0xff]
      %v439 = vld [vmem:[#allocation2 + $0x78] sm:$0xff]
      %v440 = vld [vmem:[#allocation2 + $0x80] sm:$0xff]
      %v441 = vld [vmem:[#allocation2 + $0x88] sm:$0xff]
      %v442 = vld [vmem:[#allocation2 + $0x90] sm:$0xff]
      %v443 = vld [vmem:[#allocation2 + $0x98] sm:$0xff]
      %v444 = vld [vmem:[#allocation2 + $0xa0] sm:$0xff]
      %v445 = vld [vmem:[#allocation2 + $0xa8] sm:$0xff]
      %v446 = vld [vmem:[#allocation2 + $0xb0] sm:$0xff]
      %v447 = vld [vmem:[#allocation2 + $0xb8] sm:$0xff]
      %v448 = vld [vmem:[#allocation2 + $0xc0] sm:$0xff]
      %v449 = vld [vmem:[#allocation2 + $0xc8] sm:$0xff]
      %v450 = vld [vmem:[#allocation2 + $0xd0] sm:$0xff]
      %v451 = vld [vmem:[#allocation2 + $0xd8] sm:$0xff]
      %v452 = vld [vmem:[#allocation2 + $0xe0] sm:$0xff]
      %v453 = vld [vmem:[#allocation2 + $0xe8] sm:$0xff]
      %v454 = vld [vmem:[#allocation2 + $0xf0] sm:$0xff]
      %v455 = vld [vmem:[#allocation2 + $0xf8] sm:$0xff]
      %v456 = vld [vmem:[%s2] sm:$0x3]
      %v458 = vlaneseq
      %v459 = vshrl.u32 %v458, 7
      %v460 = vsub.s32 0, %v459
      %v461 = vrot.slane %v456, %v460
      %v462 = vlaneseq
      %v463 = vshrl.u32 %v462, 7
      %v464 = vsub.s32 1, %v463
      %v465 = vrot.slane %v456, %v464
      %v468 = vadd.f32 %v424, %v461
      %v469 = vadd.f32 %v425, %v465
      %v470 = vadd.f32 %v426, %v461
      %v471 = vadd.f32 %v427, %v465
      %v472 = vadd.f32 %v428, %v461
      %v473 = vadd.f32 %v429, %v465
      %v474 = vadd.f32 %v430, %v461
      %v475 = vadd.f32 %v431, %v465
      %v476 = vadd.f32 %v432, %v461
      %v477 = vadd.f32 %v433, %v465
      %v478 = vadd.f32 %v434, %v461
      %v479 = vadd.f32 %v435, %v465
      %v480 = vadd.f32 %v436, %v461
      %v481 = vadd.f32 %v437, %v465
      %v482 = vadd.f32 %v438, %v461
      %v483 = vadd.f32 %v439, %v465
      %v484 = vadd.f32 %v440, %v461
      %v485 = vadd.f32 %v441, %v465
      %v486 = vadd.f32 %v442, %v461
      %v487 = vadd.f32 %v443, %v465
      %v488 = vadd.f32 %v444, %v461
      %v489 = vadd.f32 %v445, %v465
      %v490 = vadd.f32 %v446, %v461
      %v491 = vadd.f32 %v447, %v465
      %v492 = vadd.f32 %v448, %v461
      %v493 = vadd.f32 %v449, %v465
      %v494 = vadd.f32 %v450, %v461
      %v495 = vadd.f32 %v451, %v465
      %v496 = vadd.f32 %v452, %v461
      %v497 = vadd.f32 %v453, %v465
      %v498 = vadd.f32 %v454, %v461
      %v499 = vadd.f32 %v455, %v465
      %500 = vst [vmem:[#allocation3] sm:$0xff] %v468
      %501 = vst [vmem:[#allocation3 + $0x8] sm:$0xff] %v469
      %502 = vst [vmem:[#allocation3 + $0x10] sm:$0xff] %v470
      %503 = vst [vmem:[#allocation3 + $0x18] sm:$0xff] %v471
      %504 = vst [vmem:[#allocation3 + $0x20] sm:$0xff] %v472
      %505 = vst [vmem:[#allocation3 + $0x28] sm:$0xff] %v473
      %506 = vst [vmem:[#allocation3 + $0x30] sm:$0xff] %v474
      %507 = vst [vmem:[#allocation3 + $0x38] sm:$0xff] %v475
      %508 = vst [vmem:[#allocation3 + $0x40] sm:$0xff] %v476
      %509 = vst [vmem:[#allocation3 + $0x48] sm:$0xff] %v477
      %510 = vst [vmem:[#allocation3 + $0x50] sm:$0xff] %v478
      %511 = vst [vmem:[#allocation3 + $0x58] sm:$0xff] %v479
      %512 = vst [vmem:[#allocation3 + $0x60] sm:$0xff] %v480
      %513 = vst [vmem:[#allocation3 + $0x68] sm:$0xff] %v481
      %514 = vst [vmem:[#allocation3 + $0x70] sm:$0xff] %v482
      %515 = vst [vmem:[#allocation3 + $0x78] sm:$0xff] %v483
      %516 = vst [vmem:[#allocation3 + $0x80] sm:$0xff] %v484
      %517 = vst [vmem:[#allocation3 + $0x88] sm:$0xff] %v485
      %518 = vst [vmem:[#allocation3 + $0x90] sm:$0xff] %v486
      %519 = vst [vmem:[#allocation3 + $0x98] sm:$0xff] %v487
      %520 = vst [vmem:[#allocation3 + $0xa0] sm:$0xff] %v488
      %521 = vst [vmem:[#allocation3 + $0xa8] sm:$0xff] %v489
      %522 = vst [vmem:[#allocation3 + $0xb0] sm:$0xff] %v490
      %523 = vst [vmem:[#allocation3 + $0xb8] sm:$0xff] %v491
      %524 = vst [vmem:[#allocation3 + $0xc0] sm:$0xff] %v492
      %525 = vst [vmem:[#allocation3 + $0xc8] sm:$0xff] %v493
      %526 = vst [vmem:[#allocation3 + $0xd0] sm:$0xff] %v494
      %527 = vst [vmem:[#allocation3 + $0xd8] sm:$0xff] %v495
      %528 = vst [vmem:[#allocation3 + $0xe0] sm:$0xff] %v496
      %529 = vst [vmem:[#allocation3 + $0xe8] sm:$0xff] %v497
      %530 = vst [vmem:[#allocation3 + $0xf0] sm:$0xff] %v498
      %531 = vst [vmem:[#allocation3 + $0xf8] sm:$0xff] %v499
    $region21: #{forward.9} parent=1 // pred_fallthru
      _
    // Predicated region
    $region22: #{forward.9} parent=1 // pred_check
      _
    $region23: #{forward.9} parent=1 // pred_check_branch
      %533 = sbr.rel (0) target = $region25
    $region24: #{forward.9} parent=1 // pred_region
      %s535 = ssub.s32 4096, 4096
      %536 = vsyncadd [#allocation4], %s535
      %s537 = sshll.u32 [#allocation3], 4
      %s538 = int_to_ptr.vmem [resolvable:$true] %s537
      %543 = dma.vmem_to_hbm [thread:$0]  %s538, 4096, %s3, [#allocation4], 256, 256, 16
    $region25: #{forward.9} parent=1 // pred_fallthru
      _
    // Predicated region
    $region26: #{forward.9} parent=1 // pred_check
      _
    $region27: #{forward.9} parent=1 // pred_check_branch
      %545 = sbr.rel (0) target = $region29
    $region28: #{forward.9} parent=1 // pred_region
      %546 = dma.done [#allocation4], 4096
    $region29: #{forward.9} parent=1 // pred_fallthru
      _
    %547 = vsyncpa [#allocation4], 1

// kernel: forward.5
$region0: #{forward.5}
  #allocation0 [shape = 'u32[]', space=smem, size = 0x4, offset = 0x4, fixed_abs, tag = 'smem constant byte address 0x4 - core index']
  #allocation1 [shape = 'u32[144,128]{1,0:T(1,128)}', space=vmem, size = 0x12000, scoped, tag = 'internal scratch']
  #allocation2 [shape = 'f32[128,512]{1,0:T(8,128)}', space=vmem, size = 0x40000, scoped, tag = 'scratch operand']
  %s0 = inlined_call_operand.vmem [shape: bf16[128,128], index: 0, kind: input, shape index: {}]
  %s1 = inlined_call_operand.vmem [shape: bf16[128,512], index: 1, kind: input, shape index: {}]
  %s2 = inlined_call_operand.vmem [shape: f32[1,512], index: 2, kind: input, shape index: {}]
  %s3 = inlined_call_operand.vmem [shape: f32[128,512], index: 3, kind: output, shape index: {}]
  %s4 = sld [smem:[#allocation0]]
  $region30: #{forward.5} parent=0
    _
  %s6 = ssub.s32 1, %s4
  %s7 = scalar_select 0, %s6, %s4
  // Predicated region
  $region2: #{forward.5} parent=0 // pred_check
    _
  $region3: #{forward.5} parent=0 // pred_check_branch
    %9 = sbr.rel (0) target = $region5
  $region4: #{forward.5} parent=0 // pred_region
    _
  $region5: #{forward.5} parent=0 // pred_fallthru
    _
  // Predicated region
  $region6: #{forward.5} parent=0 // pred_check
    _
  $region7: #{forward.5} parent=0 // pred_check_branch
    %11 = sbr.rel (0) target = $region9
  $region8: #{forward.5} parent=0 // pred_region
    _
  $region9: #{forward.5} parent=0 // pred_fallthru
    _
  // Predicated region
  $region10: #{forward.5} parent=0 // pred_check
    _
  $region11: #{forward.5} parent=0 // pred_check_branch
    %13 = sbr.rel (0) target = $region13
  $region12: #{forward.5} parent=0 // pred_region
    _
  $region13: #{forward.5} parent=0 // pred_fallthru
    _
  %p15 = scmp.eq.s32.totalorder 0, 0
  // Predicated region
  $region14: #{forward.5} parent=0 // pred_check
    %p16 = pneg %p15
  $region15: #{forward.5} parent=0 // pred_check_branch
    %18 = sbr.rel (%p16) target = $region17
  $region16: #{forward.5} parent=0 // pred_region
    %19 = vst [vmem:[#allocation2] sm:$0xff] 0.0
    %20 = vst [vmem:[#allocation2 + $0x8] sm:$0xff] 0.0
    %21 = vst [vmem:[#allocation2 + $0x10] sm:$0xff] 0.0
    %22 = vst [vmem:[#allocation2 + $0x18] sm:$0xff] 0.0
    %23 = vst [vmem:[#allocation2 + $0x20] sm:$0xff] 0.0
    %24 = vst [vmem:[#allocation2 + $0x28] sm:$0xff] 0.0
    %25 = vst [vmem:[#allocation2 + $0x30] sm:$0xff] 0.0
    %26 = vst [vmem:[#allocation2 + $0x38] sm:$0xff] 0.0
    %27 = vst [vmem:[#allocation2 + $0x40] sm:$0xff] 0.0
    %28 = vst [vmem:[#allocation2 + $0x48] sm:$0xff] 0.0
    %29 = vst [vmem:[#allocation2 + $0x50] sm:$0xff] 0.0
    %30 = vst [vmem:[#allocation2 + $0x58] sm:$0xff] 0.0
    %31 = vst [vmem:[#allocation2 + $0x60] sm:$0xff] 0.0
    %32 = vst [vmem:[#allocation2 + $0x68] sm:$0xff] 0.0
    %33 = vst [vmem:[#allocation2 + $0x70] sm:$0xff] 0.0
    %34 = vst [vmem:[#allocation2 + $0x78] sm:$0xff] 0.0
    %35 = vst [vmem:[#allocation2 + $0x80] sm:$0xff] 0.0
    %36 = vst [vmem:[#allocation2 + $0x88] sm:$0xff] 0.0
    %37 = vst [vmem:[#allocation2 + $0x90] sm:$0xff] 0.0
    %38 = vst [vmem:[#allocation2 + $0x98] sm:$0xff] 0.0
    %39 = vst [vmem:[#allocation2 + $0xa0] sm:$0xff] 0.0
    %40 = vst [vmem:[#allocation2 + $0xa8] sm:$0xff] 0.0
    %41 = vst [vmem:[#allocation2 + $0xb0] sm:$0xff] 0.0
    %42 = vst [vmem:[#allocation2 + $0xb8] sm:$0xff] 0.0
    %43 = vst [vmem:[#allocation2 + $0xc0] sm:$0xff] 0.0
    %44 = vst [vmem:[#allocation2 + $0xc8] sm:$0xff] 0.0
    %45 = vst [vmem:[#allocation2 + $0xd0] sm:$0xff] 0.0
    %46 = vst [vmem:[#allocation2 + $0xd8] sm:$0xff] 0.0
    %47 = vst [vmem:[#allocation2 + $0xe0] sm:$0xff] 0.0
    %48 = vst [vmem:[#allocation2 + $0xe8] sm:$0xff] 0.0
    %49 = vst [vmem:[#allocation2 + $0xf0] sm:$0xff] 0.0
    %50 = vst [vmem:[#allocation2 + $0xf8] sm:$0xff] 0.0
    %51 = vst [vmem:[#allocation2 + $0x100] sm:$0xff] 0.0
    %52 = vst [vmem:[#allocation2 + $0x108] sm:$0xff] 0.0
    %53 = vst [vmem:[#allocation2 + $0x110] sm:$0xff] 0.0
    %54 = vst [vmem:[#allocation2 + $0x118] sm:$0xff] 0.0
    %55 = vst [vmem:[#allocation2 + $0x120] sm:$0xff] 0.0
    %56 = vst [vmem:[#allocation2 + $0x128] sm:$0xff] 0.0
    %57 = vst [vmem:[#allocation2 + $0x130] sm:$0xff] 0.0
    %58 = vst [vmem:[#allocation2 + $0x138] sm:$0xff] 0.0
    %59 = vst [vmem:[#allocation2 + $0x140] sm:$0xff] 0.0
    %60 = vst [vmem:[#allocation2 + $0x148] sm:$0xff] 0.0
    %61 = vst [vmem:[#allocation2 + $0x150] sm:$0xff] 0.0
    %62 = vst [vmem:[#allocation2 + $0x158] sm:$0xff] 0.0
    %63 = vst [vmem:[#allocation2 + $0x160] sm:$0xff] 0.0
    %64 = vst [vmem:[#allocation2 + $0x168] sm:$0xff] 0.0
    %65 = vst [vmem:[#allocation2 + $0x170] sm:$0xff] 0.0
    %66 = vst [vmem:[#allocation2 + $0x178] sm:$0xff] 0.0
    %67 = vst [vmem:[#allocation2 + $0x180] sm:$0xff] 0.0
    %68 = vst [vmem:[#allocation2 + $0x188] sm:$0xff] 0.0
    %69 = vst [vmem:[#allocation2 + $0x190] sm:$0xff] 0.0
    %70 = vst [vmem:[#allocation2 + $0x198] sm:$0xff] 0.0
    %71 = vst [vmem:[#allocation2 + $0x1a0] sm:$0xff] 0.0
    %72 = vst [vmem:[#allocation2 + $0x1a8] sm:$0xff] 0.0
    %73 = vst [vmem:[#allocation2 + $0x1b0] sm:$0xff] 0.0
    %74 = vst [vmem:[#allocation2 + $0x1b8] sm:$0xff] 0.0
    %75 = vst [vmem:[#allocation2 + $0x1c0] sm:$0xff] 0.0
    %76 = vst [vmem:[#allocation2 + $0x1c8] sm:$0xff] 0.0
    %77 = vst [vmem:[#allocation2 + $0x1d0] sm:$0xff] 0.0
    %78 = vst [vmem:[#allocation2 + $0x1d8] sm:$0xff] 0.0
    %79 = vst [vmem:[#allocation2 + $0x1e0] sm:$0xff] 0.0
    %80 = vst [vmem:[#allocation2 + $0x1e8] sm:$0xff] 0.0
    %81 = vst [vmem:[#allocation2 + $0x1f0] sm:$0xff] 0.0
    %82 = vst [vmem:[#allocation2 + $0x1f8] sm:$0xff] 0.0
  $region17: #{forward.5} parent=0 // pred_fallthru
    _
  %v83 = vld [vmem:[#allocation2] sm:$0xff]
  %v84 = vld [vmem:[#allocation2 + $0x8] sm:$0xff]
  %v85 = vld [vmem:[#allocation2 + $0x10] sm:$0xff]
  %v86 = vld [vmem:[#allocation2 + $0x18] sm:$0xff]
  %v87 = vld [vmem:[#allocation2 + $0x20] sm:$0xff]
  %v88 = vld [vmem:[#allocation2 + $0x28] sm:$0xff]
  %v89 = vld [vmem:[#allocation2 + $0x30] sm:$0xff]
  %v90 = vld [vmem:[#allocation2 + $0x38] sm:$0xff]
  %v91 = vld [vmem:[#allocation2 + $0x40] sm:$0xff]
  %v92 = vld [vmem:[#allocation2 + $0x48] sm:$0xff]
  %v93 = vld [vmem:[#allocation2 + $0x50] sm:$0xff]
  %v94 = vld [vmem:[#allocation2 + $0x58] sm:$0xff]
  %v95 = vld [vmem:[#allocation2 + $0x60] sm:$0xff]
  %v96 = vld [vmem:[#allocation2 + $0x68] sm:$0xff]
  %v97 = vld [vmem:[#allocation2 + $0x70] sm:$0xff]
  %v98 = vld [vmem:[#allocation2 + $0x78] sm:$0xff]
  %v99 = vld [vmem:[#allocation2 + $0x80] sm:$0xff]
  %v100 = vld [vmem:[#allocation2 + $0x88] sm:$0xff]
  %v101 = vld [vmem:[#allocation2 + $0x90] sm:$0xff]
  %v102 = vld [vmem:[#allocation2 + $0x98] sm:$0xff]
  %v103 = vld [vmem:[#allocation2 + $0xa0] sm:$0xff]
  %v104 = vld [vmem:[#allocation2 + $0xa8] sm:$0xff]
  %v105 = vld [vmem:[#allocation2 + $0xb0] sm:$0xff]
  %v106 = vld [vmem:[#allocation2 + $0xb8] sm:$0xff]
  %v107 = vld [vmem:[#allocation2 + $0xc0] sm:$0xff]
  %v108 = vld [vmem:[#allocation2 + $0xc8] sm:$0xff]
  %v109 = vld [vmem:[#allocation2 + $0xd0] sm:$0xff]
  %v110 = vld [vmem:[#allocation2 + $0xd8] sm:$0xff]
  %v111 = vld [vmem:[#allocation2 + $0xe0] sm:$0xff]
  %v112 = vld [vmem:[#allocation2 + $0xe8] sm:$0xff]
  %v113 = vld [vmem:[#allocation2 + $0xf0] sm:$0xff]
  %v114 = vld [vmem:[#allocation2 + $0xf8] sm:$0xff]
  %v115 = vld [vmem:[#allocation2 + $0x100] sm:$0xff]
  %v116 = vld [vmem:[#allocation2 + $0x108] sm:$0xff]
  %v117 = vld [vmem:[#allocation2 + $0x110] sm:$0xff]
  %v118 = vld [vmem:[#allocation2 + $0x118] sm:$0xff]
  %v119 = vld [vmem:[#allocation2 + $0x120] sm:$0xff]
  %v120 = vld [vmem:[#allocation2 + $0x128] sm:$0xff]
  %v121 = vld [vmem:[#allocation2 + $0x130] sm:$0xff]
  %v122 = vld [vmem:[#allocation2 + $0x138] sm:$0xff]
  %v123 = vld [vmem:[#allocation2 + $0x140] sm:$0xff]
  %v124 = vld [vmem:[#allocation2 + $0x148] sm:$0xff]
  %v125 = vld [vmem:[#allocation2 + $0x150] sm:$0xff]
  %v126 = vld [vmem:[#allocation2 + $0x158] sm:$0xff]
  %v127 = vld [vmem:[#allocation2 + $0x160] sm:$0xff]
  %v128 = vld [vmem:[#allocation2 + $0x168] sm:$0xff]
  %v129 = vld [vmem:[#allocation2 + $0x170] sm:$0xff]
  %v130 = vld [vmem:[#allocation2 + $0x178] sm:$0xff]
  %v131 = vld [vmem:[#allocation2 + $0x180] sm:$0xff]
  %v132 = vld [vmem:[#allocation2 + $0x188] sm:$0xff]
  %v133 = vld [vmem:[#allocation2 + $0x190] sm:$0xff]
  %v134 = vld [vmem:[#allocation2 + $0x198] sm:$0xff]
  %v135 = vld [vmem:[#allocation2 + $0x1a0] sm:$0xff]
  %v136 = vld [vmem:[#allocation2 + $0x1a8] sm:$0xff]
  %v137 = vld [vmem:[#allocation2 + $0x1b0] sm:$0xff]
  %v138 = vld [vmem:[#allocation2 + $0x1b8] sm:$0xff]
  %v139 = vld [vmem:[#allocation2 + $0x1c0] sm:$0xff]
  %v140 = vld [vmem:[#allocation2 + $0x1c8] sm:$0xff]
  %v141 = vld [vmem:[#allocation2 + $0x1d0] sm:$0xff]
  %v142 = vld [vmem:[#allocation2 + $0x1d8] sm:$0xff]
  %v143 = vld [vmem:[#allocation2 + $0x1e0] sm:$0xff]
  %v144 = vld [vmem:[#allocation2 + $0x1e8] sm:$0xff]
  %v145 = vld [vmem:[#allocation2 + $0x1f0] sm:$0xff]
  %v146 = vld [vmem:[#allocation2 + $0x1f8] sm:$0xff]
  %v147 = vld [vmem:[%s0] sm:$0xf]
  %v148 = vld [vmem:[%s0 + $0x4] sm:$0xf]
  %v149 = vld [vmem:[%s0 + $0x8] sm:$0xf]
  %v150 = vld [vmem:[%s0 + $0xc] sm:$0xf]
  %v151 = vld [vmem:[%s0 + $0x10] sm:$0xf]
  %v152 = vld [vmem:[%s0 + $0x14] sm:$0xf]
  %v153 = vld [vmem:[%s0 + $0x18] sm:$0xf]
  %v154 = vld [vmem:[%s0 + $0x1c] sm:$0xf]
  %v155 = vld [vmem:[%s0 + $0x20] sm:$0xf]
  %v156 = vld [vmem:[%s0 + $0x24] sm:$0xf]
  %v157 = vld [vmem:[%s0 + $0x28] sm:$0xf]
  %v158 = vld [vmem:[%s0 + $0x2c] sm:$0xf]
  %v159 = vld [vmem:[%s0 + $0x30] sm:$0xf]
  %v160 = vld [vmem:[%s0 + $0x34] sm:$0xf]
  %v161 = vld [vmem:[%s0 + $0x38] sm:$0xf]
  %v162 = vld [vmem:[%s0 + $0x3c] sm:$0xf]
  %v163 = vld [vmem:[%s1] sm:$0xff]
  %v164 = vld [vmem:[%s1 + $0x8] sm:$0xff]
  %v165 = vld [vmem:[%s1 + $0x10] sm:$0xff]
  %v166 = vld [vmem:[%s1 + $0x18] sm:$0xff]
  %v167 = vld [vmem:[%s1 + $0x20] sm:$0xff]
  %v168 = vld [vmem:[%s1 + $0x28] sm:$0xff]
  %v169 = vld [vmem:[%s1 + $0x30] sm:$0xff]
  %v170 = vld [vmem:[%s1 + $0x38] sm:$0xff]
  %v171 = vld [vmem:[%s1 + $0x40] sm:$0xff]
  %v172 = vld [vmem:[%s1 + $0x48] sm:$0xff]
  %v173 = vld [vmem:[%s1 + $0x50] sm:$0xff]
  %v174 = vld [vmem:[%s1 + $0x58] sm:$0xff]
  %v175 = vld [vmem:[%s1 + $0x60] sm:$0xff]
  %v176 = vld [vmem:[%s1 + $0x68] sm:$0xff]
  %v177 = vld [vmem:[%s1 + $0x70] sm:$0xff]
  %v178 = vld [vmem:[%s1 + $0x78] sm:$0xff]
  %v179 = vld [vmem:[%s1 + $0x80] sm:$0xff]
  %v180 = vld [vmem:[%s1 + $0x88] sm:$0xff]
  %v181 = vld [vmem:[%s1 + $0x90] sm:$0xff]
  %v182 = vld [vmem:[%s1 + $0x98] sm:$0xff]
  %v183 = vld [vmem:[%s1 + $0xa0] sm:$0xff]
  %v184 = vld [vmem:[%s1 + $0xa8] sm:$0xff]
  %v185 = vld [vmem:[%s1 + $0xb0] sm:$0xff]
  %v186 = vld [vmem:[%s1 + $0xb8] sm:$0xff]
  %v187 = vld [vmem:[%s1 + $0xc0] sm:$0xff]
  %v188 = vld [vmem:[%s1 + $0xc8] sm:$0xff]
  %v189 = vld [vmem:[%s1 + $0xd0] sm:$0xff]
  %v190 = vld [vmem:[%s1 + $0xd8] sm:$0xff]
  %v191 = vld [vmem:[%s1 + $0xe0] sm:$0xff]
  %v192 = vld [vmem:[%s1 + $0xe8] sm:$0xff]
  %v193 = vld [vmem:[%s1 + $0xf0] sm:$0xff]
  %v194 = vld [vmem:[%s1 + $0xf8] sm:$0xff]
  %v211 = vunpack.c.l.b16 %v147
  %v212 = vunpack.c.l.b16 %v148
  %v213 = vunpack.c.l.b16 %v149
  %v214 = vunpack.c.l.b16 %v150
  %v215 = vunpack.c.l.b16 %v151
  %v216 = vunpack.c.l.b16 %v152
  %v217 = vunpack.c.l.b16 %v153
  %v218 = vunpack.c.l.b16 %v154
  %v219 = vunpack.c.l.b16 %v155
  %v220 = vunpack.c.l.b16 %v156
  %v221 = vunpack.c.l.b16 %v157
  %v222 = vunpack.c.l.b16 %v158
  %v223 = vunpack.c.l.b16 %v159
  %v224 = vunpack.c.l.b16 %v160
  %v225 = vunpack.c.l.b16 %v161
  %v226 = vunpack.c.l.b16 %v162
  %v227 = vpack.c.b16 %v212, %v211
  %v228 = vpack.c.b16 %v214, %v213
  %v229 = vpack.c.b16 %v216, %v215
  %v230 = vpack.c.b16 %v218, %v217
  %v231 = vpack.c.b16 %v220, %v219
  %v232 = vpack.c.b16 %v222, %v221
  %v233 = vpack.c.b16 %v224, %v223
  %v234 = vpack.c.b16 %v226, %v225
  %v275 = vunpack.c.l.b16 %v163
  %v276 = vunpack.c.h.b16 %v163
  %v277 = vunpack.c.l.b16 %v164
  %v278 = vunpack.c.h.b16 %v164
  %v279 = vunpack.c.l.b16 %v165
  %v280 = vunpack.c.h.b16 %v165
  %v281 = vunpack.c.l.b16 %v166
  %v282 = vunpack.c.h.b16 %v166
  %v283 = vunpack.c.l.b16 %v167
  %v284 = vunpack.c.h.b16 %v167
  %v285 = vunpack.c.l.b16 %v168
  %v286 = vunpack.c.h.b16 %v168
  %v287 = vunpack.c.l.b16 %v169
  %v288 = vunpack.c.h.b16 %v169
  %v289 = vunpack.c.l.b16 %v170
  %v290 = vunpack.c.h.b16 %v170
  %v291 = vunpack.c.l.b16 %v171
  %v292 = vunpack.c.h.b16 %v171
  %v293 = vunpack.c.l.b16 %v172
  %v294 = vunpack.c.h.b16 %v172
  %v295 = vunpack.c.l.b16 %v173
  %v296 = vunpack.c.h.b16 %v173
  %v297 = vunpack.c.l.b16 %v174
  %v298 = vunpack.c.h.b16 %v174
  %v299 = vunpack.c.l.b16 %v175
  %v300 = vunpack.c.h.b16 %v175
  %v301 = vunpack.c.l.b16 %v176
  %v302 = vunpack.c.h.b16 %v176
  %v303 = vunpack.c.l.b16 %v177
  %v304 = vunpack.c.h.b16 %v177
  %v305 = vunpack.c.l.b16 %v178
  %v306 = vunpack.c.h.b16 %v178
  %v307 = vunpack.c.l.b16 %v179
  %v308 = vunpack.c.h.b16 %v179
  %v309 = vunpack.c.l.b16 %v180
  %v310 = vunpack.c.h.b16 %v180
  %v311 = vunpack.c.l.b16 %v181
  %v312 = vunpack.c.h.b16 %v181
  %v313 = vunpack.c.l.b16 %v182
  %v314 = vunpack.c.h.b16 %v182
  %v315 = vunpack.c.l.b16 %v183
  %v316 = vunpack.c.h.b16 %v183
  %v317 = vunpack.c.l.b16 %v184
  %v318 = vunpack.c.h.b16 %v184
  %v319 = vunpack.c.l.b16 %v185
  %v320 = vunpack.c.h.b16 %v185
  %v321 = vunpack.c.l.b16 %v186
  %v322 = vunpack.c.h.b16 %v186
  %v323 = vunpack.c.l.b16 %v187
  %v324 = vunpack.c.h.b16 %v187
  %v325 = vunpack.c.l.b16 %v188
  %v326 = vunpack.c.h.b16 %v188
  %v327 = vunpack.c.l.b16 %v189
  %v328 = vunpack.c.h.b16 %v189
  %v329 = vunpack.c.l.b16 %v190
  %v330 = vunpack.c.h.b16 %v190
  %v331 = vunpack.c.l.b16 %v191
  %v332 = vunpack.c.h.b16 %v191
  %v333 = vunpack.c.l.b16 %v192
  %v334 = vunpack.c.h.b16 %v192
  %v335 = vunpack.c.l.b16 %v193
  %v336 = vunpack.c.h.b16 %v193
  %v337 = vunpack.c.l.b16 %v194
  %v338 = vunpack.c.h.b16 %v194
  %v339 = vpack.c.b16 %v279, %v275
  %v340 = vpack.c.b16 %v280, %v276
  %v341 = vpack.c.b16 %v281, %v277
  %v342 = vpack.c.b16 %v282, %v278
  %v343 = vpack.c.b16 %v287, %v283
  %v344 = vpack.c.b16 %v288, %v284
  %v345 = vpack.c.b16 %v289, %v285
  %v346 = vpack.c.b16 %v290, %v286
  %v347 = vpack.c.b16 %v295, %v291
  %v348 = vpack.c.b16 %v296, %v292
  %v349 = vpack.c.b16 %v297, %v293
  %v350 = vpack.c.b16 %v298, %v294
  %v351 = vpack.c.b16 %v303, %v299
  %v352 = vpack.c.b16 %v304, %v300
  %v353 = vpack.c.b16 %v305, %v301
  %v354 = vpack.c.b16 %v306, %v302
  %v355 = vpack.c.b16 %v311, %v307
  %v356 = vpack.c.b16 %v312, %v308
  %v357 = vpack.c.b16 %v313, %v309
  %v358 = vpack.c.b16 %v314, %v310
  %v359 = vpack.c.b16 %v319, %v315
  %v360 = vpack.c.b16 %v320, %v316
  %v361 = vpack.c.b16 %v321, %v317
  %v362 = vpack.c.b16 %v322, %v318
  %v363 = vpack.c.b16 %v327, %v323
  %v364 = vpack.c.b16 %v328, %v324
  %v365 = vpack.c.b16 %v329, %v325
  %v366 = vpack.c.b16 %v330, %v326
  %v367 = vpack.c.b16 %v335, %v331
  %v368 = vpack.c.b16 %v336, %v332
  %v369 = vpack.c.b16 %v337, %v333
  %v370 = vpack.c.b16 %v338, %v334
  %403 = vmatprep.subr.bf16.mxu0 %v368
  %404 = vmatpush1.bf16.msra.mxu0 %v367
  %405 = vmatprep.subr.bf16.mxu0 %v364
  %406 = vmatpush1.bf16.msra.mxu0 %v363
  %407 = vmatprep.subr.bf16.mxu0 %v360
  %408 = vmatpush1.bf16.msra.mxu0 %v359
  %409 = vmatprep.subr.bf16.mxu0 %v356
  %410 = vmatpush1.bf16.msra.mxu0 %v355
  %411 = vmatprep.subr.bf16.mxu0 %v352
  %412 = vmatpush1.bf16.msra.mxu0 %v351
  %413 = vmatprep.subr.bf16.mxu0 %v348
  %414 = vmatpush1.bf16.msra.mxu0 %v347
  %415 = vmatprep.subr.bf16.mxu0 %v344
  %416 = vmatpush1.bf16.msra.mxu0 %v343
  %417 = vmatprep.subr.bf16.mxu0 %v340
  %418 = vmatpush1.bf16.msra.mxu0 %v339
  %419 = vmatprep.subr.bf16.mxu0 0
  %420 = vmatpush2.bf16.msra.mxu0 0
  %421 = vmatprep.subr.bf16.mxu0 0
  %422 = vmatpush2.bf16.msra.mxu0 0
  %423 = vmatprep.subr.bf16.mxu0 0
  %424 = vmatpush2.bf16.msra.mxu0 0
  %425 = vmatprep.subr.bf16.mxu0 0
  %426 = vmatpush2.bf16.msra.mxu0 0
  %427 = vmatprep.subr.bf16.mxu0 0
  %428 = vmatpush2.bf16.msra.mxu0 0
  %429 = vmatprep.subr.bf16.mxu0 0
  %430 = vmatpush2.bf16.msra.mxu0 0
  %431 = vmatprep.subr.bf16.mxu0 0
  %432 = vmatpush2.bf16.msra.mxu0 0
  %433 = vmatprep.subr.bf16.mxu0 0
  %434 = vmatpush2.bf16.msra.mxu0 0
  %435 = vmatprep.mubr.bf16.mxu0 0
  %436 = vmatmul.mubr.bf16.gmra.mxu0 %v227
  %v437 = vpop.f32.mrf.mxu0
  %v438 = vadd.f32 0.0, %v437
  %v439 = vpop.f32.mrf.mxu0
  %v440 = vadd.f32 0.0, %v439
  %v441 = vpop.f32.mrf.mxu0
  %v442 = vadd.f32 0.0, %v441
  %v443 = vpop.f32.mrf.mxu0
  %v444 = vadd.f32 0.0, %v443
  %445 = vmatprep.mubr.bf16.mxu0 0
  %446 = vmatmul.mubr.bf16.gmra.mxu0 %v228
  %v447 = vpop.f32.mrf.mxu0
  %v448 = vadd.f32 0.0, %v447
  %v449 = vpop.f32.mrf.mxu0
  %v450 = vadd.f32 0.0, %v449
  %v451 = vpop.f32.mrf.mxu0
  %v452 = vadd.f32 0.0, %v451
  %v453 = vpop.f32.mrf.mxu0
  %v454 = vadd.f32 0.0, %v453
  %455 = vmatprep.mubr.bf16.mxu0 0
  %456 = vmatmul.mubr.bf16.gmra.mxu0 %v229
  %v457 = vpop.f32.mrf.mxu0
  %v458 = vadd.f32 0.0, %v457
  %v459 = vpop.f32.mrf.mxu0
  %v460 = vadd.f32 0.0, %v459
  %v461 = vpop.f32.mrf.mxu0
  %v462 = vadd.f32 0.0, %v461
  %v463 = vpop.f32.mrf.mxu0
  %v464 = vadd.f32 0.0, %v463
  %465 = vmatprep.mubr.bf16.mxu0 0
  %466 = vmatmul.mubr.bf16.gmra.mxu0 %v230
  %v467 = vpop.f32.mrf.mxu0
  %v468 = vadd.f32 0.0, %v467
  %v469 = vpop.f32.mrf.mxu0
  %v470 = vadd.f32 0.0, %v469
  %v471 = vpop.f32.mrf.mxu0
  %v472 = vadd.f32 0.0, %v471
  %v473 = vpop.f32.mrf.mxu0
  %v474 = vadd.f32 0.0, %v473
  %475 = vmatprep.mubr.bf16.mxu0 0
  %476 = vmatmul.mubr.bf16.gmra.mxu0 %v231
  %v477 = vpop.f32.mrf.mxu0
  %v478 = vadd.f32 0.0, %v477
  %v479 = vpop.f32.mrf.mxu0
  %v480 = vadd.f32 0.0, %v479
  %v481 = vpop.f32.mrf.mxu0
  %v482 = vadd.f32 0.0, %v481
  %v483 = vpop.f32.mrf.mxu0
  %v484 = vadd.f32 0.0, %v483
  %485 = vmatprep.mubr.bf16.mxu0 0
  %486 = vmatmul.mubr.bf16.gmra.mxu0 %v232
  %v487 = vpop.f32.mrf.mxu0
  %v488 = vadd.f32 0.0, %v487
  %v489 = vpop.f32.mrf.mxu0
  %v490 = vadd.f32 0.0, %v489
  %v491 = vpop.f32.mrf.mxu0
  %v492 = vadd.f32 0.0, %v491
  %v493 = vpop.f32.mrf.mxu0
  %v494 = vadd.f32 0.0, %v493
  %495 = vmatprep.mubr.bf16.mxu0 0
  %496 = vmatmul.mubr.bf16.gmra.mxu0 %v233
  %v497 = vpop.f32.mrf.mxu0
  %v498 = vadd.f32 0.0, %v497
  %v499 = vpop.f32.mrf.mxu0
  %v500 = vadd.f32 0.0, %v499
  %v501 = vpop.f32.mrf.mxu0
  %v502 = vadd.f32 0.0, %v501
  %v503 = vpop.f32.mrf.mxu0
  %v504 = vadd.f32 0.0, %v503
  %505 = vmatprep.mubr.bf16.mxu0 0
  %506 = vmatmul.mubr.bf16.gmra.mxu0 %v234
  %v507 = vpop.f32.mrf.mxu0
  %v508 = vadd.f32 0.0, %v507
  %v509 = vpop.f32.mrf.mxu0
  %v510 = vadd.f32 0.0, %v509
  %v511 = vpop.f32.mrf.mxu0
  %v512 = vadd.f32 0.0, %v511
  %v513 = vpop.f32.mrf.mxu0
  %v514 = vadd.f32 0.0, %v513
  %515 = vdwg.mxu0
  %516 = vmatprep.subr.bf16.mxu0 %v370
  %517 = vmatpush1.bf16.msra.mxu0 %v369
  %518 = vmatprep.subr.bf16.mxu0 %v366
  %519 = vmatpush1.bf16.msra.mxu0 %v365
  %520 = vmatprep.subr.bf16.mxu0 %v362
  %521 = vmatpush1.bf16.msra.mxu0 %v361
  %522 = vmatprep.subr.bf16.mxu0 %v358
  %523 = vmatpush1.bf16.msra.mxu0 %v357
  %524 = vmatprep.subr.bf16.mxu0 %v354
  %525 = vmatpush1.bf16.msra.mxu0 %v353
  %526 = vmatprep.subr.bf16.mxu0 %v350
  %527 = vmatpush1.bf16.msra.mxu0 %v349
  %528 = vmatprep.subr.bf16.mxu0 %v346
  %529 = vmatpush1.bf16.msra.mxu0 %v345
  %530 = vmatprep.subr.bf16.mxu0 %v342
  %531 = vmatpush1.bf16.msra.mxu0 %v341
  %532 = vmatprep.subr.bf16.mxu0 0
  %533 = vmatpush2.bf16.msra.mxu0 0
  %534 = vmatprep.subr.bf16.mxu0 0
  %535 = vmatpush2.bf16.msra.mxu0 0
  %536 = vmatprep.subr.bf16.mxu0 0
  %537 = vmatpush2.bf16.msra.mxu0 0
  %538 = vmatprep.subr.bf16.mxu0 0
  %539 = vmatpush2.bf16.msra.mxu0 0
  %540 = vmatprep.subr.bf16.mxu0 0
  %541 = vmatpush2.bf16.msra.mxu0 0
  %542 = vmatprep.subr.bf16.mxu0 0
  %543 = vmatpush2.bf16.msra.mxu0 0
  %544 = vmatprep.subr.bf16.mxu0 0
  %545 = vmatpush2.bf16.msra.mxu0 0
  %546 = vmatprep.subr.bf16.mxu0 0
  %547 = vmatpush2.bf16.msra.mxu0 0
  %548 = vmatprep.mubr.bf16.mxu0 0
  %549 = vmatmul.mubr.bf16.gmra.mxu0 %v227
  %v550 = vpop.f32.mrf.mxu0
  %v551 = vadd.f32 0.0, %v550
  %v552 = vpop.f32.mrf.mxu0
  %v553 = vadd.f32 0.0, %v552
  %v554 = vpop.f32.mrf.mxu0
  %v555 = vadd.f32 0.0, %v554
  %v556 = vpop.f32.mrf.mxu0
  %v557 = vadd.f32 0.0, %v556
  %558 = vmatprep.mubr.bf16.mxu0 0
  %559 = vmatmul.mubr.bf16.gmra.mxu0 %v228
  %v560 = vpop.f32.mrf.mxu0
  %v561 = vadd.f32 0.0, %v560
  %v562 = vpop.f32.mrf.mxu0
  %v563 = vadd.f32 0.0, %v562
  %v564 = vpop.f32.mrf.mxu0
  %v565 = vadd.f32 0.0, %v564
  %v566 = vpop.f32.mrf.mxu0
  %v567 = vadd.f32 0.0, %v566
  %568 = vmatprep.mubr.bf16.mxu0 0
  %569 = vmatmul.mubr.bf16.gmra.mxu0 %v229
  %v570 = vpop.f32.mrf.mxu0
  %v571 = vadd.f32 0.0, %v570
  %v572 = vpop.f32.mrf.mxu0
  %v573 = vadd.f32 0.0, %v572
  %v574 = vpop.f32.mrf.mxu0
  %v575 = vadd.f32 0.0, %v574
  %v576 = vpop.f32.mrf.mxu0
  %v577 = vadd.f32 0.0, %v576
  %578 = vmatprep.mubr.bf16.mxu0 0
  %579 = vmatmul.mubr.bf16.gmra.mxu0 %v230
  %v580 = vpop.f32.mrf.mxu0
  %v581 = vadd.f32 0.0, %v580
  %v582 = vpop.f32.mrf.mxu0
  %v583 = vadd.f32 0.0, %v582
  %v584 = vpop.f32.mrf.mxu0
  %v585 = vadd.f32 0.0, %v584
  %v586 = vpop.f32.mrf.mxu0
  %v587 = vadd.f32 0.0, %v586
  %588 = vmatprep.mubr.bf16.mxu0 0
  %589 = vmatmul.mubr.bf16.gmra.mxu0 %v231
  %v590 = vpop.f32.mrf.mxu0
  %v591 = vadd.f32 0.0, %v590
  %v592 = vpop.f32.mrf.mxu0
  %v593 = vadd.f32 0.0, %v592
  %v594 = vpop.f32.mrf.mxu0
  %v595 = vadd.f32 0.0, %v594
  %v596 = vpop.f32.mrf.mxu0
  %v597 = vadd.f32 0.0, %v596
  %598 = vmatprep.mubr.bf16.mxu0 0
  %599 = vmatmul.mubr.bf16.gmra.mxu0 %v232
  %v600 = vpop.f32.mrf.mxu0
  %v601 = vadd.f32 0.0, %v600
  %v602 = vpop.f32.mrf.mxu0
  %v603 = vadd.f32 0.0, %v602
  %v604 = vpop.f32.mrf.mxu0
  %v605 = vadd.f32 0.0, %v604
  %v606 = vpop.f32.mrf.mxu0
  %v607 = vadd.f32 0.0, %v606
  %608 = vmatprep.mubr.bf16.mxu0 0
  %609 = vmatmul.mubr.bf16.gmra.mxu0 %v233
  %v610 = vpop.f32.mrf.mxu0
  %v611 = vadd.f32 0.0, %v610
  %v612 = vpop.f32.mrf.mxu0
  %v613 = vadd.f32 0.0, %v612
  %v614 = vpop.f32.mrf.mxu0
  %v615 = vadd.f32 0.0, %v614
  %v616 = vpop.f32.mrf.mxu0
  %v617 = vadd.f32 0.0, %v616
  %618 = vmatprep.mubr.bf16.mxu0 0
  %619 = vmatmul.mubr.bf16.gmra.mxu0 %v234
  %v620 = vpop.f32.mrf.mxu0
  %v621 = vadd.f32 0.0, %v620
  %v622 = vpop.f32.mrf.mxu0
  %v623 = vadd.f32 0.0, %v622
  %v624 = vpop.f32.mrf.mxu0
  %v625 = vadd.f32 0.0, %v624
  %v626 = vpop.f32.mrf.mxu0
  %v627 = vadd.f32 0.0, %v626
  %628 = vdwg.mxu0
  %v629 = vadd.f32 %v83, %v438
  %v630 = vadd.f32 %v84, %v440
  %v631 = vadd.f32 %v85, %v551
  %v632 = vadd.f32 %v86, %v553
  %v633 = vadd.f32 %v87, %v442
  %v634 = vadd.f32 %v88, %v444
  %v635 = vadd.f32 %v89, %v555
  %v636 = vadd.f32 %v90, %v557
  %v637 = vadd.f32 %v91, %v448
  %v638 = vadd.f32 %v92, %v450
  %v639 = vadd.f32 %v93, %v561
  %v640 = vadd.f32 %v94, %v563
  %v641 = vadd.f32 %v95, %v452
  %v642 = vadd.f32 %v96, %v454
  %v643 = vadd.f32 %v97, %v565
  %v644 = vadd.f32 %v98, %v567
  %v645 = vadd.f32 %v99, %v458
  %v646 = vadd.f32 %v100, %v460
  %v647 = vadd.f32 %v101, %v571
  %v648 = vadd.f32 %v102, %v573
  %v649 = vadd.f32 %v103, %v462
  %v650 = vadd.f32 %v104, %v464
  %v651 = vadd.f32 %v105, %v575
  %v652 = vadd.f32 %v106, %v577
  %v653 = vadd.f32 %v107, %v468
  %v654 = vadd.f32 %v108, %v470
  %v655 = vadd.f32 %v109, %v581
  %v656 = vadd.f32 %v110, %v583
  %v657 = vadd.f32 %v111, %v472
  %v658 = vadd.f32 %v112, %v474
  %v659 = vadd.f32 %v113, %v585
  %v660 = vadd.f32 %v114, %v587
  %v661 = vadd.f32 %v115, %v478
  %v662 = vadd.f32 %v116, %v480
  %v663 = vadd.f32 %v117, %v591
  %v664 = vadd.f32 %v118, %v593
  %v665 = vadd.f32 %v119, %v482
  %v666 = vadd.f32 %v120, %v484
  %v667 = vadd.f32 %v121, %v595
  %v668 = vadd.f32 %v122, %v597
  %v669 = vadd.f32 %v123, %v488
  %v670 = vadd.f32 %v124, %v490
  %v671 = vadd.f32 %v125, %v601
  %v672 = vadd.f32 %v126, %v603
  %v673 = vadd.f32 %v127, %v492
  %v674 = vadd.f32 %v128, %v494
  %v675 = vadd.f32 %v129, %v605
  %v676 = vadd.f32 %v130, %v607
  %v677 = vadd.f32 %v131, %v498
  %v678 = vadd.f32 %v132, %v500
  %v679 = vadd.f32 %v133, %v611
  %v680 = vadd.f32 %v134, %v613
  %v681 = vadd.f32 %v135, %v502
  %v682 = vadd.f32 %v136, %v504
  %v683 = vadd.f32 %v137, %v615
  %v684 = vadd.f32 %v138, %v617
  %v685 = vadd.f32 %v139, %v508
  %v686 = vadd.f32 %v140, %v510
  %v687 = vadd.f32 %v141, %v621
  %v688 = vadd.f32 %v142, %v623
  %v689 = vadd.f32 %v143, %v512
  %v690 = vadd.f32 %v144, %v514
  %v691 = vadd.f32 %v145, %v625
  %v692 = vadd.f32 %v146, %v627
  %693 = vst [vmem:[#allocation2] sm:$0xff] %v629
  %694 = vst [vmem:[#allocation2 + $0x8] sm:$0xff] %v630
  %695 = vst [vmem:[#allocation2 + $0x10] sm:$0xff] %v631
  %696 = vst [vmem:[#allocation2 + $0x18] sm:$0xff] %v632
  %697 = vst [vmem:[#allocation2 + $0x20] sm:$0xff] %v633
  %698 = vst [vmem:[#allocation2 + $0x28] sm:$0xff] %v634
  %699 = vst [vmem:[#allocation2 + $0x30] sm:$0xff] %v635
  %700 = vst [vmem:[#allocation2 + $0x38] sm:$0xff] %v636
  %701 = vst [vmem:[#allocation2 + $0x40] sm:$0xff] %v637
  %702 = vst [vmem:[#allocation2 + $0x48] sm:$0xff] %v638
  %703 = vst [vmem:[#allocation2 + $0x50] sm:$0xff] %v639
  %704 = vst [vmem:[#allocation2 + $0x58] sm:$0xff] %v640
  %705 = vst [vmem:[#allocation2 + $0x60] sm:$0xff] %v641
  %706 = vst [vmem:[#allocation2 + $0x68] sm:$0xff] %v642
  %707 = vst [vmem:[#allocation2 + $0x70] sm:$0xff] %v643
  %708 = vst [vmem:[#allocation2 + $0x78] sm:$0xff] %v644
  %709 = vst [vmem:[#allocation2 + $0x80] sm:$0xff] %v645
  %710 = vst [vmem:[#allocation2 + $0x88] sm:$0xff] %v646
  %711 = vst [vmem:[#allocation2 + $0x90] sm:$0xff] %v647
  %712 = vst [vmem:[#allocation2 + $0x98] sm:$0xff] %v648
  %713 = vst [vmem:[#allocation2 + $0xa0] sm:$0xff] %v649
  %714 = vst [vmem:[#allocation2 + $0xa8] sm:$0xff] %v650
  %715 = vst [vmem:[#allocation2 + $0xb0] sm:$0xff] %v651
  %716 = vst [vmem:[#allocation2 + $0xb8] sm:$0xff] %v652
  %717 = vst [vmem:[#allocation2 + $0xc0] sm:$0xff] %v653
  %718 = vst [vmem:[#allocation2 + $0xc8] sm:$0xff] %v654
  %719 = vst [vmem:[#allocation2 + $0xd0] sm:$0xff] %v655
  %720 = vst [vmem:[#allocation2 + $0xd8] sm:$0xff] %v656
  %721 = vst [vmem:[#allocation2 + $0xe0] sm:$0xff] %v657
  %722 = vst [vmem:[#allocation2 + $0xe8] sm:$0xff] %v658
  %723 = vst [vmem:[#allocation2 + $0xf0] sm:$0xff] %v659
  %724 = vst [vmem:[#allocation2 + $0xf8] sm:$0xff] %v660
  %725 = vst [vmem:[#allocation2 + $0x100] sm:$0xff] %v661
  %726 = vst [vmem:[#allocation2 + $0x108] sm:$0xff] %v662
  %727 = vst [vmem:[#allocation2 + $0x110] sm:$0xff] %v663
  %728 = vst [vmem:[#allocation2 + $0x118] sm:$0xff] %v664
  %729 = vst [vmem:[#allocation2 + $0x120] sm:$0xff] %v665
  %730 = vst [vmem:[#allocation2 + $0x128] sm:$0xff] %v666
  %731 = vst [vmem:[#allocation2 + $0x130] sm:$0xff] %v667
  %732 = vst [vmem:[#allocation2 + $0x138] sm:$0xff] %v668
  %733 = vst [vmem:[#allocation2 + $0x140] sm:$0xff] %v669
  %734 = vst [vmem:[#allocation2 + $0x148] sm:$0xff] %v670
  %735 = vst [vmem:[#allocation2 + $0x150] sm:$0xff] %v671
  %736 = vst [vmem:[#allocation2 + $0x158] sm:$0xff] %v672
  %737 = vst [vmem:[#allocation2 + $0x160] sm:$0xff] %v673
  %738 = vst [vmem:[#allocation2 + $0x168] sm:$0xff] %v674
  %739 = vst [vmem:[#allocation2 + $0x170] sm:$0xff] %v675
  %740 = vst [vmem:[#allocation2 + $0x178] sm:$0xff] %v676
  %741 = vst [vmem:[#allocation2 + $0x180] sm:$0xff] %v677
  %742 = vst [vmem:[#allocation2 + $0x188] sm:$0xff] %v678
  %743 = vst [vmem:[#allocation2 + $0x190] sm:$0xff] %v679
  %744 = vst [vmem:[#allocation2 + $0x198] sm:$0xff] %v680
  %745 = vst [vmem:[#allocation2 + $0x1a0] sm:$0xff] %v681
  %746 = vst [vmem:[#allocation2 + $0x1a8] sm:$0xff] %v682
  %747 = vst [vmem:[#allocation2 + $0x1b0] sm:$0xff] %v683
  %748 = vst [vmem:[#allocation2 + $0x1b8] sm:$0xff] %v684
  %749 = vst [vmem:[#allocation2 + $0x1c0] sm:$0xff] %v685
  %750 = vst [vmem:[#allocation2 + $0x1c8] sm:$0xff] %v686
  %751 = vst [vmem:[#allocation2 + $0x1d0] sm:$0xff] %v687
  %752 = vst [vmem:[#allocation2 + $0x1d8] sm:$0xff] %v688
  %753 = vst [vmem:[#allocation2 + $0x1e0] sm:$0xff] %v689
  %754 = vst [vmem:[#allocation2 + $0x1e8] sm:$0xff] %v690
  %755 = vst [vmem:[#allocation2 + $0x1f0] sm:$0xff] %v691
  %756 = vst [vmem:[#allocation2 + $0x1f8] sm:$0xff] %v692
  // Predicated region
  $region18: #{forward.5} parent=0 // pred_check
    %p757 = pneg %p15
  $region19: #{forward.5} parent=0 // pred_check_branch
    %759 = sbr.rel (%p757) target = $region21
  $region20: #{forward.5} parent=0 // pred_region
    %v760 = vld [vmem:[#allocation2] sm:$0xff]
    %v761 = vld [vmem:[#allocation2 + $0x8] sm:$0xff]
    %v762 = vld [vmem:[#allocation2 + $0x10] sm:$0xff]
    %v763 = vld [vmem:[#allocation2 + $0x18] sm:$0xff]
    %v764 = vld [vmem:[#allocation2 + $0x20] sm:$0xff]
    %v765 = vld [vmem:[#allocation2 + $0x28] sm:$0xff]
    %v766 = vld [vmem:[#allocation2 + $0x30] sm:$0xff]
    %v767 = vld [vmem:[#allocation2 + $0x38] sm:$0xff]
    %v768 = vld [vmem:[#allocation2 + $0x40] sm:$0xff]
    %v769 = vld [vmem:[#allocation2 + $0x48] sm:$0xff]
    %v770 = vld [vmem:[#allocation2 + $0x50] sm:$0xff]
    %v771 = vld [vmem:[#allocation2 + $0x58] sm:$0xff]
    %v772 = vld [vmem:[#allocation2 + $0x60] sm:$0xff]
    %v773 = vld [vmem:[#allocation2 + $0x68] sm:$0xff]
    %v774 = vld [vmem:[#allocation2 + $0x70] sm:$0xff]
    %v775 = vld [vmem:[#allocation2 + $0x78] sm:$0xff]
    %v776 = vld [vmem:[#allocation2 + $0x80] sm:$0xff]
    %v777 = vld [vmem:[#allocation2 + $0x88] sm:$0xff]
    %v778 = vld [vmem:[#allocation2 + $0x90] sm:$0xff]
    %v779 = vld [vmem:[#allocation2 + $0x98] sm:$0xff]
    %v780 = vld [vmem:[#allocation2 + $0xa0] sm:$0xff]
    %v781 = vld [vmem:[#allocation2 + $0xa8] sm:$0xff]
    %v782 = vld [vmem:[#allocation2 + $0xb0] sm:$0xff]
    %v783 = vld [vmem:[#allocation2 + $0xb8] sm:$0xff]
    %v784 = vld [vmem:[#allocation2 + $0xc0] sm:$0xff]
    %v785 = vld [vmem:[#allocation2 + $0xc8] sm:$0xff]
    %v786 = vld [vmem:[#allocation2 + $0xd0] sm:$0xff]
    %v787 = vld [vmem:[#allocation2 + $0xd8] sm:$0xff]
    %v788 = vld [vmem:[#allocation2 + $0xe0] sm:$0xff]
    %v789 = vld [vmem:[#allocation2 + $0xe8] sm:$0xff]
    %v790 = vld [vmem:[#allocation2 + $0xf0] sm:$0xff]
    %v791 = vld [vmem:[#allocation2 + $0xf8] sm:$0xff]
    %v792 = vld [vmem:[#allocation2 + $0x100] sm:$0xff]
    %v793 = vld [vmem:[#allocation2 + $0x108] sm:$0xff]
    %v794 = vld [vmem:[#allocation2 + $0x110] sm:$0xff]
    %v795 = vld [vmem:[#allocation2 + $0x118] sm:$0xff]
    %v796 = vld [vmem:[#allocation2 + $0x120] sm:$0xff]
    %v797 = vld [vmem:[#allocation2 + $0x128] sm:$0xff]
    %v798 = vld [vmem:[#allocation2 + $0x130] sm:$0xff]
    %v799 = vld [vmem:[#allocation2 + $0x138] sm:$0xff]
    %v800 = vld [vmem:[#allocation2 + $0x140] sm:$0xff]
    %v801 = vld [vmem:[#allocation2 + $0x148] sm:$0xff]
    %v802 = vld [vmem:[#allocation2 + $0x150] sm:$0xff]
    %v803 = vld [vmem:[#allocation2 + $0x158] sm:$0xff]
    %v804 = vld [vmem:[#allocation2 + $0x160] sm:$0xff]
    %v805 = vld [vmem:[#allocation2 + $0x168] sm:$0xff]
    %v806 = vld [vmem:[#allocation2 + $0x170] sm:$0xff]
    %v807 = vld [vmem:[#allocation2 + $0x178] sm:$0xff]
    %v808 = vld [vmem:[#allocation2 + $0x180] sm:$0xff]
    %v809 = vld [vmem:[#allocation2 + $0x188] sm:$0xff]
    %v810 = vld [vmem:[#allocation2 + $0x190] sm:$0xff]
    %v811 = vld [vmem:[#allocation2 + $0x198] sm:$0xff]
    %v812 = vld [vmem:[#allocation2 + $0x1a0] sm:$0xff]
    %v813 = vld [vmem:[#allocation2 + $0x1a8] sm:$0xff]
    %v814 = vld [vmem:[#allocation2 + $0x1b0] sm:$0xff]
    %v815 = vld [vmem:[#allocation2 + $0x1b8] sm:$0xff]
    %v816 = vld [vmem:[#allocation2 + $0x1c0] sm:$0xff]
    %v817 = vld [vmem:[#allocation2 + $0x1c8] sm:$0xff]
    %v818 = vld [vmem:[#allocation2 + $0x1d0] sm:$0xff]
    %v819 = vld [vmem:[#allocation2 + $0x1d8] sm:$0xff]
    %v820 = vld [vmem:[#allocation2 + $0x1e0] sm:$0xff]
    %v821 = vld [vmem:[#allocation2 + $0x1e8] sm:$0xff]
    %v822 = vld [vmem:[#allocation2 + $0x1f0] sm:$0xff]
    %v823 = vld [vmem:[#allocation2 + $0x1f8] sm:$0xff]
    %v824 = vld [vmem:[%s2] sm:$0xf]
    %v826 = vlaneseq
    %v827 = vshrl.u32 %v826, 7
    %v828 = vsub.s32 0, %v827
    %v829 = vrot.slane %v824, %v828
    %v830 = vlaneseq
    %v831 = vshrl.u32 %v830, 7
    %v832 = vsub.s32 1, %v831
    %v833 = vrot.slane %v824, %v832
    %v834 = vlaneseq
    %v835 = vshrl.u32 %v834, 7
    %v836 = vsub.s32 2, %v835
    %v837 = vrot.slane %v824, %v836
    %v838 = vlaneseq
    %v839 = vshrl.u32 %v838, 7
    %v840 = vsub.s32 3, %v839
    %v841 = vrot.slane %v824, %v840
    %v846 = vadd.f32 %v760, %v829
    %v847 = vadd.f32 %v761, %v833
    %v848 = vadd.f32 %v762, %v837
    %v849 = vadd.f32 %v763, %v841
    %v850 = vadd.f32 %v764, %v829
    %v851 = vadd.f32 %v765, %v833
    %v852 = vadd.f32 %v766, %v837
    %v853 = vadd.f32 %v767, %v841
    %v854 = vadd.f32 %v768, %v829
    %v855 = vadd.f32 %v769, %v833
    %v856 = vadd.f32 %v770, %v837
    %v857 = vadd.f32 %v771, %v841
    %v858 = vadd.f32 %v772, %v829
    %v859 = vadd.f32 %v773, %v833
    %v860 = vadd.f32 %v774, %v837
    %v861 = vadd.f32 %v775, %v841
    %v862 = vadd.f32 %v776, %v829
    %v863 = vadd.f32 %v777, %v833
    %v864 = vadd.f32 %v778, %v837
    %v865 = vadd.f32 %v779, %v841
    %v866 = vadd.f32 %v780, %v829
    %v867 = vadd.f32 %v781, %v833
    %v868 = vadd.f32 %v782, %v837
    %v869 = vadd.f32 %v783, %v841
    %v870 = vadd.f32 %v784, %v829
    %v871 = vadd.f32 %v785, %v833
    %v872 = vadd.f32 %v786, %v837
    %v873 = vadd.f32 %v787, %v841
    %v874 = vadd.f32 %v788, %v829
    %v875 = vadd.f32 %v789, %v833
    %v876 = vadd.f32 %v790, %v837
    %v877 = vadd.f32 %v791, %v841
    %v878 = vadd.f32 %v792, %v829
    %v879 = vadd.f32 %v793, %v833
    %v880 = vadd.f32 %v794, %v837
    %v881 = vadd.f32 %v795, %v841
    %v882 = vadd.f32 %v796, %v829
    %v883 = vadd.f32 %v797, %v833
    %v884 = vadd.f32 %v798, %v837
    %v885 = vadd.f32 %v799, %v841
    %v886 = vadd.f32 %v800, %v829
    %v887 = vadd.f32 %v801, %v833
    %v888 = vadd.f32 %v802, %v837
    %v889 = vadd.f32 %v803, %v841
    %v890 = vadd.f32 %v804, %v829
    %v891 = vadd.f32 %v805, %v833
    %v892 = vadd.f32 %v806, %v837
    %v893 = vadd.f32 %v807, %v841
    %v894 = vadd.f32 %v808, %v829
    %v895 = vadd.f32 %v809, %v833
    %v896 = vadd.f32 %v810, %v837
    %v897 = vadd.f32 %v811, %v841
    %v898 = vadd.f32 %v812, %v829
    %v899 = vadd.f32 %v813, %v833
    %v900 = vadd.f32 %v814, %v837
    %v901 = vadd.f32 %v815, %v841
    %v902 = vadd.f32 %v816, %v829
    %v903 = vadd.f32 %v817, %v833
    %v904 = vadd.f32 %v818, %v837
    %v905 = vadd.f32 %v819, %v841
    %v906 = vadd.f32 %v820, %v829
    %v907 = vadd.f32 %v821, %v833
    %v908 = vadd.f32 %v822, %v837
    %v909 = vadd.f32 %v823, %v841
    %910 = vst [vmem:[%s3] sm:$0xff] %v846
    %911 = vst [vmem:[%s3 + $0x8] sm:$0xff] %v847
    %912 = vst [vmem:[%s3 + $0x10] sm:$0xff] %v848
    %913 = vst [vmem:[%s3 + $0x18] sm:$0xff] %v849
    %914 = vst [vmem:[%s3 + $0x20] sm:$0xff] %v850
    %915 = vst [vmem:[%s3 + $0x28] sm:$0xff] %v851
    %916 = vst [vmem:[%s3 + $0x30] sm:$0xff] %v852
    %917 = vst [vmem:[%s3 + $0x38] sm:$0xff] %v853
    %918 = vst [vmem:[%s3 + $0x40] sm:$0xff] %v854
    %919 = vst [vmem:[%s3 + $0x48] sm:$0xff] %v855
    %920 = vst [vmem:[%s3 + $0x50] sm:$0xff] %v856
    %921 = vst [vmem:[%s3 + $0x58] sm:$0xff] %v857
    %922 = vst [vmem:[%s3 + $0x60] sm:$0xff] %v858
    %923 = vst [vmem:[%s3 + $0x68] sm:$0xff] %v859
    %924 = vst [vmem:[%s3 + $0x70] sm:$0xff] %v860
    %925 = vst [vmem:[%s3 + $0x78] sm:$0xff] %v861
    %926 = vst [vmem:[%s3 + $0x80] sm:$0xff] %v862
    %927 = vst [vmem:[%s3 + $0x88] sm:$0xff] %v863
    %928 = vst [vmem:[%s3 + $0x90] sm:$0xff] %v864
    %929 = vst [vmem:[%s3 + $0x98] sm:$0xff] %v865
    %930 = vst [vmem:[%s3 + $0xa0] sm:$0xff] %v866
    %931 = vst [vmem:[%s3 + $0xa8] sm:$0xff] %v867
    %932 = vst [vmem:[%s3 + $0xb0] sm:$0xff] %v868
    %933 = vst [vmem:[%s3 + $0xb8] sm:$0xff] %v869
    %934 = vst [vmem:[%s3 + $0xc0] sm:$0xff] %v870
    %935 = vst [vmem:[%s3 + $0xc8] sm:$0xff] %v871
    %936 = vst [vmem:[%s3 + $0xd0] sm:$0xff] %v872
    %937 = vst [vmem:[%s3 + $0xd8] sm:$0xff] %v873
    %938 = vst [vmem:[%s3 + $0xe0] sm:$0xff] %v874
    %939 = vst [vmem:[%s3 + $0xe8] sm:$0xff] %v875
    %940 = vst [vmem:[%s3 + $0xf0] sm:$0xff] %v876
    %941 = vst [vmem:[%s3 + $0xf8] sm:$0xff] %v877
    %942 = vst [vmem:[%s3 + $0x100] sm:$0xff] %v878
    %943 = vst [vmem:[%s3 + $0x108] sm:$0xff] %v879
    %944 = vst [vmem:[%s3 + $0x110] sm:$0xff] %v880
    %945 = vst [vmem:[%s3 + $0x118] sm:$0xff] %v881
    %946 = vst [vmem:[%s3 + $0x120] sm:$0xff] %v882
    %947 = vst [vmem:[%s3 + $0x128] sm:$0xff] %v883
    %948 = vst [vmem:[%s3 + $0x130] sm:$0xff] %v884
    %949 = vst [vmem:[%s3 + $0x138] sm:$0xff] %v885
    %950 = vst [vmem:[%s3 + $0x140] sm:$0xff] %v886
    %951 = vst [vmem:[%s3 + $0x148] sm:$0xff] %v887
    %952 = vst [vmem:[%s3 + $0x150] sm:$0xff] %v888
    %953 = vst [vmem:[%s3 + $0x158] sm:$0xff] %v889
    %954 = vst [vmem:[%s3 + $0x160] sm:$0xff] %v890
    %955 = vst [vmem:[%s3 + $0x168] sm:$0xff] %v891
    %956 = vst [vmem:[%s3 + $0x170] sm:$0xff] %v892
    %957 = vst [vmem:[%s3 + $0x178] sm:$0xff] %v893
    %958 = vst [vmem:[%s3 + $0x180] sm:$0xff] %v894
    %959 = vst [vmem:[%s3 + $0x188] sm:$0xff] %v895
    %960 = vst [vmem:[%s3 + $0x190] sm:$0xff] %v896
    %961 = vst [vmem:[%s3 + $0x198] sm:$0xff] %v897
    %962 = vst [vmem:[%s3 + $0x1a0] sm:$0xff] %v898
    %963 = vst [vmem:[%s3 + $0x1a8] sm:$0xff] %v899
    %964 = vst [vmem:[%s3 + $0x1b0] sm:$0xff] %v900
    %965 = vst [vmem:[%s3 + $0x1b8] sm:$0xff] %v901
    %966 = vst [vmem:[%s3 + $0x1c0] sm:$0xff] %v902
    %967 = vst [vmem:[%s3 + $0x1c8] sm:$0xff] %v903
    %968 = vst [vmem:[%s3 + $0x1d0] sm:$0xff] %v904
    %969 = vst [vmem:[%s3 + $0x1d8] sm:$0xff] %v905
    %970 = vst [vmem:[%s3 + $0x1e0] sm:$0xff] %v906
    %971 = vst [vmem:[%s3 + $0x1e8] sm:$0xff] %v907
    %972 = vst [vmem:[%s3 + $0x1f0] sm:$0xff] %v908
    %973 = vst [vmem:[%s3 + $0x1f8] sm:$0xff] %v909
  $region21: #{forward.5} parent=0 // pred_fallthru
    _
  // Predicated region
  $region22: #{forward.5} parent=0 // pred_check
    _
  $region23: #{forward.5} parent=0 // pred_check_branch
    %975 = sbr.rel (0) target = $region25
  $region24: #{forward.5} parent=0 // pred_region
    _
  $region25: #{forward.5} parent=0 // pred_fallthru
    _
  // Predicated region
  $region26: #{forward.5} parent=0 // pred_check
    _
  $region27: #{forward.5} parent=0 // pred_check_branch
    %977 = sbr.rel (0) target = $region29
  $region28: #{forward.5} parent=0 // pred_region
    _
  $region29: #{forward.5} parent=0 // pred_fallthru
    _

// kernel: forward.6
$region0: #{forward.6}
  #allocation0 [shape = 'u32[]', space=smem, size = 0x4, offset = 0x4, fixed_abs, tag = 'smem constant byte address 0x4 - core index']
  #allocation1 [shape = 'u32[144,128]{1,0:T(1,128)}', space=vmem, size = 0x12000, scoped, tag = 'internal scratch']
  #allocation2 [shape = 'f32[8,128]{1,0:T(8,128)}', space=vmem, size = 0x1000, scoped, tag = 'scratch operand']
  #allocation3 [shape = 'f32[8,128]{1,0:T(8,128)}', space=vmem, size = 0x1000, scoped, tag = 'scratch operand']
  %s0 = inlined_call_operand.vmem [shape: f32[16,8,512], index: 0, kind: input, shape index: {}]
  %s1 = inlined_call_operand.vmem [shape: bf16[128,512], index: 1, kind: input, shape index: {}]
  %s2 = inlined_call_operand.vmem [shape: f32[8,128], index: 2, kind: input, shape index: {}]
  %s3 = inlined_call_operand.vmem [shape: f32[8,128], index: 3, kind: input, shape index: {}]
  %s4 = inlined_call_operand.vmem [shape: bf16[16,8,128], index: 4, kind: output, shape index: {0}]
  %s5 = inlined_call_operand.vmem [shape: f32[8,128], index: 5, kind: output, shape index: {1}]
  %s6 = inlined_call_operand.vmem [shape: f32[8,128], index: 6, kind: output, shape index: {2}]
  %7 = xla_tuple %s4, %s5, %s6
  %s8 = sld [smem:[#allocation0]]
  $region73: #{forward.6} parent=0
    _
  %s10 = ssub.s32 1, %s8
  %s11 = scalar_select 0, %s10, %s8
  loop: start=0, step=1, limit=4
  $region2: #{forward.6} parent=0 // loop_pre_header
    _
  $region3: #{forward.6} parent=0 // loop_header
    %s13 = sphi 0, %s17
    %p14 = scmp.ge.s32.totalorder %s13, 4
    %s20 = sphi 0, %s32
    %s21 = sphi 0, %s28
    %s22 = sphi 0, %s20
    %s23 = sphi 0, %s21
    %s24 = sphi 0, %s22
    %s25 = sphi 0, %s23
    %s37 = sphi 0, %s39
    %s40 = sphi 0, %s37
    %s41 = sphi 0, %s40
    %s57 = sphi 0, %s41
    %s61 = sphi 0, %s61
    %s63 = sphi 0, %s61
    %s64 = sphi 0, %s63
    %s78 = sphi 0, %s64
    %s84 = sphi 0, %s86
    %s87 = sphi 0, %s84
    %s88 = sphi 0, %s87
    %s104 = sphi 0, %s88
    %s110 = sphi 0, %s112
    %s113 = sphi 0, %s110
    %s114 = sphi 0, %s113
    %s130 = sphi 0, %s114
    %s138 = sphi 0, %s140
    %s141 = sphi 0, %s138
    %s142 = sphi 0, %s141
    %s158 = sphi 0, %s142
    %s164 = sphi 0, %s166
    %s167 = sphi 0, %s164
    %s168 = sphi 0, %s167
    %s184 = sphi 0, %s168
    %s190 = sphi 0, %s192
    %s193 = sphi 0, %s190
    %s194 = sphi 0, %s193
    %s210 = sphi 0, %s194
  $region4: #{forward.6} parent=0 // loop_header_branch
    %16 = sbr.rel (%p14) target = $region8
  $region5: #{forward.6} parent=0 // loop_body
    %s18 = ssub.s32 %s13, 1
    %s19 = ssub.s32 %s13, 2
    %s26 = sadd.s32 1, %s21
    %p27 = scmp.ge.s32.totalorder %s26, 2
    %s28 = scalar_select %p27, 0, %s26
    %s29 = sadd.s32 1, %s20
    %s30 = scalar_select %p27, %s29, %s20
    %p31 = scmp.ge.s32.totalorder %s30, 1
    %s32 = scalar_select %p31, 0, %s30
    %s33 = ssub.s32 %s21, %s28
    %s34 = ssub.s32 %s20, %s32
    %s35 = sor.u32 %s33, %s34
    %p36 = scmp.eq.s32.totalorder %s35, 0
    %s38 = sadd.s32 %s37, 1
    %s39 = scalar_select %p36, %s37, %s38
    %p42 = pneg %p36
    %p43 = scmp.eq.s32.totalorder %s13, 1
    %p44 = por %p42, %p43
    %p45 = scmp.ne.s32.totalorder %s37, %s40
    %p46 = scmp.eq.s32.totalorder %s13, 0
    %p47 = por %p45, %p46
    %p48 = scmp.ne.s32.totalorder %s37, %s40
    %p49 = scmp.eq.s32.totalorder %s18, 1
    %p50 = por %p48, %p49
    %p51 = scmp.ne.s32.totalorder %s40, %s41
    %p52 = scmp.eq.s32.totalorder %s18, 0
    %p53 = por %p51, %p52
    %p54 = scmp.ne.s32.totalorder %s40, %s41
    %p55 = scmp.eq.s32.totalorder %s19, 1
    %p56 = por %p54, %p55
    %p58 = scmp.ne.s32.totalorder %s41, %s57
    %p59 = scmp.eq.s32.totalorder %s19, 0
    %p60 = por %p58, %p59
    %s62 = sadd.s32 %s61, 1
    %p65 = scmp.eq.s32.totalorder %s13, 1
    %p66 = scmp.ne.s32.totalorder %s61, %s63
    %p67 = scmp.eq.s32.totalorder %s13, 0
    %p68 = por %p66, %p67
    %p69 = scmp.ne.s32.totalorder %s61, %s63
    %p70 = scmp.eq.s32.totalorder %s18, 1
    %p71 = por %p69, %p70
    %p72 = scmp.ne.s32.totalorder %s63, %s64
    %p73 = scmp.eq.s32.totalorder %s18, 0
    %p74 = por %p72, %p73
    %p75 = scmp.ne.s32.totalorder %s63, %s64
    %p76 = scmp.eq.s32.totalorder %s19, 1
    %p77 = por %p75, %p76
    %p79 = scmp.ne.s32.totalorder %s64, %s78
    %p80 = scmp.eq.s32.totalorder %s19, 0
    %p81 = por %p79, %p80
    %s82 = ssub.s32 %s20, %s32
    %p83 = scmp.eq.s32.totalorder %s82, 0
    %s85 = sadd.s32 %s84, 1
    %s86 = scalar_select %p83, %s84, %s85
    %p89 = pneg %p83
    %p90 = scmp.eq.s32.totalorder %s13, 1
    %p91 = por %p89, %p90
    %p92 = scmp.ne.s32.totalorder %s84, %s87
    %p93 = scmp.eq.s32.totalorder %s13, 0
    %p94 = por %p92, %p93
    %p95 = scmp.ne.s32.totalorder %s84, %s87
    %p96 = scmp.eq.s32.totalorder %s18, 1
    %p97 = por %p95, %p96
    %p98 = scmp.ne.s32.totalorder %s87, %s88
    %p99 = scmp.eq.s32.totalorder %s18, 0
    %p100 = por %p98, %p99
    %p101 = scmp.ne.s32.totalorder %s87, %s88
    %p102 = scmp.eq.s32.totalorder %s19, 1
    %p103 = por %p101, %p102
    %p105 = scmp.ne.s32.totalorder %s88, %s104
    %p106 = scmp.eq.s32.totalorder %s19, 0
    %p107 = por %p105, %p106
    %s108 = ssub.s32 %s20, %s32
    %p109 = scmp.eq.s32.totalorder %s108, 0
    %s111 = sadd.s32 %s110, 1
    %s112 = scalar_select %p109, %s110, %s111
    %p115 = pneg %p109
    %p116 = scmp.eq.s32.totalorder %s13, 1
    %p117 = por %p115, %p116
    %p118 = scmp.ne.s32.totalorder %s110, %s113
    %p119 = scmp.eq.s32.totalorder %s13, 0
    %p120 = por %p118, %p119
    %p121 = scmp.ne.s32.totalorder %s110, %s113
    %p122 = scmp.eq.s32.totalorder %s18, 1
    %p123 = por %p121, %p122
    %p124 = scmp.ne.s32.totalorder %s113, %s114
    %p125 = scmp.eq.s32.totalorder %s18, 0
    %p126 = por %p124, %p125
    %p127 = scmp.ne.s32.totalorder %s113, %s114
    %p128 = scmp.eq.s32.totalorder %s19, 1
    %p129 = por %p127, %p128
    %p131 = scmp.ne.s32.totalorder %s114, %s130
    %p132 = scmp.eq.s32.totalorder %s19, 0
    %p133 = por %p131, %p132
    %s134 = ssub.s32 %s21, %s28
    %s135 = ssub.s32 %s20, %s32
    %s136 = sor.u32 %s134, %s135
    %p137 = scmp.eq.s32.totalorder %s136, 0
    %s139 = sadd.s32 %s138, 1
    %s140 = scalar_select %p137, %s138, %s139
    %p143 = pneg %p137
    %p144 = scmp.eq.s32.totalorder %s13, 1
    %p145 = por %p143, %p144
    %p146 = scmp.ne.s32.totalorder %s138, %s141
    %p147 = scmp.eq.s32.totalorder %s13, 0
    %p148 = por %p146, %p147
    %p149 = scmp.ne.s32.totalorder %s138, %s141
    %p150 = scmp.eq.s32.totalorder %s18, 1
    %p151 = por %p149, %p150
    %p152 = scmp.ne.s32.totalorder %s141, %s142
    %p153 = scmp.eq.s32.totalorder %s18, 0
    %p154 = por %p152, %p153
    %p155 = scmp.ne.s32.totalorder %s141, %s142
    %p156 = scmp.eq.s32.totalorder %s19, 1
    %p157 = por %p155, %p156
    %p159 = scmp.ne.s32.totalorder %s142, %s158
    %p160 = scmp.eq.s32.totalorder %s19, 0
    %p161 = por %p159, %p160
    %s162 = ssub.s32 %s20, %s32
    %p163 = scmp.eq.s32.totalorder %s162, 0
    %s165 = sadd.s32 %s164, 1
    %s166 = scalar_select %p163, %s164, %s165
    %p169 = pneg %p163
    %p170 = scmp.eq.s32.totalorder %s13, 1
    %p171 = por %p169, %p170
    %p172 = scmp.ne.s32.totalorder %s164, %s167
    %p173 = scmp.eq.s32.totalorder %s13, 0
    %p174 = por %p172, %p173
    %p175 = scmp.ne.s32.totalorder %s164, %s167
    %p176 = scmp.eq.s32.totalorder %s18, 1
    %p177 = por %p175, %p176
    %p178 = scmp.ne.s32.totalorder %s167, %s168
    %p179 = scmp.eq.s32.totalorder %s18, 0
    %p180 = por %p178, %p179
    %p181 = scmp.ne.s32.totalorder %s167, %s168
    %p182 = scmp.eq.s32.totalorder %s19, 1
    %p183 = por %p181, %p182
    %p185 = scmp.ne.s32.totalorder %s168, %s184
    %p186 = scmp.eq.s32.totalorder %s19, 0
    %p187 = por %p185, %p186
    %s188 = ssub.s32 %s20, %s32
    %p189 = scmp.eq.s32.totalorder %s188, 0
    %s191 = sadd.s32 %s190, 1
    %s192 = scalar_select %p189, %s190, %s191
    %p195 = pneg %p189
    %p196 = scmp.eq.s32.totalorder %s13, 1
    %p197 = por %p195, %p196
    %p198 = scmp.ne.s32.totalorder %s190, %s193
    %p199 = scmp.eq.s32.totalorder %s13, 0
    %p200 = por %p198, %p199
    %p201 = scmp.ne.s32.totalorder %s190, %s193
    %p202 = scmp.eq.s32.totalorder %s18, 1
    %p203 = por %p201, %p202
    %p204 = scmp.ne.s32.totalorder %s193, %s194
    %p205 = scmp.eq.s32.totalorder %s18, 0
    %p206 = por %p204, %p205
    %p207 = scmp.ne.s32.totalorder %s193, %s194
    %p208 = scmp.eq.s32.totalorder %s19, 1
    %p209 = por %p207, %p208
    %p211 = scmp.ne.s32.totalorder %s194, %s210
    %p212 = scmp.eq.s32.totalorder %s19, 0
    %p213 = por %p211, %p212
    %p214 = scmp.le.s32.totalorder 1, %s13
    %p215 = scmp.lt.s32.totalorder %s13, 3
    %p216 = pnand %p214, %p215
    %p217 = pneg %p216
    // Predicated region
    $region9: #{forward.6} parent=5 // pred_check
      _
    $region10: #{forward.6} parent=5 // pred_check_branch
      %219 = sbr.rel (%p216) target = $region12
    $region11: #{forward.6} parent=5 // pred_region
      %s220 = ssub.s32 %s13, 1
      // Predicated region
      $region13: #{forward.6} parent=11 // pred_check
        %p221 = pneg %p74
      $region14: #{forward.6} parent=11 // pred_check_branch
        %223 = sbr.rel (%p221) target = $region16
      $region15: #{forward.6} parent=11 // pred_region
        _
      $region16: #{forward.6} parent=11 // pred_fallthru
        _
      // Predicated region
      $region17: #{forward.6} parent=11 // pred_check
        %p224 = pneg %p100
      $region18: #{forward.6} parent=11 // pred_check_branch
        %226 = sbr.rel (%p224) target = $region20
      $region19: #{forward.6} parent=11 // pred_region
        %p227 = scmp.lt.s32.totalorder %s22, 0
        %s228 = scalar_select %p227, %s22, 0
        %s229 = smul.addr %s228, 8
        %s230 = scalar_lea.vmem %s2, %s229
      $region20: #{forward.6} parent=11 // pred_fallthru
        _
      // Predicated region
      $region21: #{forward.6} parent=11 // pred_check
        %p231 = pneg %p126
      $region22: #{forward.6} parent=11 // pred_check_branch
        %233 = sbr.rel (%p231) target = $region24
      $region23: #{forward.6} parent=11 // pred_region
        %p234 = scmp.lt.s32.totalorder %s22, 0
        %s235 = scalar_select %p234, %s22, 0
        %s236 = smul.addr %s235, 8
        %s237 = scalar_lea.vmem %s3, %s236
      $region24: #{forward.6} parent=11 // pred_fallthru
        _
    $region12: #{forward.6} parent=5 // pred_fallthru
      _
    %p238 = scmp.lt.s32.totalorder %s13, 2
    // Predicated region
    $region25: #{forward.6} parent=5 // pred_check
      %p239 = pneg %p238
    $region26: #{forward.6} parent=5 // pred_check_branch
      %241 = sbr.rel (%p239) target = $region28
    $region27: #{forward.6} parent=5 // pred_region
      // Predicated region
      $region29: #{forward.6} parent=27 // pred_check
        %p242 = pneg %p47
      $region30: #{forward.6} parent=27 // pred_check_branch
        %244 = sbr.rel (%p242) target = $region32
      $region31: #{forward.6} parent=27 // pred_region
        %s245 = smul.u32 8, %s21
        %p246 = scmp.lt.s32.totalorder %s245, 15
        %s247 = scalar_select %p246, %s245, 15
        %p248 = scmp.lt.s32.totalorder %s20, 0
        %s249 = scalar_select %p248, %s20, 0
        %s250 = smul.addr %s249, 4
        %s251 = smul.addr %s247, 4
        %s252 = sadd.s32 %s250, %s251
        %s253 = smul.addr %s252, 8
        %s254 = scalar_lea.vmem %s0, %s253
        %s255 = smul.u32 8, %s21
      $region32: #{forward.6} parent=27 // pred_fallthru
        _
    $region28: #{forward.6} parent=5 // pred_fallthru
      _
    %p256 = scmp.le.s32.totalorder 1, %s13
    %p257 = scmp.lt.s32.totalorder %s13, 3
    %p258 = pnand %p256, %p257
    %p259 = pneg %p258
    // Predicated region
    $region33: #{forward.6} parent=5 // pred_check
      _
    $region34: #{forward.6} parent=5 // pred_check_branch
      %261 = sbr.rel (%p258) target = $region36
    $region35: #{forward.6} parent=5 // pred_region
      %s262 = ssub.s32 %s13, 1
      %s263 = smul.u32 8, %s23
      %p264 = scmp.lt.s32.totalorder %s263, 15
      %s265 = scalar_select %p264, %s263, 15
      %p266 = scmp.lt.s32.totalorder %s22, 0
      %s267 = scalar_select %p266, %s22, 0
      %s268 = smul.addr %s267, 4
      %s269 = smul.addr %s265, 4
      %s270 = sadd.s32 %s268, %s269
      %s271 = smul.addr %s270, 8
      %s272 = scalar_lea.vmem %s0, %s271
      %p273 = pneg %p53
      %p274 = pneg %p50
      %p275 = pneg %p74
      %p276 = pneg %p71
      %p277 = scmp.lt.s32.totalorder %s22, 0
      %s278 = scalar_select %p277, %s22, 0
      %s279 = smul.addr %s278, 8
      %s280 = scalar_lea.vmem %s2, %s279
      %p281 = pneg %p100
      %p282 = pneg %p97
      %p283 = scmp.lt.s32.totalorder %s22, 0
      %s284 = scalar_select %p283, %s22, 0
      %s285 = smul.addr %s284, 8
      %s286 = scalar_lea.vmem %s3, %s285
      %p287 = pneg %p126
      %p288 = pneg %p123
      %p289 = pneg %p154
      %p290 = pneg %p151
      %s291 = smul.u32 8, %s23
      %p292 = scmp.lt.s32.totalorder %s291, 15
      %s293 = scalar_select %p292, %s291, 15
      %p294 = scmp.lt.s32.totalorder %s22, 0
      %s295 = scalar_select %p294, %s22, 0
      %s296 = sadd.s32 %s295, %s293
      %s297 = smul.addr %s296, 4
      %s298 = scalar_lea.vmem %s4, %s297
      %p299 = pneg %p180
      %p300 = pneg %p177
      %p301 = scmp.lt.s32.totalorder %s22, 0
      %s302 = scalar_select %p301, %s22, 0
      %s303 = smul.addr %s302, 8
      %s304 = scalar_lea.vmem %s5, %s303
      %p305 = pneg %p206
      %p306 = pneg %p203
      %p307 = scmp.lt.s32.totalorder %s22, 0
      %s308 = scalar_select %p307, %s22, 0
      %s309 = smul.addr %s308, 8
      %s310 = scalar_lea.vmem %s6, %s309
      %s311 = smul.u32 8, %s23
      %p312 = scmp.lt.s32.totalorder %s311, 15
      %s313 = scalar_select %p312, %s311, 15
      %p314 = scmp.lt.s32.totalorder %s22, 0
      %s315 = scalar_select %p314, %s22, 0
      %s316 = smul.addr %s315, 4
      %s317 = smul.addr %s313, 4
      %s318 = sadd.s32 %s316, %s317
      %s319 = smul.addr %s318, 8
      %s320 = scalar_lea.vmem %s0, %s319
      %s321 = smul.u32 8, %s23
      %p322 = scmp.lt.s32.totalorder %s22, 0
      %s323 = scalar_select %p322, %s22, 0
      %s324 = smul.addr %s323, 8
      %s325 = scalar_lea.vmem %s2, %s324
      %p326 = scmp.lt.s32.totalorder %s22, 0
      %s327 = scalar_select %p326, %s22, 0
      %s328 = smul.addr %s327, 8
      %s329 = scalar_lea.vmem %s3, %s328
      %s330 = smul.u32 8, %s23
      %p331 = scmp.lt.s32.totalorder %s330, 15
      %s332 = scalar_select %p331, %s330, 15
      %p333 = scmp.lt.s32.totalorder %s22, 0
      %s334 = scalar_select %p333, %s22, 0
      %s335 = sadd.s32 %s334, %s332
      %s336 = smul.addr %s335, 4
      %s337 = scalar_lea.vmem %s4, %s336
      %s338 = smul.u32 8, %s23
      %p339 = scmp.lt.s32.totalorder %s22, 0
      %s340 = scalar_select %p339, %s22, 0
      %s341 = smul.addr %s340, 8
      %s342 = scalar_lea.vmem %s5, %s341
      %p343 = scmp.lt.s32.totalorder %s22, 0
      %s344 = scalar_select %p343, %s22, 0
      %s345 = smul.addr %s344, 8
      %s346 = scalar_lea.vmem %s6, %s345
      %p348 = scmp.eq.s32.totalorder %s23, 0
      // Predicated region
      $region37: #{forward.6} parent=35 // pred_check
        %p349 = pneg %p348
      $region38: #{forward.6} parent=35 // pred_check_branch
        %351 = sbr.rel (%p349) target = $region40
      $region39: #{forward.6} parent=35 // pred_region
        %v352 = vld [vmem:[%s325] sm:$0xff]
        %353 = vst [vmem:[#allocation2] sm:$0xff] %v352
        %v354 = vld [vmem:[%s329] sm:$0xff]
        %355 = vst [vmem:[#allocation3] sm:$0xff] %v354
      $region40: #{forward.6} parent=35 // pred_fallthru
        _
      %v356 = vld [vmem:[%s320] sm:$0xff]
      %v357 = vld [vmem:[%s320 + $0x8] sm:$0xff]
      %v358 = vld [vmem:[%s320 + $0x10] sm:$0xff]
      %v359 = vld [vmem:[%s320 + $0x18] sm:$0xff]
      %v360 = vld [vmem:[#allocation2] sm:$0xff]
      %v361 = vpack.c.bf16 %v360, %v360
      %v362 = vld [vmem:[%s1] sm:$0xff]
      %v363 = vld [vmem:[%s1 + $0x8] sm:$0xff]
      %v364 = vld [vmem:[%s1 + $0x10] sm:$0xff]
      %v365 = vld [vmem:[%s1 + $0x18] sm:$0xff]
      %v366 = vld [vmem:[%s1 + $0x20] sm:$0xff]
      %v367 = vld [vmem:[%s1 + $0x28] sm:$0xff]
      %v368 = vld [vmem:[%s1 + $0x30] sm:$0xff]
      %v369 = vld [vmem:[%s1 + $0x38] sm:$0xff]
      %v370 = vld [vmem:[%s1 + $0x40] sm:$0xff]
      %v371 = vld [vmem:[%s1 + $0x48] sm:$0xff]
      %v372 = vld [vmem:[%s1 + $0x50] sm:$0xff]
      %v373 = vld [vmem:[%s1 + $0x58] sm:$0xff]
      %v374 = vld [vmem:[%s1 + $0x60] sm:$0xff]
      %v375 = vld [vmem:[%s1 + $0x68] sm:$0xff]
      %v376 = vld [vmem:[%s1 + $0x70] sm:$0xff]
      %v377 = vld [vmem:[%s1 + $0x78] sm:$0xff]
      %v378 = vld [vmem:[%s1 + $0x80] sm:$0xff]
      %v379 = vld [vmem:[%s1 + $0x88] sm:$0xff]
      %v380 = vld [vmem:[%s1 + $0x90] sm:$0xff]
      %v381 = vld [vmem:[%s1 + $0x98] sm:$0xff]
      %v382 = vld [vmem:[%s1 + $0xa0] sm:$0xff]
      %v383 = vld [vmem:[%s1 + $0xa8] sm:$0xff]
      %v384 = vld [vmem:[%s1 + $0xb0] sm:$0xff]
      %v385 = vld [vmem:[%s1 + $0xb8] sm:$0xff]
      %v386 = vld [vmem:[%s1 + $0xc0] sm:$0xff]
      %v387 = vld [vmem:[%s1 + $0xc8] sm:$0xff]
      %v388 = vld [vmem:[%s1 + $0xd0] sm:$0xff]
      %v389 = vld [vmem:[%s1 + $0xd8] sm:$0xff]
      %v390 = vld [vmem:[%s1 + $0xe0] sm:$0xff]
      %v391 = vld [vmem:[%s1 + $0xe8] sm:$0xff]
      %v392 = vld [vmem:[%s1 + $0xf0] sm:$0xff]
      %v393 = vld [vmem:[%s1 + $0xf8] sm:$0xff]
      %v426 = vunpack.c.l.b16 %v362
      %v427 = vunpack.c.h.b16 %v362
      %v428 = vunpack.c.l.b16 %v363
      %v429 = vunpack.c.h.b16 %v363
      %v430 = vunpack.c.l.b16 %v364
      %v431 = vunpack.c.h.b16 %v364
      %v432 = vunpack.c.l.b16 %v365
      %v433 = vunpack.c.h.b16 %v365
      %v434 = vunpack.c.l.b16 %v366
      %v435 = vunpack.c.h.b16 %v366
      %v436 = vunpack.c.l.b16 %v367
      %v437 = vunpack.c.h.b16 %v367
      %v438 = vunpack.c.l.b16 %v368
      %v439 = vunpack.c.h.b16 %v368
      %v440 = vunpack.c.l.b16 %v369
      %v441 = vunpack.c.h.b16 %v369
      %v442 = vunpack.c.l.b16 %v370
      %v443 = vunpack.c.h.b16 %v370
      %v444 = vunpack.c.l.b16 %v371
      %v445 = vunpack.c.h.b16 %v371
      %v446 = vunpack.c.l.b16 %v372
      %v447 = vunpack.c.h.b16 %v372
      %v448 = vunpack.c.l.b16 %v373
      %v449 = vunpack.c.h.b16 %v373
      %v450 = vunpack.c.l.b16 %v374
      %v451 = vunpack.c.h.b16 %v374
      %v452 = vunpack.c.l.b16 %v375
      %v453 = vunpack.c.h.b16 %v375
      %v454 = vunpack.c.l.b16 %v376
      %v455 = vunpack.c.h.b16 %v376
      %v456 = vunpack.c.l.b16 %v377
      %v457 = vunpack.c.h.b16 %v377
      %v458 = vunpack.c.l.b16 %v378
      %v459 = vunpack.c.h.b16 %v378
      %v460 = vunpack.c.l.b16 %v379
      %v461 = vunpack.c.h.b16 %v379
      %v462 = vunpack.c.l.b16 %v380
      %v463 = vunpack.c.h.b16 %v380
      %v464 = vunpack.c.l.b16 %v381
      %v465 = vunpack.c.h.b16 %v381
      %v466 = vunpack.c.l.b16 %v382
      %v467 = vunpack.c.h.b16 %v382
      %v468 = vunpack.c.l.b16 %v383
      %v469 = vunpack.c.h.b16 %v383
      %v470 = vunpack.c.l.b16 %v384
      %v471 = vunpack.c.h.b16 %v384
      %v472 = vunpack.c.l.b16 %v385
      %v473 = vunpack.c.h.b16 %v385
      %v474 = vunpack.c.l.b16 %v386
      %v475 = vunpack.c.h.b16 %v386
      %v476 = vunpack.c.l.b16 %v387
      %v477 = vunpack.c.h.b16 %v387
      %v478 = vunpack.c.l.b16 %v388
      %v479 = vunpack.c.h.b16 %v388
      %v480 = vunpack.c.l.b16 %v389
      %v481 = vunpack.c.h.b16 %v389
      %v482 = vunpack.c.l.b16 %v390
      %v483 = vunpack.c.h.b16 %v390
      %v484 = vunpack.c.l.b16 %v391
      %v485 = vunpack.c.h.b16 %v391
      %v486 = vunpack.c.l.b16 %v392
      %v487 = vunpack.c.h.b16 %v392
      %v488 = vunpack.c.l.b16 %v393
      %v489 = vunpack.c.h.b16 %v393
      %v490 = vpack.c.b16 %v430, %v426
      %v491 = vpack.c.b16 %v431, %v427
      %v492 = vpack.c.b16 %v432, %v428
      %v493 = vpack.c.b16 %v433, %v429
      %v494 = vpack.c.b16 %v438, %v434
      %v495 = vpack.c.b16 %v439, %v435
      %v496 = vpack.c.b16 %v440, %v436
      %v497 = vpack.c.b16 %v441, %v437
      %v498 = vpack.c.b16 %v446, %v442
      %v499 = vpack.c.b16 %v447, %v443
      %v500 = vpack.c.b16 %v448, %v444
      %v501 = vpack.c.b16 %v449, %v445
      %v502 = vpack.c.b16 %v454, %v450
      %v503 = vpack.c.b16 %v455, %v451
      %v504 = vpack.c.b16 %v456, %v452
      %v505 = vpack.c.b16 %v457, %v453
      %v506 = vpack.c.b16 %v462, %v458
      %v507 = vpack.c.b16 %v463, %v459
      %v508 = vpack.c.b16 %v464, %v460
      %v509 = vpack.c.b16 %v465, %v461
      %v510 = vpack.c.b16 %v470, %v466
      %v511 = vpack.c.b16 %v471, %v467
      %v512 = vpack.c.b16 %v472, %v468
      %v513 = vpack.c.b16 %v473, %v469
      %v514 = vpack.c.b16 %v478, %v474
      %v515 = vpack.c.b16 %v479, %v475
      %v516 = vpack.c.b16 %v480, %v476
      %v517 = vpack.c.b16 %v481, %v477
      %v518 = vpack.c.b16 %v486, %v482
      %v519 = vpack.c.b16 %v487, %v483
      %v520 = vpack.c.b16 %v488, %v484
      %v521 = vpack.c.b16 %v489, %v485
      %554 = vmatprep.subr.bf16.mxu0 %v519
      %555 = vmatpush1.bf16.msra.mxu0 %v518
      %556 = vmatprep.subr.bf16.mxu0 %v515
      %557 = vmatpush1.bf16.msra.mxu0 %v514
      %558 = vmatprep.subr.bf16.mxu0 %v511
      %559 = vmatpush1.bf16.msra.mxu0 %v510
      %560 = vmatprep.subr.bf16.mxu0 %v507
      %561 = vmatpush1.bf16.msra.mxu0 %v506
      %562 = vmatprep.subr.bf16.mxu0 %v503
      %563 = vmatpush1.bf16.msra.mxu0 %v502
      %564 = vmatprep.subr.bf16.mxu0 %v499
      %565 = vmatpush1.bf16.msra.mxu0 %v498
      %566 = vmatprep.subr.bf16.mxu0 %v495
      %567 = vmatpush1.bf16.msra.mxu0 %v494
      %568 = vmatprep.subr.bf16.mxu0 %v491
      %569 = vmatpush1.bf16.msra.mxu0 %v490
      %570 = vmatprep.subr.bf16.mxu0 0
      %571 = vmatpush2.bf16.msra.mxu0 0
      %572 = vmatprep.subr.bf16.mxu0 0
      %573 = vmatpush2.bf16.msra.mxu0 0
      %574 = vmatprep.subr.bf16.mxu0 0
      %575 = vmatpush2.bf16.msra.mxu0 0
      %576 = vmatprep.subr.bf16.mxu0 0
      %577 = vmatpush2.bf16.msra.mxu0 0
      %578 = vmatprep.subr.bf16.mxu0 0
      %579 = vmatpush2.bf16.msra.mxu0 0
      %580 = vmatprep.subr.bf16.mxu0 0
      %581 = vmatpush2.bf16.msra.mxu0 0
      %582 = vmatprep.subr.bf16.mxu0 0
      %583 = vmatpush2.bf16.msra.mxu0 0
      %584 = vmatprep.subr.bf16.mxu0 0
      %585 = vmatpush2.bf16.msra.mxu0 0
      %586 = vmatprep.mubr.bf16.mxu0 0
      %587 = vmatmul.mubr.bf16.gmra.mxu0 %v361
      %v588 = vpop.f32.mrf.mxu0
      %v589 = vadd.f32 0.0, %v588
      %v590 = vpop.f32.mrf.mxu0
      %v591 = vadd.f32 0.0, %v590
      %v592 = vpop.f32.mrf.mxu0
      %v593 = vpop.f32.mrf.mxu0
      %594 = vdwg.mxu0
      %595 = vmatprep.subr.bf16.mxu0 %v521
      %596 = vmatpush1.bf16.msra.mxu0 %v520
      %597 = vmatprep.subr.bf16.mxu0 %v517
      %598 = vmatpush1.bf16.msra.mxu0 %v516
      %599 = vmatprep.subr.bf16.mxu0 %v513
      %600 = vmatpush1.bf16.msra.mxu0 %v512
      %601 = vmatprep.subr.bf16.mxu0 %v509
      %602 = vmatpush1.bf16.msra.mxu0 %v508
      %603 = vmatprep.subr.bf16.mxu0 %v505
      %604 = vmatpush1.bf16.msra.mxu0 %v504
      %605 = vmatprep.subr.bf16.mxu0 %v501
      %606 = vmatpush1.bf16.msra.mxu0 %v500
      %607 = vmatprep.subr.bf16.mxu0 %v497
      %608 = vmatpush1.bf16.msra.mxu0 %v496
      %609 = vmatprep.subr.bf16.mxu0 %v493
      %610 = vmatpush1.bf16.msra.mxu0 %v492
      %611 = vmatprep.subr.bf16.mxu0 0
      %612 = vmatpush2.bf16.msra.mxu0 0
      %613 = vmatprep.subr.bf16.mxu0 0
      %614 = vmatpush2.bf16.msra.mxu0 0
      %615 = vmatprep.subr.bf16.mxu0 0
      %616 = vmatpush2.bf16.msra.mxu0 0
      %617 = vmatprep.subr.bf16.mxu0 0
      %618 = vmatpush2.bf16.msra.mxu0 0
      %619 = vmatprep.subr.bf16.mxu0 0
      %620 = vmatpush2.bf16.msra.mxu0 0
      %621 = vmatprep.subr.bf16.mxu0 0
      %622 = vmatpush2.bf16.msra.mxu0 0
      %623 = vmatprep.subr.bf16.mxu0 0
      %624 = vmatpush2.bf16.msra.mxu0 0
      %625 = vmatprep.subr.bf16.mxu0 0
      %626 = vmatpush2.bf16.msra.mxu0 0
      %627 = vmatprep.mubr.bf16.mxu0 0
      %628 = vmatmul.mubr.bf16.gmra.mxu0 %v361
      %v629 = vpop.f32.mrf.mxu0
      %v630 = vadd.f32 0.0, %v629
      %v631 = vpop.f32.mrf.mxu0
      %v632 = vadd.f32 0.0, %v631
      %v633 = vpop.f32.mrf.mxu0
      %v634 = vpop.f32.mrf.mxu0
      %635 = vdwg.mxu0
      %v636 = vadd.f32 %v356, %v589
      %v637 = vadd.f32 %v357, %v591
      %v638 = vadd.f32 %v358, %v630
      %v639 = vadd.f32 %v359, %v632
      %v640 = vsub.f32 0.0, %v636
      %v641 = vmul.f32 %v640, 1.442695
      %v642 = vpow.pop %v641
      %v643 = vadd.f32 %v642, 1.0
      %v644 = vrcp.pop %v643
      %v645 = vsub.f32 0.0, %v637
      %v646 = vmul.f32 %v645, 1.442695
      %v647 = vpow.pop %v646
      %v648 = vadd.f32 %v647, 1.0
      %v649 = vrcp.pop %v648
      %v650 = vtanh.pop %v638
      %v651 = vsub.f32 0.0, %v639
      %v652 = vmul.f32 %v651, 1.442695
      %v653 = vpow.pop %v652
      %v654 = vadd.f32 %v653, 1.0
      %v655 = vrcp.pop %v654
      %v656 = vld [vmem:[#allocation3] sm:$0xff]
      %v657 = vmul.f32 %v649, %v656
      %v658 = vmul.f32 %v644, %v650
      %v659 = vadd.f32 %v657, %v658
      %v660 = vtanh.pop %v659
      %v661 = vmul.f32 %v655, %v660
      %662 = vst [vmem:[#allocation3] sm:$0xff] %v659
      %663 = vst [vmem:[#allocation2] sm:$0xff] %v661
      %v664 = vpack.c.bf16 %v661, %v661
      %665 = vst [vmem:[%s337] sm:$0xf] %v664
      %s666 = scalar_lea.vmem %s320, 32
      %v667 = vld [vmem:[%s666] sm:$0xff]
      %v668 = vld [vmem:[%s666 + $0x8] sm:$0xff]
      %v669 = vld [vmem:[%s666 + $0x10] sm:$0xff]
      %v670 = vld [vmem:[%s666 + $0x18] sm:$0xff]
      %v671 = vld [vmem:[#allocation2] sm:$0xff]
      %v672 = vpack.c.bf16 %v671, %v671
      %v673 = vld [vmem:[%s1] sm:$0xff]
      %v674 = vld [vmem:[%s1 + $0x8] sm:$0xff]
      %v675 = vld [vmem:[%s1 + $0x10] sm:$0xff]
      %v676 = vld [vmem:[%s1 + $0x18] sm:$0xff]
      %v677 = vld [vmem:[%s1 + $0x20] sm:$0xff]
      %v678 = vld [vmem:[%s1 + $0x28] sm:$0xff]
      %v679 = vld [vmem:[%s1 + $0x30] sm:$0xff]
      %v680 = vld [vmem:[%s1 + $0x38] sm:$0xff]
      %v681 = vld [vmem:[%s1 + $0x40] sm:$0xff]
      %v682 = vld [vmem:[%s1 + $0x48] sm:$0xff]
      %v683 = vld [vmem:[%s1 + $0x50] sm:$0xff]
      %v684 = vld [vmem:[%s1 + $0x58] sm:$0xff]
      %v685 = vld [vmem:[%s1 + $0x60] sm:$0xff]
      %v686 = vld [vmem:[%s1 + $0x68] sm:$0xff]
      %v687 = vld [vmem:[%s1 + $0x70] sm:$0xff]
      %v688 = vld [vmem:[%s1 + $0x78] sm:$0xff]
      %v689 = vld [vmem:[%s1 + $0x80] sm:$0xff]
      %v690 = vld [vmem:[%s1 + $0x88] sm:$0xff]
      %v691 = vld [vmem:[%s1 + $0x90] sm:$0xff]
      %v692 = vld [vmem:[%s1 + $0x98] sm:$0xff]
      %v693 = vld [vmem:[%s1 + $0xa0] sm:$0xff]
      %v694 = vld [vmem:[%s1 + $0xa8] sm:$0xff]
      %v695 = vld [vmem:[%s1 + $0xb0] sm:$0xff]
      %v696 = vld [vmem:[%s1 + $0xb8] sm:$0xff]
      %v697 = vld [vmem:[%s1 + $0xc0] sm:$0xff]
      %v698 = vld [vmem:[%s1 + $0xc8] sm:$0xff]
      %v699 = vld [vmem:[%s1 + $0xd0] sm:$0xff]
      %v700 = vld [vmem:[%s1 + $0xd8] sm:$0xff]
      %v701 = vld [vmem:[%s1 + $0xe0] sm:$0xff]
      %v702 = vld [vmem:[%s1 + $0xe8] sm:$0xff]
      %v703 = vld [vmem:[%s1 + $0xf0] sm:$0xff]
      %v704 = vld [vmem:[%s1 + $0xf8] sm:$0xff]
      %v737 = vunpack.c.l.b16 %v673
      %v738 = vunpack.c.h.b16 %v673
      %v739 = vunpack.c.l.b16 %v674
      %v740 = vunpack.c.h.b16 %v674
      %v741 = vunpack.c.l.b16 %v675
      %v742 = vunpack.c.h.b16 %v675
      %v743 = vunpack.c.l.b16 %v676
      %v744 = vunpack.c.h.b16 %v676
      %v745 = vunpack.c.l.b16 %v677
      %v746 = vunpack.c.h.b16 %v677
      %v747 = vunpack.c.l.b16 %v678
      %v748 = vunpack.c.h.b16 %v678
      %v749 = vunpack.c.l.b16 %v679
      %v750 = vunpack.c.h.b16 %v679
      %v751 = vunpack.c.l.b16 %v680
      %v752 = vunpack.c.h.b16 %v680
      %v753 = vunpack.c.l.b16 %v681
      %v754 = vunpack.c.h.b16 %v681
      %v755 = vunpack.c.l.b16 %v682
      %v756 = vunpack.c.h.b16 %v682
      %v757 = vunpack.c.l.b16 %v683
      %v758 = vunpack.c.h.b16 %v683
      %v759 = vunpack.c.l.b16 %v684
      %v760 = vunpack.c.h.b16 %v684
      %v761 = vunpack.c.l.b16 %v685
      %v762 = vunpack.c.h.b16 %v685
      %v763 = vunpack.c.l.b16 %v686
      %v764 = vunpack.c.h.b16 %v686
      %v765 = vunpack.c.l.b16 %v687
      %v766 = vunpack.c.h.b16 %v687
      %v767 = vunpack.c.l.b16 %v688
      %v768 = vunpack.c.h.b16 %v688
      %v769 = vunpack.c.l.b16 %v689
      %v770 = vunpack.c.h.b16 %v689
      %v771 = vunpack.c.l.b16 %v690
      %v772 = vunpack.c.h.b16 %v690
      %v773 = vunpack.c.l.b16 %v691
      %v774 = vunpack.c.h.b16 %v691
      %v775 = vunpack.c.l.b16 %v692
      %v776 = vunpack.c.h.b16 %v692
      %v777 = vunpack.c.l.b16 %v693
      %v778 = vunpack.c.h.b16 %v693
      %v779 = vunpack.c.l.b16 %v694
      %v780 = vunpack.c.h.b16 %v694
      %v781 = vunpack.c.l.b16 %v695
      %v782 = vunpack.c.h.b16 %v695
      %v783 = vunpack.c.l.b16 %v696
      %v784 = vunpack.c.h.b16 %v696
      %v785 = vunpack.c.l.b16 %v697
      %v786 = vunpack.c.h.b16 %v697
      %v787 = vunpack.c.l.b16 %v698
      %v788 = vunpack.c.h.b16 %v698
      %v789 = vunpack.c.l.b16 %v699
      %v790 = vunpack.c.h.b16 %v699
      %v791 = vunpack.c.l.b16 %v700
      %v792 = vunpack.c.h.b16 %v700
      %v793 = vunpack.c.l.b16 %v701
      %v794 = vunpack.c.h.b16 %v701
      %v795 = vunpack.c.l.b16 %v702
      %v796 = vunpack.c.h.b16 %v702
      %v797 = vunpack.c.l.b16 %v703
      %v798 = vunpack.c.h.b16 %v703
      %v799 = vunpack.c.l.b16 %v704
      %v800 = vunpack.c.h.b16 %v704
      %v801 = vpack.c.b16 %v741, %v737
      %v802 = vpack.c.b16 %v742, %v738
      %v803 = vpack.c.b16 %v743, %v739
      %v804 = vpack.c.b16 %v744, %v740
      %v805 = vpack.c.b16 %v749, %v745
      %v806 = vpack.c.b16 %v750, %v746
      %v807 = vpack.c.b16 %v751, %v747
      %v808 = vpack.c.b16 %v752, %v748
      %v809 = vpack.c.b16 %v757, %v753
      %v810 = vpack.c.b16 %v758, %v754
      %v811 = vpack.c.b16 %v759, %v755
      %v812 = vpack.c.b16 %v760, %v756
      %v813 = vpack.c.b16 %v765, %v761
      %v814 = vpack.c.b16 %v766, %v762
      %v815 = vpack.c.b16 %v767, %v763
      %v816 = vpack.c.b16 %v768, %v764
      %v817 = vpack.c.b16 %v773, %v769
      %v818 = vpack.c.b16 %v774, %v770
      %v819 = vpack.c.b16 %v775, %v771
      %v820 = vpack.c.b16 %v776, %v772
      %v821 = vpack.c.b16 %v781, %v777
      %v822 = vpack.c.b16 %v782, %v778
      %v823 = vpack.c.b16 %v783, %v779
      %v824 = vpack.c.b16 %v784, %v780
      %v825 = vpack.c.b16 %v789, %v785
      %v826 = vpack.c.b16 %v790, %v786
      %v827 = vpack.c.b16 %v791, %v787
      %v828 = vpack.c.b16 %v792, %v788
      %v829 = vpack.c.b16 %v797, %v793
      %v830 = vpack.c.b16 %v798, %v794
      %v831 = vpack.c.b16 %v799, %v795
      %v832 = vpack.c.b16 %v800, %v796
      %865 = vmatprep.subr.bf16.mxu0 %v830
      %866 = vmatpush1.bf16.msra.mxu0 %v829
      %867 = vmatprep.subr.bf16.mxu0 %v826
      %868 = vmatpush1.bf16.msra.mxu0 %v825
      %869 = vmatprep.subr.bf16.mxu0 %v822
      %870 = vmatpush1.bf16.msra.mxu0 %v821
      %871 = vmatprep.subr.bf16.mxu0 %v818
      %872 = vmatpush1.bf16.msra.mxu0 %v817
      %873 = vmatprep.subr.bf16.mxu0 %v814
      %874 = vmatpush1.bf16.msra.mxu0 %v813
      %875 = vmatprep.subr.bf16.mxu0 %v810
      %876 = vmatpush1.bf16.msra.mxu0 %v809
      %877 = vmatprep.subr.bf16.mxu0 %v806
      %878 = vmatpush1.bf16.msra.mxu0 %v805
      %879 = vmatprep.subr.bf16.mxu0 %v802
      %880 = vmatpush1.bf16.msra.mxu0 %v801
      %881 = vmatprep.subr.bf16.mxu0 0
      %882 = vmatpush2.bf16.msra.mxu0 0
      %883 = vmatprep.subr.bf16.mxu0 0
      %884 = vmatpush2.bf16.msra.mxu0 0
      %885 = vmatprep.subr.bf16.mxu0 0
      %886 = vmatpush2.bf16.msra.mxu0 0
      %887 = vmatprep.subr.bf16.mxu0 0
      %888 = vmatpush2.bf16.msra.mxu0 0
      %889 = vmatprep.subr.bf16.mxu0 0
      %890 = vmatpush2.bf16.msra.mxu0 0
      %891 = vmatprep.subr.bf16.mxu0 0
      %892 = vmatpush2.bf16.msra.mxu0 0
      %893 = vmatprep.subr.bf16.mxu0 0
      %894 = vmatpush2.bf16.msra.mxu0 0
      %895 = vmatprep.subr.bf16.mxu0 0
      %896 = vmatpush2.bf16.msra.mxu0 0
      %897 = vmatprep.mubr.bf16.mxu0 0
      %898 = vmatmul.mubr.bf16.gmra.mxu0 %v672
      %v899 = vpop.f32.mrf.mxu0
      %v900 = vadd.f32 0.0, %v899
      %v901 = vpop.f32.mrf.mxu0
      %v902 = vadd.f32 0.0, %v901
      %v903 = vpop.f32.mrf.mxu0
      %v904 = vpop.f32.mrf.mxu0
      %905 = vdwg.mxu0
      %906 = vmatprep.subr.bf16.mxu0 %v832
      %907 = vmatpush1.bf16.msra.mxu0 %v831
      %908 = vmatprep.subr.bf16.mxu0 %v828
      %909 = vmatpush1.bf16.msra.mxu0 %v827
      %910 = vmatprep.subr.bf16.mxu0 %v824
      %911 = vmatpush1.bf16.msra.mxu0 %v823
      %912 = vmatprep.subr.bf16.mxu0 %v820
      %913 = vmatpush1.bf16.msra.mxu0 %v819
      %914 = vmatprep.subr.bf16.mxu0 %v816
      %915 = vmatpush1.bf16.msra.mxu0 %v815
      %916 = vmatprep.subr.bf16.mxu0 %v812
      %917 = vmatpush1.bf16.msra.mxu0 %v811
      %918 = vmatprep.subr.bf16.mxu0 %v808
      %919 = vmatpush1.bf16.msra.mxu0 %v807
      %920 = vmatprep.subr.bf16.mxu0 %v804
      %921 = vmatpush1.bf16.msra.mxu0 %v803
      %922 = vmatprep.subr.bf16.mxu0 0
      %923 = vmatpush2.bf16.msra.mxu0 0
      %924 = vmatprep.subr.bf16.mxu0 0
      %925 = vmatpush2.bf16.msra.mxu0 0
      %926 = vmatprep.subr.bf16.mxu0 0
      %927 = vmatpush2.bf16.msra.mxu0 0
      %928 = vmatprep.subr.bf16.mxu0 0
      %929 = vmatpush2.bf16.msra.mxu0 0
      %930 = vmatprep.subr.bf16.mxu0 0
      %931 = vmatpush2.bf16.msra.mxu0 0
      %932 = vmatprep.subr.bf16.mxu0 0
      %933 = vmatpush2.bf16.msra.mxu0 0
      %934 = vmatprep.subr.bf16.mxu0 0
      %935 = vmatpush2.bf16.msra.mxu0 0
      %936 = vmatprep.subr.bf16.mxu0 0
      %937 = vmatpush2.bf16.msra.mxu0 0
      %938 = vmatprep.mubr.bf16.mxu0 0
      %939 = vmatmul.mubr.bf16.gmra.mxu0 %v672
      %v940 = vpop.f32.mrf.mxu0
      %v941 = vadd.f32 0.0, %v940
      %v942 = vpop.f32.mrf.mxu0
      %v943 = vadd.f32 0.0, %v942
      %v944 = vpop.f32.mrf.mxu0
      %v945 = vpop.f32.mrf.mxu0
      %946 = vdwg.mxu0
      %v947 = vadd.f32 %v667, %v900
      %v948 = vadd.f32 %v668, %v902
      %v949 = vadd.f32 %v669, %v941
      %v950 = vadd.f32 %v670, %v943
      %v951 = vsub.f32 0.0, %v947
      %v952 = vmul.f32 %v951, 1.442695
      %v953 = vpow.pop %v952
      %v954 = vadd.f32 %v953, 1.0
      %v955 = vrcp.pop %v954
      %v956 = vsub.f32 0.0, %v948
      %v957 = vmul.f32 %v956, 1.442695
      %v958 = vpow.pop %v957
      %v959 = vadd.f32 %v958, 1.0
      %v960 = vrcp.pop %v959
      %v961 = vtanh.pop %v949
      %v962 = vsub.f32 0.0, %v950
      %v963 = vmul.f32 %v962, 1.442695
      %v964 = vpow.pop %v963
      %v965 = vadd.f32 %v964, 1.0
      %v966 = vrcp.pop %v965
      %v967 = vld [vmem:[#allocation3] sm:$0xff]
      %v968 = vmul.f32 %v960, %v967
      %v969 = vmul.f32 %v955, %v961
      %v970 = vadd.f32 %v968, %v969
      %v971 = vtanh.pop %v970
      %v972 = vmul.f32 %v966, %v971
      %973 = vst [vmem:[#allocation3] sm:$0xff] %v970
      %974 = vst [vmem:[#allocation2] sm:$0xff] %v972
      %v975 = vpack.c.bf16 %v972, %v972
      %s976 = scalar_lea.vmem %s337, 4
      %977 = vst [vmem:[%s976] sm:$0xf] %v975
      %s978 = scalar_lea.vmem %s320, 64
      %v979 = vld [vmem:[%s978] sm:$0xff]
      %v980 = vld [vmem:[%s978 + $0x8] sm:$0xff]
      %v981 = vld [vmem:[%s978 + $0x10] sm:$0xff]
      %v982 = vld [vmem:[%s978 + $0x18] sm:$0xff]
      %v983 = vld [vmem:[#allocation2] sm:$0xff]
      %v984 = vpack.c.bf16 %v983, %v983
      %v985 = vld [vmem:[%s1] sm:$0xff]
      %v986 = vld [vmem:[%s1 + $0x8] sm:$0xff]
      %v987 = vld [vmem:[%s1 + $0x10] sm:$0xff]
      %v988 = vld [vmem:[%s1 + $0x18] sm:$0xff]
      %v989 = vld [vmem:[%s1 + $0x20] sm:$0xff]
      %v990 = vld [vmem:[%s1 + $0x28] sm:$0xff]
      %v991 = vld [vmem:[%s1 + $0x30] sm:$0xff]
      %v992 = vld [vmem:[%s1 + $0x38] sm:$0xff]
      %v993 = vld [vmem:[%s1 + $0x40] sm:$0xff]
      %v994 = vld [vmem:[%s1 + $0x48] sm:$0xff]
      %v995 = vld [vmem:[%s1 + $0x50] sm:$0xff]
      %v996 = vld [vmem:[%s1 + $0x58] sm:$0xff]
      %v997 = vld [vmem:[%s1 + $0x60] sm:$0xff]
      %v998 = vld [vmem:[%s1 + $0x68] sm:$0xff]
      %v999 = vld [vmem:[%s1 + $0x70] sm:$0xff]
      %v1000 = vld [vmem:[%s1 + $0x78] sm:$0xff]
      %v1001 = vld [vmem:[%s1 + $0x80] sm:$0xff]
      %v1002 = vld [vmem:[%s1 + $0x88] sm:$0xff]
      %v1003 = vld [vmem:[%s1 + $0x90] sm:$0xff]
      %v1004 = vld [vmem:[%s1 + $0x98] sm:$0xff]
      %v1005 = vld [vmem:[%s1 + $0xa0] sm:$0xff]
      %v1006 = vld [vmem:[%s1 + $0xa8] sm:$0xff]
      %v1007 = vld [vmem:[%s1 + $0xb0] sm:$0xff]
      %v1008 = vld [vmem:[%s1 + $0xb8] sm:$0xff]
      %v1009 = vld [vmem:[%s1 + $0xc0] sm:$0xff]
      %v1010 = vld [vmem:[%s1 + $0xc8] sm:$0xff]
      %v1011 = vld [vmem:[%s1 + $0xd0] sm:$0xff]
      %v1012 = vld [vmem:[%s1 + $0xd8] sm:$0xff]
      %v1013 = vld [vmem:[%s1 + $0xe0] sm:$0xff]
      %v1014 = vld [vmem:[%s1 + $0xe8] sm:$0xff]
      %v1015 = vld [vmem:[%s1 + $0xf0] sm:$0xff]
      %v1016 = vld [vmem:[%s1 + $0xf8] sm:$0xff]
      %v1049 = vunpack.c.l.b16 %v985
      %v1050 = vunpack.c.h.b16 %v985
      %v1051 = vunpack.c.l.b16 %v986
      %v1052 = vunpack.c.h.b16 %v986
      %v1053 = vunpack.c.l.b16 %v987
      %v1054 = vunpack.c.h.b16 %v987
      %v1055 = vunpack.c.l.b16 %v988
      %v1056 = vunpack.c.h.b16 %v988
      %v1057 = vunpack.c.l.b16 %v989
      %v1058 = vunpack.c.h.b16 %v989
      %v1059 = vunpack.c.l.b16 %v990
      %v1060 = vunpack.c.h.b16 %v990
      %v1061 = vunpack.c.l.b16 %v991
      %v1062 = vunpack.c.h.b16 %v991
      %v1063 = vunpack.c.l.b16 %v992
      %v1064 = vunpack.c.h.b16 %v992
      %v1065 = vunpack.c.l.b16 %v993
      %v1066 = vunpack.c.h.b16 %v993
      %v1067 = vunpack.c.l.b16 %v994
      %v1068 = vunpack.c.h.b16 %v994
      %v1069 = vunpack.c.l.b16 %v995
      %v1070 = vunpack.c.h.b16 %v995
      %v1071 = vunpack.c.l.b16 %v996
      %v1072 = vunpack.c.h.b16 %v996
      %v1073 = vunpack.c.l.b16 %v997
      %v1074 = vunpack.c.h.b16 %v997
      %v1075 = vunpack.c.l.b16 %v998
      %v1076 = vunpack.c.h.b16 %v998
      %v1077 = vunpack.c.l.b16 %v999
      %v1078 = vunpack.c.h.b16 %v999
      %v1079 = vunpack.c.l.b16 %v1000
      %v1080 = vunpack.c.h.b16 %v1000
      %v1081 = vunpack.c.l.b16 %v1001
      %v1082 = vunpack.c.h.b16 %v1001
      %v1083 = vunpack.c.l.b16 %v1002
      %v1084 = vunpack.c.h.b16 %v1002
      %v1085 = vunpack.c.l.b16 %v1003
      %v1086 = vunpack.c.h.b16 %v1003
      %v1087 = vunpack.c.l.b16 %v1004
      %v1088 = vunpack.c.h.b16 %v1004
      %v1089 = vunpack.c.l.b16 %v1005
      %v1090 = vunpack.c.h.b16 %v1005
      %v1091 = vunpack.c.l.b16 %v1006
      %v1092 = vunpack.c.h.b16 %v1006
      %v1093 = vunpack.c.l.b16 %v1007
      %v1094 = vunpack.c.h.b16 %v1007
      %v1095 = vunpack.c.l.b16 %v1008
      %v1096 = vunpack.c.h.b16 %v1008
      %v1097 = vunpack.c.l.b16 %v1009
      %v1098 = vunpack.c.h.b16 %v1009
      %v1099 = vunpack.c.l.b16 %v1010
      %v1100 = vunpack.c.h.b16 %v1010
      %v1101 = vunpack.c.l.b16 %v1011
      %v1102 = vunpack.c.h.b16 %v1011
      %v1103 = vunpack.c.l.b16 %v1012
      %v1104 = vunpack.c.h.b16 %v1012
      %v1105 = vunpack.c.l.b16 %v1013
      %v1106 = vunpack.c.h.b16 %v1013
      %v1107 = vunpack.c.l.b16 %v1014
      %v1108 = vunpack.c.h.b16 %v1014
      %v1109 = vunpack.c.l.b16 %v1015
      %v1110 = vunpack.c.h.b16 %v1015
      %v1111 = vunpack.c.l.b16 %v1016
      %v1112 = vunpack.c.h.b16 %v1016
      %v1113 = vpack.c.b16 %v1053, %v1049
      %v1114 = vpack.c.b16 %v1054, %v1050
      %v1115 = vpack.c.b16 %v1055, %v1051
      %v1116 = vpack.c.b16 %v1056, %v1052
      %v1117 = vpack.c.b16 %v1061, %v1057
      %v1118 = vpack.c.b16 %v1062, %v1058
      %v1119 = vpack.c.b16 %v1063, %v1059
      %v1120 = vpack.c.b16 %v1064, %v1060
      %v1121 = vpack.c.b16 %v1069, %v1065
      %v1122 = vpack.c.b16 %v1070, %v1066
      %v1123 = vpack.c.b16 %v1071, %v1067
      %v1124 = vpack.c.b16 %v1072, %v1068
      %v1125 = vpack.c.b16 %v1077, %v1073
      %v1126 = vpack.c.b16 %v1078, %v1074
      %v1127 = vpack.c.b16 %v1079, %v1075
      %v1128 = vpack.c.b16 %v1080, %v1076
      %v1129 = vpack.c.b16 %v1085, %v1081
      %v1130 = vpack.c.b16 %v1086, %v1082
      %v1131 = vpack.c.b16 %v1087, %v1083
      %v1132 = vpack.c.b16 %v1088, %v1084
      %v1133 = vpack.c.b16 %v1093, %v1089
      %v1134 = vpack.c.b16 %v1094, %v1090
      %v1135 = vpack.c.b16 %v1095, %v1091
      %v1136 = vpack.c.b16 %v1096, %v1092
      %v1137 = vpack.c.b16 %v1101, %v1097
      %v1138 = vpack.c.b16 %v1102, %v1098
      %v1139 = vpack.c.b16 %v1103, %v1099
      %v1140 = vpack.c.b16 %v1104, %v1100
      %v1141 = vpack.c.b16 %v1109, %v1105
      %v1142 = vpack.c.b16 %v1110, %v1106
      %v1143 = vpack.c.b16 %v1111, %v1107
      %v1144 = vpack.c.b16 %v1112, %v1108
      %1177 = vmatprep.subr.bf16.mxu0 %v1142
      %1178 = vmatpush1.bf16.msra.mxu0 %v1141
      %1179 = vmatprep.subr.bf16.mxu0 %v1138
      %1180 = vmatpush1.bf16.msra.mxu0 %v1137
      %1181 = vmatprep.subr.bf16.mxu0 %v1134
      %1182 = vmatpush1.bf16.msra.mxu0 %v1133
      %1183 = vmatprep.subr.bf16.mxu0 %v1130
      %1184 = vmatpush1.bf16.msra.mxu0 %v1129
      %1185 = vmatprep.subr.bf16.mxu0 %v1126
      %1186 = vmatpush1.bf16.msra.mxu0 %v1125
      %1187 = vmatprep.subr.bf16.mxu0 %v1122
      %1188 = vmatpush1.bf16.msra.mxu0 %v1121
      %1189 = vmatprep.subr.bf16.mxu0 %v1118
      %1190 = vmatpush1.bf16.msra.mxu0 %v1117
      %1191 = vmatprep.subr.bf16.mxu0 %v1114
      %1192 = vmatpush1.bf16.msra.mxu0 %v1113
      %1193 = vmatprep.subr.bf16.mxu0 0
      %1194 = vmatpush2.bf16.msra.mxu0 0
      %1195 = vmatprep.subr.bf16.mxu0 0
      %1196 = vmatpush2.bf16.msra.mxu0 0
      %1197 = vmatprep.subr.bf16.mxu0 0
      %1198 = vmatpush2.bf16.msra.mxu0 0
      %1199 = vmatprep.subr.bf16.mxu0 0
      %1200 = vmatpush2.bf16.msra.mxu0 0
      %1201 = vmatprep.subr.bf16.mxu0 0
      %1202 = vmatpush2.bf16.msra.mxu0 0
      %1203 = vmatprep.subr.bf16.mxu0 0
      %1204 = vmatpush2.bf16.msra.mxu0 0
      %1205 = vmatprep.subr.bf16.mxu0 0
      %1206 = vmatpush2.bf16.msra.mxu0 0
      %1207 = vmatprep.subr.bf16.mxu0 0
      %1208 = vmatpush2.bf16.msra.mxu0 0
      %1209 = vmatprep.mubr.bf16.mxu0 0
      %1210 = vmatmul.mubr.bf16.gmra.mxu0 %v984
      %v1211 = vpop.f32.mrf.mxu0
      %v1212 = vadd.f32 0.0, %v1211
      %v1213 = vpop.f32.mrf.mxu0
      %v1214 = vadd.f32 0.0, %v1213
      %v1215 = vpop.f32.mrf.mxu0
      %v1216 = vpop.f32.mrf.mxu0
      %1217 = vdwg.mxu0
      %1218 = vmatprep.subr.bf16.mxu0 %v1144
      %1219 = vmatpush1.bf16.msra.mxu0 %v1143
      %1220 = vmatprep.subr.bf16.mxu0 %v1140
      %1221 = vmatpush1.bf16.msra.mxu0 %v1139
      %1222 = vmatprep.subr.bf16.mxu0 %v1136
      %1223 = vmatpush1.bf16.msra.mxu0 %v1135
      %1224 = vmatprep.subr.bf16.mxu0 %v1132
      %1225 = vmatpush1.bf16.msra.mxu0 %v1131
      %1226 = vmatprep.subr.bf16.mxu0 %v1128
      %1227 = vmatpush1.bf16.msra.mxu0 %v1127
      %1228 = vmatprep.subr.bf16.mxu0 %v1124
      %1229 = vmatpush1.bf16.msra.mxu0 %v1123
      %1230 = vmatprep.subr.bf16.mxu0 %v1120
      %1231 = vmatpush1.bf16.msra.mxu0 %v1119
      %1232 = vmatprep.subr.bf16.mxu0 %v1116
      %1233 = vmatpush1.bf16.msra.mxu0 %v1115
      %1234 = vmatprep.subr.bf16.mxu0 0
      %1235 = vmatpush2.bf16.msra.mxu0 0
      %1236 = vmatprep.subr.bf16.mxu0 0
      %1237 = vmatpush2.bf16.msra.mxu0 0
      %1238 = vmatprep.subr.bf16.mxu0 0
      %1239 = vmatpush2.bf16.msra.mxu0 0
      %1240 = vmatprep.subr.bf16.mxu0 0
      %1241 = vmatpush2.bf16.msra.mxu0 0
      %1242 = vmatprep.subr.bf16.mxu0 0
      %1243 = vmatpush2.bf16.msra.mxu0 0
      %1244 = vmatprep.subr.bf16.mxu0 0
      %1245 = vmatpush2.bf16.msra.mxu0 0
      %1246 = vmatprep.subr.bf16.mxu0 0
      %1247 = vmatpush2.bf16.msra.mxu0 0
      %1248 = vmatprep.subr.bf16.mxu0 0
      %1249 = vmatpush2.bf16.msra.mxu0 0
      %1250 = vmatprep.mubr.bf16.mxu0 0
      %1251 = vmatmul.mubr.bf16.gmra.mxu0 %v984
      %v1252 = vpop.f32.mrf.mxu0
      %v1253 = vadd.f32 0.0, %v1252
      %v1254 = vpop.f32.mrf.mxu0
      %v1255 = vadd.f32 0.0, %v1254
      %v1256 = vpop.f32.mrf.mxu0
      %v1257 = vpop.f32.mrf.mxu0
      %1258 = vdwg.mxu0
      %v1259 = vadd.f32 %v979, %v1212
      %v1260 = vadd.f32 %v980, %v1214
      %v1261 = vadd.f32 %v981, %v1253
      %v1262 = vadd.f32 %v982, %v1255
      %v1263 = vsub.f32 0.0, %v1259
      %v1264 = vmul.f32 %v1263, 1.442695
      %v1265 = vpow.pop %v1264
      %v1266 = vadd.f32 %v1265, 1.0
      %v1267 = vrcp.pop %v1266
      %v1268 = vsub.f32 0.0, %v1260
      %v1269 = vmul.f32 %v1268, 1.442695
      %v1270 = vpow.pop %v1269
      %v1271 = vadd.f32 %v1270, 1.0
      %v1272 = vrcp.pop %v1271
      %v1273 = vtanh.pop %v1261
      %v1274 = vsub.f32 0.0, %v1262
      %v1275 = vmul.f32 %v1274, 1.442695
      %v1276 = vpow.pop %v1275
      %v1277 = vadd.f32 %v1276, 1.0
      %v1278 = vrcp.pop %v1277
      %v1279 = vld [vmem:[#allocation3] sm:$0xff]
      %v1280 = vmul.f32 %v1272, %v1279
      %v1281 = vmul.f32 %v1267, %v1273
      %v1282 = vadd.f32 %v1280, %v1281
      %v1283 = vtanh.pop %v1282
      %v1284 = vmul.f32 %v1278, %v1283
      %1285 = vst [vmem:[#allocation3] sm:$0xff] %v1282
      %1286 = vst [vmem:[#allocation2] sm:$0xff] %v1284
      %v1287 = vpack.c.bf16 %v1284, %v1284
      %s1288 = scalar_lea.vmem %s337, 8
      %1289 = vst [vmem:[%s1288] sm:$0xf] %v1287
      %s1290 = scalar_lea.vmem %s320, 96
      %v1291 = vld [vmem:[%s1290] sm:$0xff]
      %v1292 = vld [vmem:[%s1290 + $0x8] sm:$0xff]
      %v1293 = vld [vmem:[%s1290 + $0x10] sm:$0xff]
      %v1294 = vld [vmem:[%s1290 + $0x18] sm:$0xff]
      %v1295 = vld [vmem:[#allocation2] sm:$0xff]
      %v1296 = vpack.c.bf16 %v1295, %v1295
      %v1297 = vld [vmem:[%s1] sm:$0xff]
      %v1298 = vld [vmem:[%s1 + $0x8] sm:$0xff]
      %v1299 = vld [vmem:[%s1 + $0x10] sm:$0xff]
      %v1300 = vld [vmem:[%s1 + $0x18] sm:$0xff]
      %v1301 = vld [vmem:[%s1 + $0x20] sm:$0xff]
      %v1302 = vld [vmem:[%s1 + $0x28] sm:$0xff]
      %v1303 = vld [vmem:[%s1 + $0x30] sm:$0xff]
      %v1304 = vld [vmem:[%s1 + $0x38] sm:$0xff]
      %v1305 = vld [vmem:[%s1 + $0x40] sm:$0xff]
      %v1306 = vld [vmem:[%s1 + $0x48] sm:$0xff]
      %v1307 = vld [vmem:[%s1 + $0x50] sm:$0xff]
      %v1308 = vld [vmem:[%s1 + $0x58] sm:$0xff]
      %v1309 = vld [vmem:[%s1 + $0x60] sm:$0xff]
      %v1310 = vld [vmem:[%s1 + $0x68] sm:$0xff]
      %v1311 = vld [vmem:[%s1 + $0x70] sm:$0xff]
      %v1312 = vld [vmem:[%s1 + $0x78] sm:$0xff]
      %v1313 = vld [vmem:[%s1 + $0x80] sm:$0xff]
      %v1314 = vld [vmem:[%s1 + $0x88] sm:$0xff]
      %v1315 = vld [vmem:[%s1 + $0x90] sm:$0xff]
      %v1316 = vld [vmem:[%s1 + $0x98] sm:$0xff]
      %v1317 = vld [vmem:[%s1 + $0xa0] sm:$0xff]
      %v1318 = vld [vmem:[%s1 + $0xa8] sm:$0xff]
      %v1319 = vld [vmem:[%s1 + $0xb0] sm:$0xff]
      %v1320 = vld [vmem:[%s1 + $0xb8] sm:$0xff]
      %v1321 = vld [vmem:[%s1 + $0xc0] sm:$0xff]
      %v1322 = vld [vmem:[%s1 + $0xc8] sm:$0xff]
      %v1323 = vld [vmem:[%s1 + $0xd0] sm:$0xff]
      %v1324 = vld [vmem:[%s1 + $0xd8] sm:$0xff]
      %v1325 = vld [vmem:[%s1 + $0xe0] sm:$0xff]
      %v1326 = vld [vmem:[%s1 + $0xe8] sm:$0xff]
      %v1327 = vld [vmem:[%s1 + $0xf0] sm:$0xff]
      %v1328 = vld [vmem:[%s1 + $0xf8] sm:$0xff]
      %v1361 = vunpack.c.l.b16 %v1297
      %v1362 = vunpack.c.h.b16 %v1297
      %v1363 = vunpack.c.l.b16 %v1298
      %v1364 = vunpack.c.h.b16 %v1298
      %v1365 = vunpack.c.l.b16 %v1299
      %v1366 = vunpack.c.h.b16 %v1299
      %v1367 = vunpack.c.l.b16 %v1300
      %v1368 = vunpack.c.h.b16 %v1300
      %v1369 = vunpack.c.l.b16 %v1301
      %v1370 = vunpack.c.h.b16 %v1301
      %v1371 = vunpack.c.l.b16 %v1302
      %v1372 = vunpack.c.h.b16 %v1302
      %v1373 = vunpack.c.l.b16 %v1303
      %v1374 = vunpack.c.h.b16 %v1303
      %v1375 = vunpack.c.l.b16 %v1304
      %v1376 = vunpack.c.h.b16 %v1304
      %v1377 = vunpack.c.l.b16 %v1305
      %v1378 = vunpack.c.h.b16 %v1305
      %v1379 = vunpack.c.l.b16 %v1306
      %v1380 = vunpack.c.h.b16 %v1306
      %v1381 = vunpack.c.l.b16 %v1307
      %v1382 = vunpack.c.h.b16 %v1307
      %v1383 = vunpack.c.l.b16 %v1308
      %v1384 = vunpack.c.h.b16 %v1308
      %v1385 = vunpack.c.l.b16 %v1309
      %v1386 = vunpack.c.h.b16 %v1309
      %v1387 = vunpack.c.l.b16 %v1310
      %v1388 = vunpack.c.h.b16 %v1310
      %v1389 = vunpack.c.l.b16 %v1311
      %v1390 = vunpack.c.h.b16 %v1311
      %v1391 = vunpack.c.l.b16 %v1312
      %v1392 = vunpack.c.h.b16 %v1312
      %v1393 = vunpack.c.l.b16 %v1313
      %v1394 = vunpack.c.h.b16 %v1313
      %v1395 = vunpack.c.l.b16 %v1314
      %v1396 = vunpack.c.h.b16 %v1314
      %v1397 = vunpack.c.l.b16 %v1315
      %v1398 = vunpack.c.h.b16 %v1315
      %v1399 = vunpack.c.l.b16 %v1316
      %v1400 = vunpack.c.h.b16 %v1316
      %v1401 = vunpack.c.l.b16 %v1317
      %v1402 = vunpack.c.h.b16 %v1317
      %v1403 = vunpack.c.l.b16 %v1318
      %v1404 = vunpack.c.h.b16 %v1318
      %v1405 = vunpack.c.l.b16 %v1319
      %v1406 = vunpack.c.h.b16 %v1319
      %v1407 = vunpack.c.l.b16 %v1320
      %v1408 = vunpack.c.h.b16 %v1320
      %v1409 = vunpack.c.l.b16 %v1321
      %v1410 = vunpack.c.h.b16 %v1321
      %v1411 = vunpack.c.l.b16 %v1322
      %v1412 = vunpack.c.h.b16 %v1322
      %v1413 = vunpack.c.l.b16 %v1323
      %v1414 = vunpack.c.h.b16 %v1323
      %v1415 = vunpack.c.l.b16 %v1324
      %v1416 = vunpack.c.h.b16 %v1324
      %v1417 = vunpack.c.l.b16 %v1325
      %v1418 = vunpack.c.h.b16 %v1325
      %v1419 = vunpack.c.l.b16 %v1326
      %v1420 = vunpack.c.h.b16 %v1326
      %v1421 = vunpack.c.l.b16 %v1327
      %v1422 = vunpack.c.h.b16 %v1327
      %v1423 = vunpack.c.l.b16 %v1328
      %v1424 = vunpack.c.h.b16 %v1328
      %v1425 = vpack.c.b16 %v1365, %v1361
      %v1426 = vpack.c.b16 %v1366, %v1362
      %v1427 = vpack.c.b16 %v1367, %v1363
      %v1428 = vpack.c.b16 %v1368, %v1364
      %v1429 = vpack.c.b16 %v1373, %v1369
      %v1430 = vpack.c.b16 %v1374, %v1370
      %v1431 = vpack.c.b16 %v1375, %v1371
      %v1432 = vpack.c.b16 %v1376, %v1372
      %v1433 = vpack.c.b16 %v1381, %v1377
      %v1434 = vpack.c.b16 %v1382, %v1378
      %v1435 = vpack.c.b16 %v1383, %v1379
      %v1436 = vpack.c.b16 %v1384, %v1380
      %v1437 = vpack.c.b16 %v1389, %v1385
      %v1438 = vpack.c.b16 %v1390, %v1386
      %v1439 = vpack.c.b16 %v1391, %v1387
      %v1440 = vpack.c.b16 %v1392, %v1388
      %v1441 = vpack.c.b16 %v1397, %v1393
      %v1442 = vpack.c.b16 %v1398, %v1394
      %v1443 = vpack.c.b16 %v1399, %v1395
      %v1444 = vpack.c.b16 %v1400, %v1396
      %v1445 = vpack.c.b16 %v1405, %v1401
      %v1446 = vpack.c.b16 %v1406, %v1402
      %v1447 = vpack.c.b16 %v1407, %v1403
      %v1448 = vpack.c.b16 %v1408, %v1404
      %v1449 = vpack.c.b16 %v1413, %v1409
      %v1450 = vpack.c.b16 %v1414, %v1410
      %v1451 = vpack.c.b16 %v1415, %v1411
      %v1452 = vpack.c.b16 %v1416, %v1412
      %v1453 = vpack.c.b16 %v1421, %v1417
      %v1454 = vpack.c.b16 %v1422, %v1418
      %v1455 = vpack.c.b16 %v1423, %v1419
      %v1456 = vpack.c.b16 %v1424, %v1420
      %1489 = vmatprep.subr.bf16.mxu0 %v1454
      %1490 = vmatpush1.bf16.msra.mxu0 %v1453
      %1491 = vmatprep.subr.bf16.mxu0 %v1450
      %1492 = vmatpush1.bf16.msra.mxu0 %v1449
      %1493 = vmatprep.subr.bf16.mxu0 %v1446
      %1494 = vmatpush1.bf16.msra.mxu0 %v1445
      %1495 = vmatprep.subr.bf16.mxu0 %v1442
      %1496 = vmatpush1.bf16.msra.mxu0 %v1441
      %1497 = vmatprep.subr.bf16.mxu0 %v1438
      %1498 = vmatpush1.bf16.msra.mxu0 %v1437
      %1499 = vmatprep.subr.bf16.mxu0 %v1434
      %1500 = vmatpush1.bf16.msra.mxu0 %v1433
      %1501 = vmatprep.subr.bf16.mxu0 %v1430
      %1502 = vmatpush1.bf16.msra.mxu0 %v1429
      %1503 = vmatprep.subr.bf16.mxu0 %v1426
      %1504 = vmatpush1.bf16.msra.mxu0 %v1425
      %1505 = vmatprep.subr.bf16.mxu0 0
      %1506 = vmatpush2.bf16.msra.mxu0 0
      %1507 = vmatprep.subr.bf16.mxu0 0
      %1508 = vmatpush2.bf16.msra.mxu0 0
      %1509 = vmatprep.subr.bf16.mxu0 0
      %1510 = vmatpush2.bf16.msra.mxu0 0
      %1511 = vmatprep.subr.bf16.mxu0 0
      %1512 = vmatpush2.bf16.msra.mxu0 0
      %1513 = vmatprep.subr.bf16.mxu0 0
      %1514 = vmatpush2.bf16.msra.mxu0 0
      %1515 = vmatprep.subr.bf16.mxu0 0
      %1516 = vmatpush2.bf16.msra.mxu0 0
      %1517 = vmatprep.subr.bf16.mxu0 0
      %1518 = vmatpush2.bf16.msra.mxu0 0
      %1519 = vmatprep.subr.bf16.mxu0 0
      %1520 = vmatpush2.bf16.msra.mxu0 0
      %1521 = vmatprep.mubr.bf16.mxu0 0
      %1522 = vmatmul.mubr.bf16.gmra.mxu0 %v1296
      %v1523 = vpop.f32.mrf.mxu0
      %v1524 = vadd.f32 0.0, %v1523
      %v1525 = vpop.f32.mrf.mxu0
      %v1526 = vadd.f32 0.0, %v1525
      %v1527 = vpop.f32.mrf.mxu0
      %v1528 = vpop.f32.mrf.mxu0
      %1529 = vdwg.mxu0
      %1530 = vmatprep.subr.bf16.mxu0 %v1456
      %1531 = vmatpush1.bf16.msra.mxu0 %v1455
      %1532 = vmatprep.subr.bf16.mxu0 %v1452
      %1533 = vmatpush1.bf16.msra.mxu0 %v1451
      %1534 = vmatprep.subr.bf16.mxu0 %v1448
      %1535 = vmatpush1.bf16.msra.mxu0 %v1447
      %1536 = vmatprep.subr.bf16.mxu0 %v1444
      %1537 = vmatpush1.bf16.msra.mxu0 %v1443
      %1538 = vmatprep.subr.bf16.mxu0 %v1440
      %1539 = vmatpush1.bf16.msra.mxu0 %v1439
      %1540 = vmatprep.subr.bf16.mxu0 %v1436
      %1541 = vmatpush1.bf16.msra.mxu0 %v1435
      %1542 = vmatprep.subr.bf16.mxu0 %v1432
      %1543 = vmatpush1.bf16.msra.mxu0 %v1431
      %1544 = vmatprep.subr.bf16.mxu0 %v1428
      %1545 = vmatpush1.bf16.msra.mxu0 %v1427
      %1546 = vmatprep.subr.bf16.mxu0 0
      %1547 = vmatpush2.bf16.msra.mxu0 0
      %1548 = vmatprep.subr.bf16.mxu0 0
      %1549 = vmatpush2.bf16.msra.mxu0 0
      %1550 = vmatprep.subr.bf16.mxu0 0
      %1551 = vmatpush2.bf16.msra.mxu0 0
      %1552 = vmatprep.subr.bf16.mxu0 0
      %1553 = vmatpush2.bf16.msra.mxu0 0
      %1554 = vmatprep.subr.bf16.mxu0 0
      %1555 = vmatpush2.bf16.msra.mxu0 0
      %1556 = vmatprep.subr.bf16.mxu0 0
      %1557 = vmatpush2.bf16.msra.mxu0 0
      %1558 = vmatprep.subr.bf16.mxu0 0
      %1559 = vmatpush2.bf16.msra.mxu0 0
      %1560 = vmatprep.subr.bf16.mxu0 0
      %1561 = vmatpush2.bf16.msra.mxu0 0
      %1562 = vmatprep.mubr.bf16.mxu0 0
      %1563 = vmatmul.mubr.bf16.gmra.mxu0 %v1296
      %v1564 = vpop.f32.mrf.mxu0
      %v1565 = vadd.f32 0.0, %v1564
      %v1566 = vpop.f32.mrf.mxu0
      %v1567 = vadd.f32 0.0, %v1566
      %v1568 = vpop.f32.mrf.mxu0
      %v1569 = vpop.f32.mrf.mxu0
      %1570 = vdwg.mxu0
      %v1571 = vadd.f32 %v1291, %v1524
      %v1572 = vadd.f32 %v1292, %v1526
      %v1573 = vadd.f32 %v1293, %v1565
      %v1574 = vadd.f32 %v1294, %v1567
      %v1575 = vsub.f32 0.0, %v1571
      %v1576 = vmul.f32 %v1575, 1.442695
      %v1577 = vpow.pop %v1576
      %v1578 = vadd.f32 %v1577, 1.0
      %v1579 = vrcp.pop %v1578
      %v1580 = vsub.f32 0.0, %v1572
      %v1581 = vmul.f32 %v1580, 1.442695
      %v1582 = vpow.pop %v1581
      %v1583 = vadd.f32 %v1582, 1.0
      %v1584 = vrcp.pop %v1583
      %v1585 = vtanh.pop %v1573
      %v1586 = vsub.f32 0.0, %v1574
      %v1587 = vmul.f32 %v1586, 1.442695
      %v1588 = vpow.pop %v1587
      %v1589 = vadd.f32 %v1588, 1.0
      %v1590 = vrcp.pop %v1589
      %v1591 = vld [vmem:[#allocation3] sm:$0xff]
      %v1592 = vmul.f32 %v1584, %v1591
      %v1593 = vmul.f32 %v1579, %v1585
      %v1594 = vadd.f32 %v1592, %v1593
      %v1595 = vtanh.pop %v1594
      %v1596 = vmul.f32 %v1590, %v1595
      %1597 = vst [vmem:[#allocation3] sm:$0xff] %v1594
      %1598 = vst [vmem:[#allocation2] sm:$0xff] %v1596
      %v1599 = vpack.c.bf16 %v1596, %v1596
      %s1600 = scalar_lea.vmem %s337, 12
      %1601 = vst [vmem:[%s1600] sm:$0xf] %v1599
      %s1602 = scalar_lea.vmem %s320, 128
      %v1603 = vld [vmem:[%s1602] sm:$0xff]
      %v1604 = vld [vmem:[%s1602 + $0x8] sm:$0xff]
      %v1605 = vld [vmem:[%s1602 + $0x10] sm:$0xff]
      %v1606 = vld [vmem:[%s1602 + $0x18] sm:$0xff]
      %v1607 = vld [vmem:[#allocation2] sm:$0xff]
      %v1608 = vpack.c.bf16 %v1607, %v1607
      %v1609 = vld [vmem:[%s1] sm:$0xff]
      %v1610 = vld [vmem:[%s1 + $0x8] sm:$0xff]
      %v1611 = vld [vmem:[%s1 + $0x10] sm:$0xff]
      %v1612 = vld [vmem:[%s1 + $0x18] sm:$0xff]
      %v1613 = vld [vmem:[%s1 + $0x20] sm:$0xff]
      %v1614 = vld [vmem:[%s1 + $0x28] sm:$0xff]
      %v1615 = vld [vmem:[%s1 + $0x30] sm:$0xff]
      %v1616 = vld [vmem:[%s1 + $0x38] sm:$0xff]
      %v1617 = vld [vmem:[%s1 + $0x40] sm:$0xff]
      %v1618 = vld [vmem:[%s1 + $0x48] sm:$0xff]
      %v1619 = vld [vmem:[%s1 + $0x50] sm:$0xff]
      %v1620 = vld [vmem:[%s1 + $0x58] sm:$0xff]
      %v1621 = vld [vmem:[%s1 + $0x60] sm:$0xff]
      %v1622 = vld [vmem:[%s1 + $0x68] sm:$0xff]
      %v1623 = vld [vmem:[%s1 + $0x70] sm:$0xff]
      %v1624 = vld [vmem:[%s1 + $0x78] sm:$0xff]
      %v1625 = vld [vmem:[%s1 + $0x80] sm:$0xff]
      %v1626 = vld [vmem:[%s1 + $0x88] sm:$0xff]
      %v1627 = vld [vmem:[%s1 + $0x90] sm:$0xff]
      %v1628 = vld [vmem:[%s1 + $0x98] sm:$0xff]
      %v1629 = vld [vmem:[%s1 + $0xa0] sm:$0xff]
      %v1630 = vld [vmem:[%s1 + $0xa8] sm:$0xff]
      %v1631 = vld [vmem:[%s1 + $0xb0] sm:$0xff]
      %v1632 = vld [vmem:[%s1 + $0xb8] sm:$0xff]
      %v1633 = vld [vmem:[%s1 + $0xc0] sm:$0xff]
      %v1634 = vld [vmem:[%s1 + $0xc8] sm:$0xff]
      %v1635 = vld [vmem:[%s1 + $0xd0] sm:$0xff]
      %v1636 = vld [vmem:[%s1 + $0xd8] sm:$0xff]
      %v1637 = vld [vmem:[%s1 + $0xe0] sm:$0xff]
      %v1638 = vld [vmem:[%s1 + $0xe8] sm:$0xff]
      %v1639 = vld [vmem:[%s1 + $0xf0] sm:$0xff]
      %v1640 = vld [vmem:[%s1 + $0xf8] sm:$0xff]
      %v1673 = vunpack.c.l.b16 %v1609
      %v1674 = vunpack.c.h.b16 %v1609
      %v1675 = vunpack.c.l.b16 %v1610
      %v1676 = vunpack.c.h.b16 %v1610
      %v1677 = vunpack.c.l.b16 %v1611
      %v1678 = vunpack.c.h.b16 %v1611
      %v1679 = vunpack.c.l.b16 %v1612
      %v1680 = vunpack.c.h.b16 %v1612
      %v1681 = vunpack.c.l.b16 %v1613
      %v1682 = vunpack.c.h.b16 %v1613
      %v1683 = vunpack.c.l.b16 %v1614
      %v1684 = vunpack.c.h.b16 %v1614
      %v1685 = vunpack.c.l.b16 %v1615
      %v1686 = vunpack.c.h.b16 %v1615
      %v1687 = vunpack.c.l.b16 %v1616
      %v1688 = vunpack.c.h.b16 %v1616
      %v1689 = vunpack.c.l.b16 %v1617
      %v1690 = vunpack.c.h.b16 %v1617
      %v1691 = vunpack.c.l.b16 %v1618
      %v1692 = vunpack.c.h.b16 %v1618
      %v1693 = vunpack.c.l.b16 %v1619
      %v1694 = vunpack.c.h.b16 %v1619
      %v1695 = vunpack.c.l.b16 %v1620
      %v1696 = vunpack.c.h.b16 %v1620
      %v1697 = vunpack.c.l.b16 %v1621
      %v1698 = vunpack.c.h.b16 %v1621
      %v1699 = vunpack.c.l.b16 %v1622
      %v1700 = vunpack.c.h.b16 %v1622
      %v1701 = vunpack.c.l.b16 %v1623
      %v1702 = vunpack.c.h.b16 %v1623
      %v1703 = vunpack.c.l.b16 %v1624
      %v1704 = vunpack.c.h.b16 %v1624
      %v1705 = vunpack.c.l.b16 %v1625
      %v1706 = vunpack.c.h.b16 %v1625
      %v1707 = vunpack.c.l.b16 %v1626
      %v1708 = vunpack.c.h.b16 %v1626
      %v1709 = vunpack.c.l.b16 %v1627
      %v1710 = vunpack.c.h.b16 %v1627
      %v1711 = vunpack.c.l.b16 %v1628
      %v1712 = vunpack.c.h.b16 %v1628
      %v1713 = vunpack.c.l.b16 %v1629
      %v1714 = vunpack.c.h.b16 %v1629
      %v1715 = vunpack.c.l.b16 %v1630
      %v1716 = vunpack.c.h.b16 %v1630
      %v1717 = vunpack.c.l.b16 %v1631
      %v1718 = vunpack.c.h.b16 %v1631
      %v1719 = vunpack.c.l.b16 %v1632
      %v1720 = vunpack.c.h.b16 %v1632
      %v1721 = vunpack.c.l.b16 %v1633
      %v1722 = vunpack.c.h.b16 %v1633
      %v1723 = vunpack.c.l.b16 %v1634
      %v1724 = vunpack.c.h.b16 %v1634
      %v1725 = vunpack.c.l.b16 %v1635
      %v1726 = vunpack.c.h.b16 %v1635
      %v1727 = vunpack.c.l.b16 %v1636
      %v1728 = vunpack.c.h.b16 %v1636
      %v1729 = vunpack.c.l.b16 %v1637
      %v1730 = vunpack.c.h.b16 %v1637
      %v1731 = vunpack.c.l.b16 %v1638
      %v1732 = vunpack.c.h.b16 %v1638
      %v1733 = vunpack.c.l.b16 %v1639
      %v1734 = vunpack.c.h.b16 %v1639
      %v1735 = vunpack.c.l.b16 %v1640
      %v1736 = vunpack.c.h.b16 %v1640
      %v1737 = vpack.c.b16 %v1677, %v1673
      %v1738 = vpack.c.b16 %v1678, %v1674
      %v1739 = vpack.c.b16 %v1679, %v1675
      %v1740 = vpack.c.b16 %v1680, %v1676
      %v1741 = vpack.c.b16 %v1685, %v1681
      %v1742 = vpack.c.b16 %v1686, %v1682
      %v1743 = vpack.c.b16 %v1687, %v1683
      %v1744 = vpack.c.b16 %v1688, %v1684
      %v1745 = vpack.c.b16 %v1693, %v1689
      %v1746 = vpack.c.b16 %v1694, %v1690
      %v1747 = vpack.c.b16 %v1695, %v1691
      %v1748 = vpack.c.b16 %v1696, %v1692
      %v1749 = vpack.c.b16 %v1701, %v1697
      %v1750 = vpack.c.b16 %v1702, %v1698
      %v1751 = vpack.c.b16 %v1703, %v1699
      %v1752 = vpack.c.b16 %v1704, %v1700
      %v1753 = vpack.c.b16 %v1709, %v1705
      %v1754 = vpack.c.b16 %v1710, %v1706
      %v1755 = vpack.c.b16 %v1711, %v1707
      %v1756 = vpack.c.b16 %v1712, %v1708
      %v1757 = vpack.c.b16 %v1717, %v1713
      %v1758 = vpack.c.b16 %v1718, %v1714
      %v1759 = vpack.c.b16 %v1719, %v1715
      %v1760 = vpack.c.b16 %v1720, %v1716
      %v1761 = vpack.c.b16 %v1725, %v1721
      %v1762 = vpack.c.b16 %v1726, %v1722
      %v1763 = vpack.c.b16 %v1727, %v1723
      %v1764 = vpack.c.b16 %v1728, %v1724
      %v1765 = vpack.c.b16 %v1733, %v1729
      %v1766 = vpack.c.b16 %v1734, %v1730
      %v1767 = vpack.c.b16 %v1735, %v1731
      %v1768 = vpack.c.b16 %v1736, %v1732
      %1801 = vmatprep.subr.bf16.mxu0 %v1766
      %1802 = vmatpush1.bf16.msra.mxu0 %v1765
      %1803 = vmatprep.subr.bf16.mxu0 %v1762
      %1804 = vmatpush1.bf16.msra.mxu0 %v1761
      %1805 = vmatprep.subr.bf16.mxu0 %v1758
      %1806 = vmatpush1.bf16.msra.mxu0 %v1757
      %1807 = vmatprep.subr.bf16.mxu0 %v1754
      %1808 = vmatpush1.bf16.msra.mxu0 %v1753
      %1809 = vmatprep.subr.bf16.mxu0 %v1750
      %1810 = vmatpush1.bf16.msra.mxu0 %v1749
      %1811 = vmatprep.subr.bf16.mxu0 %v1746
      %1812 = vmatpush1.bf16.msra.mxu0 %v1745
      %1813 = vmatprep.subr.bf16.mxu0 %v1742
      %1814 = vmatpush1.bf16.msra.mxu0 %v1741
      %1815 = vmatprep.subr.bf16.mxu0 %v1738
      %1816 = vmatpush1.bf16.msra.mxu0 %v1737
      %1817 = vmatprep.subr.bf16.mxu0 0
      %1818 = vmatpush2.bf16.msra.mxu0 0
      %1819 = vmatprep.subr.bf16.mxu0 0
      %1820 = vmatpush2.bf16.msra.mxu0 0
      %1821 = vmatprep.subr.bf16.mxu0 0
      %1822 = vmatpush2.bf16.msra.mxu0 0
      %1823 = vmatprep.subr.bf16.mxu0 0
      %1824 = vmatpush2.bf16.msra.mxu0 0
      %1825 = vmatprep.subr.bf16.mxu0 0
      %1826 = vmatpush2.bf16.msra.mxu0 0
      %1827 = vmatprep.subr.bf16.mxu0 0
      %1828 = vmatpush2.bf16.msra.mxu0 0
      %1829 = vmatprep.subr.bf16.mxu0 0
      %1830 = vmatpush2.bf16.msra.mxu0 0
      %1831 = vmatprep.subr.bf16.mxu0 0
      %1832 = vmatpush2.bf16.msra.mxu0 0
      %1833 = vmatprep.mubr.bf16.mxu0 0
      %1834 = vmatmul.mubr.bf16.gmra.mxu0 %v1608
      %v1835 = vpop.f32.mrf.mxu0
      %v1836 = vadd.f32 0.0, %v1835
      %v1837 = vpop.f32.mrf.mxu0
      %v1838 = vadd.f32 0.0, %v1837
      %v1839 = vpop.f32.mrf.mxu0
      %v1840 = vpop.f32.mrf.mxu0
      %1841 = vdwg.mxu0
      %1842 = vmatprep.subr.bf16.mxu0 %v1768
      %1843 = vmatpush1.bf16.msra.mxu0 %v1767
      %1844 = vmatprep.subr.bf16.mxu0 %v1764
      %1845 = vmatpush1.bf16.msra.mxu0 %v1763
      %1846 = vmatprep.subr.bf16.mxu0 %v1760
      %1847 = vmatpush1.bf16.msra.mxu0 %v1759
      %1848 = vmatprep.subr.bf16.mxu0 %v1756
      %1849 = vmatpush1.bf16.msra.mxu0 %v1755
      %1850 = vmatprep.subr.bf16.mxu0 %v1752
      %1851 = vmatpush1.bf16.msra.mxu0 %v1751
      %1852 = vmatprep.subr.bf16.mxu0 %v1748
      %1853 = vmatpush1.bf16.msra.mxu0 %v1747
      %1854 = vmatprep.subr.bf16.mxu0 %v1744
      %1855 = vmatpush1.bf16.msra.mxu0 %v1743
      %1856 = vmatprep.subr.bf16.mxu0 %v1740
      %1857 = vmatpush1.bf16.msra.mxu0 %v1739
      %1858 = vmatprep.subr.bf16.mxu0 0
      %1859 = vmatpush2.bf16.msra.mxu0 0
      %1860 = vmatprep.subr.bf16.mxu0 0
      %1861 = vmatpush2.bf16.msra.mxu0 0
      %1862 = vmatprep.subr.bf16.mxu0 0
      %1863 = vmatpush2.bf16.msra.mxu0 0
      %1864 = vmatprep.subr.bf16.mxu0 0
      %1865 = vmatpush2.bf16.msra.mxu0 0
      %1866 = vmatprep.subr.bf16.mxu0 0
      %1867 = vmatpush2.bf16.msra.mxu0 0
      %1868 = vmatprep.subr.bf16.mxu0 0
      %1869 = vmatpush2.bf16.msra.mxu0 0
      %1870 = vmatprep.subr.bf16.mxu0 0
      %1871 = vmatpush2.bf16.msra.mxu0 0
      %1872 = vmatprep.subr.bf16.mxu0 0
      %1873 = vmatpush2.bf16.msra.mxu0 0
      %1874 = vmatprep.mubr.bf16.mxu0 0
      %1875 = vmatmul.mubr.bf16.gmra.mxu0 %v1608
      %v1876 = vpop.f32.mrf.mxu0
      %v1877 = vadd.f32 0.0, %v1876
      %v1878 = vpop.f32.mrf.mxu0
      %v1879 = vadd.f32 0.0, %v1878
      %v1880 = vpop.f32.mrf.mxu0
      %v1881 = vpop.f32.mrf.mxu0
      %1882 = vdwg.mxu0
      %v1883 = vadd.f32 %v1603, %v1836
      %v1884 = vadd.f32 %v1604, %v1838
      %v1885 = vadd.f32 %v1605, %v1877
      %v1886 = vadd.f32 %v1606, %v1879
      %v1887 = vsub.f32 0.0, %v1883
      %v1888 = vmul.f32 %v1887, 1.442695
      %v1889 = vpow.pop %v1888
      %v1890 = vadd.f32 %v1889, 1.0
      %v1891 = vrcp.pop %v1890
      %v1892 = vsub.f32 0.0, %v1884
      %v1893 = vmul.f32 %v1892, 1.442695
      %v1894 = vpow.pop %v1893
      %v1895 = vadd.f32 %v1894, 1.0
      %v1896 = vrcp.pop %v1895
      %v1897 = vtanh.pop %v1885
      %v1898 = vsub.f32 0.0, %v1886
      %v1899 = vmul.f32 %v1898, 1.442695
      %v1900 = vpow.pop %v1899
      %v1901 = vadd.f32 %v1900, 1.0
      %v1902 = vrcp.pop %v1901
      %v1903 = vld [vmem:[#allocation3] sm:$0xff]
      %v1904 = vmul.f32 %v1896, %v1903
      %v1905 = vmul.f32 %v1891, %v1897
      %v1906 = vadd.f32 %v1904, %v1905
      %v1907 = vtanh.pop %v1906
      %v1908 = vmul.f32 %v1902, %v1907
      %1909 = vst [vmem:[#allocation3] sm:$0xff] %v1906
      %1910 = vst [vmem:[#allocation2] sm:$0xff] %v1908
      %v1911 = vpack.c.bf16 %v1908, %v1908
      %s1912 = scalar_lea.vmem %s337, 16
      %1913 = vst [vmem:[%s1912] sm:$0xf] %v1911
      %s1914 = scalar_lea.vmem %s320, 160
      %v1915 = vld [vmem:[%s1914] sm:$0xff]
      %v1916 = vld [vmem:[%s1914 + $0x8] sm:$0xff]
      %v1917 = vld [vmem:[%s1914 + $0x10] sm:$0xff]
      %v1918 = vld [vmem:[%s1914 + $0x18] sm:$0xff]
      %v1919 = vld [vmem:[#allocation2] sm:$0xff]
      %v1920 = vpack.c.bf16 %v1919, %v1919
      %v1921 = vld [vmem:[%s1] sm:$0xff]
      %v1922 = vld [vmem:[%s1 + $0x8] sm:$0xff]
      %v1923 = vld [vmem:[%s1 + $0x10] sm:$0xff]
      %v1924 = vld [vmem:[%s1 + $0x18] sm:$0xff]
      %v1925 = vld [vmem:[%s1 + $0x20] sm:$0xff]
      %v1926 = vld [vmem:[%s1 + $0x28] sm:$0xff]
      %v1927 = vld [vmem:[%s1 + $0x30] sm:$0xff]
      %v1928 = vld [vmem:[%s1 + $0x38] sm:$0xff]
      %v1929 = vld [vmem:[%s1 + $0x40] sm:$0xff]
      %v1930 = vld [vmem:[%s1 + $0x48] sm:$0xff]
      %v1931 = vld [vmem:[%s1 + $0x50] sm:$0xff]
      %v1932 = vld [vmem:[%s1 + $0x58] sm:$0xff]
      %v1933 = vld [vmem:[%s1 + $0x60] sm:$0xff]
      %v1934 = vld [vmem:[%s1 + $0x68] sm:$0xff]
      %v1935 = vld [vmem:[%s1 + $0x70] sm:$0xff]
      %v1936 = vld [vmem:[%s1 + $0x78] sm:$0xff]
      %v1937 = vld [vmem:[%s1 + $0x80] sm:$0xff]
      %v1938 = vld [vmem:[%s1 + $0x88] sm:$0xff]
      %v1939 = vld [vmem:[%s1 + $0x90] sm:$0xff]
      %v1940 = vld [vmem:[%s1 + $0x98] sm:$0xff]
      %v1941 = vld [vmem:[%s1 + $0xa0] sm:$0xff]
      %v1942 = vld [vmem:[%s1 + $0xa8] sm:$0xff]
      %v1943 = vld [vmem:[%s1 + $0xb0] sm:$0xff]
      %v1944 = vld [vmem:[%s1 + $0xb8] sm:$0xff]
      %v1945 = vld [vmem:[%s1 + $0xc0] sm:$0xff]
      %v1946 = vld [vmem:[%s1 + $0xc8] sm:$0xff]
      %v1947 = vld [vmem:[%s1 + $0xd0] sm:$0xff]
      %v1948 = vld [vmem:[%s1 + $0xd8] sm:$0xff]
      %v1949 = vld [vmem:[%s1 + $0xe0] sm:$0xff]
      %v1950 = vld [vmem:[%s1 + $0xe8] sm:$0xff]
      %v1951 = vld [vmem:[%s1 + $0xf0] sm:$0xff]
      %v1952 = vld [vmem:[%s1 + $0xf8] sm:$0xff]
      %v1985 = vunpack.c.l.b16 %v1921
      %v1986 = vunpack.c.h.b16 %v1921
      %v1987 = vunpack.c.l.b16 %v1922
      %v1988 = vunpack.c.h.b16 %v1922
      %v1989 = vunpack.c.l.b16 %v1923
      %v1990 = vunpack.c.h.b16 %v1923
      %v1991 = vunpack.c.l.b16 %v1924
      %v1992 = vunpack.c.h.b16 %v1924
      %v1993 = vunpack.c.l.b16 %v1925
      %v1994 = vunpack.c.h.b16 %v1925
      %v1995 = vunpack.c.l.b16 %v1926
      %v1996 = vunpack.c.h.b16 %v1926
      %v1997 = vunpack.c.l.b16 %v1927
      %v1998 = vunpack.c.h.b16 %v1927
      %v1999 = vunpack.c.l.b16 %v1928
      %v2000 = vunpack.c.h.b16 %v1928
      %v2001 = vunpack.c.l.b16 %v1929
      %v2002 = vunpack.c.h.b16 %v1929
      %v2003 = vunpack.c.l.b16 %v1930
      %v2004 = vunpack.c.h.b16 %v1930
      %v2005 = vunpack.c.l.b16 %v1931
      %v2006 = vunpack.c.h.b16 %v1931
      %v2007 = vunpack.c.l.b16 %v1932
      %v2008 = vunpack.c.h.b16 %v1932
      %v2009 = vunpack.c.l.b16 %v1933
      %v2010 = vunpack.c.h.b16 %v1933
      %v2011 = vunpack.c.l.b16 %v1934
      %v2012 = vunpack.c.h.b16 %v1934
      %v2013 = vunpack.c.l.b16 %v1935
      %v2014 = vunpack.c.h.b16 %v1935
      %v2015 = vunpack.c.l.b16 %v1936
      %v2016 = vunpack.c.h.b16 %v1936
      %v2017 = vunpack.c.l.b16 %v1937
      %v2018 = vunpack.c.h.b16 %v1937
      %v2019 = vunpack.c.l.b16 %v1938
      %v2020 = vunpack.c.h.b16 %v1938
      %v2021 = vunpack.c.l.b16 %v1939
      %v2022 = vunpack.c.h.b16 %v1939
      %v2023 = vunpack.c.l.b16 %v1940
      %v2024 = vunpack.c.h.b16 %v1940
      %v2025 = vunpack.c.l.b16 %v1941
      %v2026 = vunpack.c.h.b16 %v1941
      %v2027 = vunpack.c.l.b16 %v1942
      %v2028 = vunpack.c.h.b16 %v1942
      %v2029 = vunpack.c.l.b16 %v1943
      %v2030 = vunpack.c.h.b16 %v1943
      %v2031 = vunpack.c.l.b16 %v1944
      %v2032 = vunpack.c.h.b16 %v1944
      %v2033 = vunpack.c.l.b16 %v1945
      %v2034 = vunpack.c.h.b16 %v1945
      %v2035 = vunpack.c.l.b16 %v1946
      %v2036 = vunpack.c.h.b16 %v1946
      %v2037 = vunpack.c.l.b16 %v1947
      %v2038 = vunpack.c.h.b16 %v1947
      %v2039 = vunpack.c.l.b16 %v1948
      %v2040 = vunpack.c.h.b16 %v1948
      %v2041 = vunpack.c.l.b16 %v1949
      %v2042 = vunpack.c.h.b16 %v1949
      %v2043 = vunpack.c.l.b16 %v1950
      %v2044 = vunpack.c.h.b16 %v1950
      %v2045 = vunpack.c.l.b16 %v1951
      %v2046 = vunpack.c.h.b16 %v1951
      %v2047 = vunpack.c.l.b16 %v1952
      %v2048 = vunpack.c.h.b16 %v1952
      %v2049 = vpack.c.b16 %v1989, %v1985
      %v2050 = vpack.c.b16 %v1990, %v1986
      %v2051 = vpack.c.b16 %v1991, %v1987
      %v2052 = vpack.c.b16 %v1992, %v1988
      %v2053 = vpack.c.b16 %v1997, %v1993
      %v2054 = vpack.c.b16 %v1998, %v1994
      %v2055 = vpack.c.b16 %v1999, %v1995
      %v2056 = vpack.c.b16 %v2000, %v1996
      %v2057 = vpack.c.b16 %v2005, %v2001
      %v2058 = vpack.c.b16 %v2006, %v2002
      %v2059 = vpack.c.b16 %v2007, %v2003
      %v2060 = vpack.c.b16 %v2008, %v2004
      %v2061 = vpack.c.b16 %v2013, %v2009
      %v2062 = vpack.c.b16 %v2014, %v2010
      %v2063 = vpack.c.b16 %v2015, %v2011
      %v2064 = vpack.c.b16 %v2016, %v2012
      %v2065 = vpack.c.b16 %v2021, %v2017
      %v2066 = vpack.c.b16 %v2022, %v2018
      %v2067 = vpack.c.b16 %v2023, %v2019
      %v2068 = vpack.c.b16 %v2024, %v2020
      %v2069 = vpack.c.b16 %v2029, %v2025
      %v2070 = vpack.c.b16 %v2030, %v2026
      %v2071 = vpack.c.b16 %v2031, %v2027
      %v2072 = vpack.c.b16 %v2032, %v2028
      %v2073 = vpack.c.b16 %v2037, %v2033
      %v2074 = vpack.c.b16 %v2038, %v2034
      %v2075 = vpack.c.b16 %v2039, %v2035
      %v2076 = vpack.c.b16 %v2040, %v2036
      %v2077 = vpack.c.b16 %v2045, %v2041
      %v2078 = vpack.c.b16 %v2046, %v2042
      %v2079 = vpack.c.b16 %v2047, %v2043
      %v2080 = vpack.c.b16 %v2048, %v2044
      %2113 = vmatprep.subr.bf16.mxu0 %v2078
      %2114 = vmatpush1.bf16.msra.mxu0 %v2077
      %2115 = vmatprep.subr.bf16.mxu0 %v2074
      %2116 = vmatpush1.bf16.msra.mxu0 %v2073
      %2117 = vmatprep.subr.bf16.mxu0 %v2070
      %2118 = vmatpush1.bf16.msra.mxu0 %v2069
      %2119 = vmatprep.subr.bf16.mxu0 %v2066
      %2120 = vmatpush1.bf16.msra.mxu0 %v2065
      %2121 = vmatprep.subr.bf16.mxu0 %v2062
      %2122 = vmatpush1.bf16.msra.mxu0 %v2061
      %2123 = vmatprep.subr.bf16.mxu0 %v2058
      %2124 = vmatpush1.bf16.msra.mxu0 %v2057
      %2125 = vmatprep.subr.bf16.mxu0 %v2054
      %2126 = vmatpush1.bf16.msra.mxu0 %v2053
      %2127 = vmatprep.subr.bf16.mxu0 %v2050
      %2128 = vmatpush1.bf16.msra.mxu0 %v2049
      %2129 = vmatprep.subr.bf16.mxu0 0
      %2130 = vmatpush2.bf16.msra.mxu0 0
      %2131 = vmatprep.subr.bf16.mxu0 0
      %2132 = vmatpush2.bf16.msra.mxu0 0
      %2133 = vmatprep.subr.bf16.mxu0 0
      %2134 = vmatpush2.bf16.msra.mxu0 0
      %2135 = vmatprep.subr.bf16.mxu0 0
      %2136 = vmatpush2.bf16.msra.mxu0 0
      %2137 = vmatprep.subr.bf16.mxu0 0
      %2138 = vmatpush2.bf16.msra.mxu0 0
      %2139 = vmatprep.subr.bf16.mxu0 0
      %2140 = vmatpush2.bf16.msra.mxu0 0
      %2141 = vmatprep.subr.bf16.mxu0 0
      %2142 = vmatpush2.bf16.msra.mxu0 0
      %2143 = vmatprep.subr.bf16.mxu0 0
      %2144 = vmatpush2.bf16.msra.mxu0 0
      %2145 = vmatprep.mubr.bf16.mxu0 0
      %2146 = vmatmul.mubr.bf16.gmra.mxu0 %v1920
      %v2147 = vpop.f32.mrf.mxu0
      %v2148 = vadd.f32 0.0, %v2147
      %v2149 = vpop.f32.mrf.mxu0
      %v2150 = vadd.f32 0.0, %v2149
      %v2151 = vpop.f32.mrf.mxu0
      %v2152 = vpop.f32.mrf.mxu0
      %2153 = vdwg.mxu0
      %2154 = vmatprep.subr.bf16.mxu0 %v2080
      %2155 = vmatpush1.bf16.msra.mxu0 %v2079
      %2156 = vmatprep.subr.bf16.mxu0 %v2076
      %2157 = vmatpush1.bf16.msra.mxu0 %v2075
      %2158 = vmatprep.subr.bf16.mxu0 %v2072
      %2159 = vmatpush1.bf16.msra.mxu0 %v2071
      %2160 = vmatprep.subr.bf16.mxu0 %v2068
      %2161 = vmatpush1.bf16.msra.mxu0 %v2067
      %2162 = vmatprep.subr.bf16.mxu0 %v2064
      %2163 = vmatpush1.bf16.msra.mxu0 %v2063
      %2164 = vmatprep.subr.bf16.mxu0 %v2060
      %2165 = vmatpush1.bf16.msra.mxu0 %v2059
      %2166 = vmatprep.subr.bf16.mxu0 %v2056
      %2167 = vmatpush1.bf16.msra.mxu0 %v2055
      %2168 = vmatprep.subr.bf16.mxu0 %v2052
      %2169 = vmatpush1.bf16.msra.mxu0 %v2051
      %2170 = vmatprep.subr.bf16.mxu0 0
      %2171 = vmatpush2.bf16.msra.mxu0 0
      %2172 = vmatprep.subr.bf16.mxu0 0
      %2173 = vmatpush2.bf16.msra.mxu0 0
      %2174 = vmatprep.subr.bf16.mxu0 0
      %2175 = vmatpush2.bf16.msra.mxu0 0
      %2176 = vmatprep.subr.bf16.mxu0 0
      %2177 = vmatpush2.bf16.msra.mxu0 0
      %2178 = vmatprep.subr.bf16.mxu0 0
      %2179 = vmatpush2.bf16.msra.mxu0 0
      %2180 = vmatprep.subr.bf16.mxu0 0
      %2181 = vmatpush2.bf16.msra.mxu0 0
      %2182 = vmatprep.subr.bf16.mxu0 0
      %2183 = vmatpush2.bf16.msra.mxu0 0
      %2184 = vmatprep.subr.bf16.mxu0 0
      %2185 = vmatpush2.bf16.msra.mxu0 0
      %2186 = vmatprep.mubr.bf16.mxu0 0
      %2187 = vmatmul.mubr.bf16.gmra.mxu0 %v1920
      %v2188 = vpop.f32.mrf.mxu0
      %v2189 = vadd.f32 0.0, %v2188
      %v2190 = vpop.f32.mrf.mxu0
      %v2191 = vadd.f32 0.0, %v2190
      %v2192 = vpop.f32.mrf.mxu0
      %v2193 = vpop.f32.mrf.mxu0
      %2194 = vdwg.mxu0
      %v2195 = vadd.f32 %v1915, %v2148
      %v2196 = vadd.f32 %v1916, %v2150
      %v2197 = vadd.f32 %v1917, %v2189
      %v2198 = vadd.f32 %v1918, %v2191
      %v2199 = vsub.f32 0.0, %v2195
      %v2200 = vmul.f32 %v2199, 1.442695
      %v2201 = vpow.pop %v2200
      %v2202 = vadd.f32 %v2201, 1.0
      %v2203 = vrcp.pop %v2202
      %v2204 = vsub.f32 0.0, %v2196
      %v2205 = vmul.f32 %v2204, 1.442695
      %v2206 = vpow.pop %v2205
      %v2207 = vadd.f32 %v2206, 1.0
      %v2208 = vrcp.pop %v2207
      %v2209 = vtanh.pop %v2197
      %v2210 = vsub.f32 0.0, %v2198
      %v2211 = vmul.f32 %v2210, 1.442695
      %v2212 = vpow.pop %v2211
      %v2213 = vadd.f32 %v2212, 1.0
      %v2214 = vrcp.pop %v2213
      %v2215 = vld [vmem:[#allocation3] sm:$0xff]
      %v2216 = vmul.f32 %v2208, %v2215
      %v2217 = vmul.f32 %v2203, %v2209
      %v2218 = vadd.f32 %v2216, %v2217
      %v2219 = vtanh.pop %v2218
      %v2220 = vmul.f32 %v2214, %v2219
      %2221 = vst [vmem:[#allocation3] sm:$0xff] %v2218
      %2222 = vst [vmem:[#allocation2] sm:$0xff] %v2220
      %v2223 = vpack.c.bf16 %v2220, %v2220
      %s2224 = scalar_lea.vmem %s337, 20
      %2225 = vst [vmem:[%s2224] sm:$0xf] %v2223
      %s2226 = scalar_lea.vmem %s320, 192
      %v2227 = vld [vmem:[%s2226] sm:$0xff]
      %v2228 = vld [vmem:[%s2226 + $0x8] sm:$0xff]
      %v2229 = vld [vmem:[%s2226 + $0x10] sm:$0xff]
      %v2230 = vld [vmem:[%s2226 + $0x18] sm:$0xff]
      %v2231 = vld [vmem:[#allocation2] sm:$0xff]
      %v2232 = vpack.c.bf16 %v2231, %v2231
      %v2233 = vld [vmem:[%s1] sm:$0xff]
      %v2234 = vld [vmem:[%s1 + $0x8] sm:$0xff]
      %v2235 = vld [vmem:[%s1 + $0x10] sm:$0xff]
      %v2236 = vld [vmem:[%s1 + $0x18] sm:$0xff]
      %v2237 = vld [vmem:[%s1 + $0x20] sm:$0xff]
      %v2238 = vld [vmem:[%s1 + $0x28] sm:$0xff]
      %v2239 = vld [vmem:[%s1 + $0x30] sm:$0xff]
      %v2240 = vld [vmem:[%s1 + $0x38] sm:$0xff]
      %v2241 = vld [vmem:[%s1 + $0x40] sm:$0xff]
      %v2242 = vld [vmem:[%s1 + $0x48] sm:$0xff]
      %v2243 = vld [vmem:[%s1 + $0x50] sm:$0xff]
      %v2244 = vld [vmem:[%s1 + $0x58] sm:$0xff]
      %v2245 = vld [vmem:[%s1 + $0x60] sm:$0xff]
      %v2246 = vld [vmem:[%s1 + $0x68] sm:$0xff]
      %v2247 = vld [vmem:[%s1 + $0x70] sm:$0xff]
      %v2248 = vld [vmem:[%s1 + $0x78] sm:$0xff]
      %v2249 = vld [vmem:[%s1 + $0x80] sm:$0xff]
      %v2250 = vld [vmem:[%s1 + $0x88] sm:$0xff]
      %v2251 = vld [vmem:[%s1 + $0x90] sm:$0xff]
      %v2252 = vld [vmem:[%s1 + $0x98] sm:$0xff]
      %v2253 = vld [vmem:[%s1 + $0xa0] sm:$0xff]
      %v2254 = vld [vmem:[%s1 + $0xa8] sm:$0xff]
      %v2255 = vld [vmem:[%s1 + $0xb0] sm:$0xff]
      %v2256 = vld [vmem:[%s1 + $0xb8] sm:$0xff]
      %v2257 = vld [vmem:[%s1 + $0xc0] sm:$0xff]
      %v2258 = vld [vmem:[%s1 + $0xc8] sm:$0xff]
      %v2259 = vld [vmem:[%s1 + $0xd0] sm:$0xff]
      %v2260 = vld [vmem:[%s1 + $0xd8] sm:$0xff]
      %v2261 = vld [vmem:[%s1 + $0xe0] sm:$0xff]
      %v2262 = vld [vmem:[%s1 + $0xe8] sm:$0xff]
      %v2263 = vld [vmem:[%s1 + $0xf0] sm:$0xff]
      %v2264 = vld [vmem:[%s1 + $0xf8] sm:$0xff]
      %v2297 = vunpack.c.l.b16 %v2233
      %v2298 = vunpack.c.h.b16 %v2233
      %v2299 = vunpack.c.l.b16 %v2234
      %v2300 = vunpack.c.h.b16 %v2234
      %v2301 = vunpack.c.l.b16 %v2235
      %v2302 = vunpack.c.h.b16 %v2235
      %v2303 = vunpack.c.l.b16 %v2236
      %v2304 = vunpack.c.h.b16 %v2236
      %v2305 = vunpack.c.l.b16 %v2237
      %v2306 = vunpack.c.h.b16 %v2237
      %v2307 = vunpack.c.l.b16 %v2238
      %v2308 = vunpack.c.h.b16 %v2238
      %v2309 = vunpack.c.l.b16 %v2239
      %v2310 = vunpack.c.h.b16 %v2239
      %v2311 = vunpack.c.l.b16 %v2240
      %v2312 = vunpack.c.h.b16 %v2240
      %v2313 = vunpack.c.l.b16 %v2241
      %v2314 = vunpack.c.h.b16 %v2241
      %v2315 = vunpack.c.l.b16 %v2242
      %v2316 = vunpack.c.h.b16 %v2242
      %v2317 = vunpack.c.l.b16 %v2243
      %v2318 = vunpack.c.h.b16 %v2243
      %v2319 = vunpack.c.l.b16 %v2244
      %v2320 = vunpack.c.h.b16 %v2244
      %v2321 = vunpack.c.l.b16 %v2245
      %v2322 = vunpack.c.h.b16 %v2245
      %v2323 = vunpack.c.l.b16 %v2246
      %v2324 = vunpack.c.h.b16 %v2246
      %v2325 = vunpack.c.l.b16 %v2247
      %v2326 = vunpack.c.h.b16 %v2247
      %v2327 = vunpack.c.l.b16 %v2248
      %v2328 = vunpack.c.h.b16 %v2248
      %v2329 = vunpack.c.l.b16 %v2249
      %v2330 = vunpack.c.h.b16 %v2249
      %v2331 = vunpack.c.l.b16 %v2250
      %v2332 = vunpack.c.h.b16 %v2250
      %v2333 = vunpack.c.l.b16 %v2251
      %v2334 = vunpack.c.h.b16 %v2251
      %v2335 = vunpack.c.l.b16 %v2252
      %v2336 = vunpack.c.h.b16 %v2252
      %v2337 = vunpack.c.l.b16 %v2253
      %v2338 = vunpack.c.h.b16 %v2253
      %v2339 = vunpack.c.l.b16 %v2254
      %v2340 = vunpack.c.h.b16 %v2254
      %v2341 = vunpack.c.l.b16 %v2255
      %v2342 = vunpack.c.h.b16 %v2255
      %v2343 = vunpack.c.l.b16 %v2256
      %v2344 = vunpack.c.h.b16 %v2256
      %v2345 = vunpack.c.l.b16 %v2257
      %v2346 = vunpack.c.h.b16 %v2257
      %v2347 = vunpack.c.l.b16 %v2258
      %v2348 = vunpack.c.h.b16 %v2258
      %v2349 = vunpack.c.l.b16 %v2259
      %v2350 = vunpack.c.h.b16 %v2259
      %v2351 = vunpack.c.l.b16 %v2260
      %v2352 = vunpack.c.h.b16 %v2260
      %v2353 = vunpack.c.l.b16 %v2261
      %v2354 = vunpack.c.h.b16 %v2261
      %v2355 = vunpack.c.l.b16 %v2262
      %v2356 = vunpack.c.h.b16 %v2262
      %v2357 = vunpack.c.l.b16 %v2263
      %v2358 = vunpack.c.h.b16 %v2263
      %v2359 = vunpack.c.l.b16 %v2264
      %v2360 = vunpack.c.h.b16 %v2264
      %v2361 = vpack.c.b16 %v2301, %v2297
      %v2362 = vpack.c.b16 %v2302, %v2298
      %v2363 = vpack.c.b16 %v2303, %v2299
      %v2364 = vpack.c.b16 %v2304, %v2300
      %v2365 = vpack.c.b16 %v2309, %v2305
      %v2366 = vpack.c.b16 %v2310, %v2306
      %v2367 = vpack.c.b16 %v2311, %v2307
      %v2368 = vpack.c.b16 %v2312, %v2308
      %v2369 = vpack.c.b16 %v2317, %v2313
      %v2370 = vpack.c.b16 %v2318, %v2314
      %v2371 = vpack.c.b16 %v2319, %v2315
      %v2372 = vpack.c.b16 %v2320, %v2316
      %v2373 = vpack.c.b16 %v2325, %v2321
      %v2374 = vpack.c.b16 %v2326, %v2322
      %v2375 = vpack.c.b16 %v2327, %v2323
      %v2376 = vpack.c.b16 %v2328, %v2324
      %v2377 = vpack.c.b16 %v2333, %v2329
      %v2378 = vpack.c.b16 %v2334, %v2330
      %v2379 = vpack.c.b16 %v2335, %v2331
      %v2380 = vpack.c.b16 %v2336, %v2332
      %v2381 = vpack.c.b16 %v2341, %v2337
      %v2382 = vpack.c.b16 %v2342, %v2338
      %v2383 = vpack.c.b16 %v2343, %v2339
      %v2384 = vpack.c.b16 %v2344, %v2340
      %v2385 = vpack.c.b16 %v2349, %v2345
      %v2386 = vpack.c.b16 %v2350, %v2346
      %v2387 = vpack.c.b16 %v2351, %v2347
      %v2388 = vpack.c.b16 %v2352, %v2348
      %v2389 = vpack.c.b16 %v2357, %v2353
      %v2390 = vpack.c.b16 %v2358, %v2354
      %v2391 = vpack.c.b16 %v2359, %v2355
      %v2392 = vpack.c.b16 %v2360, %v2356
      %2425 = vmatprep.subr.bf16.mxu0 %v2390
      %2426 = vmatpush1.bf16.msra.mxu0 %v2389
      %2427 = vmatprep.subr.bf16.mxu0 %v2386
      %2428 = vmatpush1.bf16.msra.mxu0 %v2385
      %2429 = vmatprep.subr.bf16.mxu0 %v2382
      %2430 = vmatpush1.bf16.msra.mxu0 %v2381
      %2431 = vmatprep.subr.bf16.mxu0 %v2378
      %2432 = vmatpush1.bf16.msra.mxu0 %v2377
      %2433 = vmatprep.subr.bf16.mxu0 %v2374
      %2434 = vmatpush1.bf16.msra.mxu0 %v2373
      %2435 = vmatprep.subr.bf16.mxu0 %v2370
      %2436 = vmatpush1.bf16.msra.mxu0 %v2369
      %2437 = vmatprep.subr.bf16.mxu0 %v2366
      %2438 = vmatpush1.bf16.msra.mxu0 %v2365
      %2439 = vmatprep.subr.bf16.mxu0 %v2362
      %2440 = vmatpush1.bf16.msra.mxu0 %v2361
      %2441 = vmatprep.subr.bf16.mxu0 0
      %2442 = vmatpush2.bf16.msra.mxu0 0
      %2443 = vmatprep.subr.bf16.mxu0 0
      %2444 = vmatpush2.bf16.msra.mxu0 0
      %2445 = vmatprep.subr.bf16.mxu0 0
      %2446 = vmatpush2.bf16.msra.mxu0 0
      %2447 = vmatprep.subr.bf16.mxu0 0
      %2448 = vmatpush2.bf16.msra.mxu0 0
      %2449 = vmatprep.subr.bf16.mxu0 0
      %2450 = vmatpush2.bf16.msra.mxu0 0
      %2451 = vmatprep.subr.bf16.mxu0 0
      %2452 = vmatpush2.bf16.msra.mxu0 0
      %2453 = vmatprep.subr.bf16.mxu0 0
      %2454 = vmatpush2.bf16.msra.mxu0 0
      %2455 = vmatprep.subr.bf16.mxu0 0
      %2456 = vmatpush2.bf16.msra.mxu0 0
      %2457 = vmatprep.mubr.bf16.mxu0 0
      %2458 = vmatmul.mubr.bf16.gmra.mxu0 %v2232
      %v2459 = vpop.f32.mrf.mxu0
      %v2460 = vadd.f32 0.0, %v2459
      %v2461 = vpop.f32.mrf.mxu0
      %v2462 = vadd.f32 0.0, %v2461
      %v2463 = vpop.f32.mrf.mxu0
      %v2464 = vpop.f32.mrf.mxu0
      %2465 = vdwg.mxu0
      %2466 = vmatprep.subr.bf16.mxu0 %v2392
      %2467 = vmatpush1.bf16.msra.mxu0 %v2391
      %2468 = vmatprep.subr.bf16.mxu0 %v2388
      %2469 = vmatpush1.bf16.msra.mxu0 %v2387
      %2470 = vmatprep.subr.bf16.mxu0 %v2384
      %2471 = vmatpush1.bf16.msra.mxu0 %v2383
      %2472 = vmatprep.subr.bf16.mxu0 %v2380
      %2473 = vmatpush1.bf16.msra.mxu0 %v2379
      %2474 = vmatprep.subr.bf16.mxu0 %v2376
      %2475 = vmatpush1.bf16.msra.mxu0 %v2375
      %2476 = vmatprep.subr.bf16.mxu0 %v2372
      %2477 = vmatpush1.bf16.msra.mxu0 %v2371
      %2478 = vmatprep.subr.bf16.mxu0 %v2368
      %2479 = vmatpush1.bf16.msra.mxu0 %v2367
      %2480 = vmatprep.subr.bf16.mxu0 %v2364
      %2481 = vmatpush1.bf16.msra.mxu0 %v2363
      %2482 = vmatprep.subr.bf16.mxu0 0
      %2483 = vmatpush2.bf16.msra.mxu0 0
      %2484 = vmatprep.subr.bf16.mxu0 0
      %2485 = vmatpush2.bf16.msra.mxu0 0
      %2486 = vmatprep.subr.bf16.mxu0 0
      %2487 = vmatpush2.bf16.msra.mxu0 0
      %2488 = vmatprep.subr.bf16.mxu0 0
      %2489 = vmatpush2.bf16.msra.mxu0 0
      %2490 = vmatprep.subr.bf16.mxu0 0
      %2491 = vmatpush2.bf16.msra.mxu0 0
      %2492 = vmatprep.subr.bf16.mxu0 0
      %2493 = vmatpush2.bf16.msra.mxu0 0
      %2494 = vmatprep.subr.bf16.mxu0 0
      %2495 = vmatpush2.bf16.msra.mxu0 0
      %2496 = vmatprep.subr.bf16.mxu0 0
      %2497 = vmatpush2.bf16.msra.mxu0 0
      %2498 = vmatprep.mubr.bf16.mxu0 0
      %2499 = vmatmul.mubr.bf16.gmra.mxu0 %v2232
      %v2500 = vpop.f32.mrf.mxu0
      %v2501 = vadd.f32 0.0, %v2500
      %v2502 = vpop.f32.mrf.mxu0
      %v2503 = vadd.f32 0.0, %v2502
      %v2504 = vpop.f32.mrf.mxu0
      %v2505 = vpop.f32.mrf.mxu0
      %2506 = vdwg.mxu0
      %v2507 = vadd.f32 %v2227, %v2460
      %v2508 = vadd.f32 %v2228, %v2462
      %v2509 = vadd.f32 %v2229, %v2501
      %v2510 = vadd.f32 %v2230, %v2503
      %v2511 = vsub.f32 0.0, %v2507
      %v2512 = vmul.f32 %v2511, 1.442695
      %v2513 = vpow.pop %v2512
      %v2514 = vadd.f32 %v2513, 1.0
      %v2515 = vrcp.pop %v2514
      %v2516 = vsub.f32 0.0, %v2508
      %v2517 = vmul.f32 %v2516, 1.442695
      %v2518 = vpow.pop %v2517
      %v2519 = vadd.f32 %v2518, 1.0
      %v2520 = vrcp.pop %v2519
      %v2521 = vtanh.pop %v2509
      %v2522 = vsub.f32 0.0, %v2510
      %v2523 = vmul.f32 %v2522, 1.442695
      %v2524 = vpow.pop %v2523
      %v2525 = vadd.f32 %v2524, 1.0
      %v2526 = vrcp.pop %v2525
      %v2527 = vld [vmem:[#allocation3] sm:$0xff]
      %v2528 = vmul.f32 %v2520, %v2527
      %v2529 = vmul.f32 %v2515, %v2521
      %v2530 = vadd.f32 %v2528, %v2529
      %v2531 = vtanh.pop %v2530
      %v2532 = vmul.f32 %v2526, %v2531
      %2533 = vst [vmem:[#allocation3] sm:$0xff] %v2530
      %2534 = vst [vmem:[#allocation2] sm:$0xff] %v2532
      %v2535 = vpack.c.bf16 %v2532, %v2532
      %s2536 = scalar_lea.vmem %s337, 24
      %2537 = vst [vmem:[%s2536] sm:$0xf] %v2535
      %s2538 = scalar_lea.vmem %s320, 224
      %v2539 = vld [vmem:[%s2538] sm:$0xff]
      %v2540 = vld [vmem:[%s2538 + $0x8] sm:$0xff]
      %v2541 = vld [vmem:[%s2538 + $0x10] sm:$0xff]
      %v2542 = vld [vmem:[%s2538 + $0x18] sm:$0xff]
      %v2543 = vld [vmem:[#allocation2] sm:$0xff]
      %v2544 = vpack.c.bf16 %v2543, %v2543
      %v2545 = vld [vmem:[%s1] sm:$0xff]
      %v2546 = vld [vmem:[%s1 + $0x8] sm:$0xff]
      %v2547 = vld [vmem:[%s1 + $0x10] sm:$0xff]
      %v2548 = vld [vmem:[%s1 + $0x18] sm:$0xff]
      %v2549 = vld [vmem:[%s1 + $0x20] sm:$0xff]
      %v2550 = vld [vmem:[%s1 + $0x28] sm:$0xff]
      %v2551 = vld [vmem:[%s1 + $0x30] sm:$0xff]
      %v2552 = vld [vmem:[%s1 + $0x38] sm:$0xff]
      %v2553 = vld [vmem:[%s1 + $0x40] sm:$0xff]
      %v2554 = vld [vmem:[%s1 + $0x48] sm:$0xff]
      %v2555 = vld [vmem:[%s1 + $0x50] sm:$0xff]
      %v2556 = vld [vmem:[%s1 + $0x58] sm:$0xff]
      %v2557 = vld [vmem:[%s1 + $0x60] sm:$0xff]
      %v2558 = vld [vmem:[%s1 + $0x68] sm:$0xff]
      %v2559 = vld [vmem:[%s1 + $0x70] sm:$0xff]
      %v2560 = vld [vmem:[%s1 + $0x78] sm:$0xff]
      %v2561 = vld [vmem:[%s1 + $0x80] sm:$0xff]
      %v2562 = vld [vmem:[%s1 + $0x88] sm:$0xff]
      %v2563 = vld [vmem:[%s1 + $0x90] sm:$0xff]
      %v2564 = vld [vmem:[%s1 + $0x98] sm:$0xff]
      %v2565 = vld [vmem:[%s1 + $0xa0] sm:$0xff]
      %v2566 = vld [vmem:[%s1 + $0xa8] sm:$0xff]
      %v2567 = vld [vmem:[%s1 + $0xb0] sm:$0xff]
      %v2568 = vld [vmem:[%s1 + $0xb8] sm:$0xff]
      %v2569 = vld [vmem:[%s1 + $0xc0] sm:$0xff]
      %v2570 = vld [vmem:[%s1 + $0xc8] sm:$0xff]
      %v2571 = vld [vmem:[%s1 + $0xd0] sm:$0xff]
      %v2572 = vld [vmem:[%s1 + $0xd8] sm:$0xff]
      %v2573 = vld [vmem:[%s1 + $0xe0] sm:$0xff]
      %v2574 = vld [vmem:[%s1 + $0xe8] sm:$0xff]
      %v2575 = vld [vmem:[%s1 + $0xf0] sm:$0xff]
      %v2576 = vld [vmem:[%s1 + $0xf8] sm:$0xff]
      %v2609 = vunpack.c.l.b16 %v2545
      %v2610 = vunpack.c.h.b16 %v2545
      %v2611 = vunpack.c.l.b16 %v2546
      %v2612 = vunpack.c.h.b16 %v2546
      %v2613 = vunpack.c.l.b16 %v2547
      %v2614 = vunpack.c.h.b16 %v2547
      %v2615 = vunpack.c.l.b16 %v2548
      %v2616 = vunpack.c.h.b16 %v2548
      %v2617 = vunpack.c.l.b16 %v2549
      %v2618 = vunpack.c.h.b16 %v2549
      %v2619 = vunpack.c.l.b16 %v2550
      %v2620 = vunpack.c.h.b16 %v2550
      %v2621 = vunpack.c.l.b16 %v2551
      %v2622 = vunpack.c.h.b16 %v2551
      %v2623 = vunpack.c.l.b16 %v2552
      %v2624 = vunpack.c.h.b16 %v2552
      %v2625 = vunpack.c.l.b16 %v2553
      %v2626 = vunpack.c.h.b16 %v2553
      %v2627 = vunpack.c.l.b16 %v2554
      %v2628 = vunpack.c.h.b16 %v2554
      %v2629 = vunpack.c.l.b16 %v2555
      %v2630 = vunpack.c.h.b16 %v2555
      %v2631 = vunpack.c.l.b16 %v2556
      %v2632 = vunpack.c.h.b16 %v2556
      %v2633 = vunpack.c.l.b16 %v2557
      %v2634 = vunpack.c.h.b16 %v2557
      %v2635 = vunpack.c.l.b16 %v2558
      %v2636 = vunpack.c.h.b16 %v2558
      %v2637 = vunpack.c.l.b16 %v2559
      %v2638 = vunpack.c.h.b16 %v2559
      %v2639 = vunpack.c.l.b16 %v2560
      %v2640 = vunpack.c.h.b16 %v2560
      %v2641 = vunpack.c.l.b16 %v2561
      %v2642 = vunpack.c.h.b16 %v2561
      %v2643 = vunpack.c.l.b16 %v2562
      %v2644 = vunpack.c.h.b16 %v2562
      %v2645 = vunpack.c.l.b16 %v2563
      %v2646 = vunpack.c.h.b16 %v2563
      %v2647 = vunpack.c.l.b16 %v2564
      %v2648 = vunpack.c.h.b16 %v2564
      %v2649 = vunpack.c.l.b16 %v2565
      %v2650 = vunpack.c.h.b16 %v2565
      %v2651 = vunpack.c.l.b16 %v2566
      %v2652 = vunpack.c.h.b16 %v2566
      %v2653 = vunpack.c.l.b16 %v2567
      %v2654 = vunpack.c.h.b16 %v2567
      %v2655 = vunpack.c.l.b16 %v2568
      %v2656 = vunpack.c.h.b16 %v2568
      %v2657 = vunpack.c.l.b16 %v2569
      %v2658 = vunpack.c.h.b16 %v2569
      %v2659 = vunpack.c.l.b16 %v2570
      %v2660 = vunpack.c.h.b16 %v2570
      %v2661 = vunpack.c.l.b16 %v2571
      %v2662 = vunpack.c.h.b16 %v2571
      %v2663 = vunpack.c.l.b16 %v2572
      %v2664 = vunpack.c.h.b16 %v2572
      %v2665 = vunpack.c.l.b16 %v2573
      %v2666 = vunpack.c.h.b16 %v2573
      %v2667 = vunpack.c.l.b16 %v2574
      %v2668 = vunpack.c.h.b16 %v2574
      %v2669 = vunpack.c.l.b16 %v2575
      %v2670 = vunpack.c.h.b16 %v2575
      %v2671 = vunpack.c.l.b16 %v2576
      %v2672 = vunpack.c.h.b16 %v2576
      %v2673 = vpack.c.b16 %v2613, %v2609
      %v2674 = vpack.c.b16 %v2614, %v2610
      %v2675 = vpack.c.b16 %v2615, %v2611
      %v2676 = vpack.c.b16 %v2616, %v2612
      %v2677 = vpack.c.b16 %v2621, %v2617
      %v2678 = vpack.c.b16 %v2622, %v2618
      %v2679 = vpack.c.b16 %v2623, %v2619
      %v2680 = vpack.c.b16 %v2624, %v2620
      %v2681 = vpack.c.b16 %v2629, %v2625
      %v2682 = vpack.c.b16 %v2630, %v2626
      %v2683 = vpack.c.b16 %v2631, %v2627
      %v2684 = vpack.c.b16 %v2632, %v2628
      %v2685 = vpack.c.b16 %v2637, %v2633
      %v2686 = vpack.c.b16 %v2638, %v2634
      %v2687 = vpack.c.b16 %v2639, %v2635
      %v2688 = vpack.c.b16 %v2640, %v2636
      %v2689 = vpack.c.b16 %v2645, %v2641
      %v2690 = vpack.c.b16 %v2646, %v2642
      %v2691 = vpack.c.b16 %v2647, %v2643
      %v2692 = vpack.c.b16 %v2648, %v2644
      %v2693 = vpack.c.b16 %v2653, %v2649
      %v2694 = vpack.c.b16 %v2654, %v2650
      %v2695 = vpack.c.b16 %v2655, %v2651
      %v2696 = vpack.c.b16 %v2656, %v2652
      %v2697 = vpack.c.b16 %v2661, %v2657
      %v2698 = vpack.c.b16 %v2662, %v2658
      %v2699 = vpack.c.b16 %v2663, %v2659
      %v2700 = vpack.c.b16 %v2664, %v2660
      %v2701 = vpack.c.b16 %v2669, %v2665
      %v2702 = vpack.c.b16 %v2670, %v2666
      %v2703 = vpack.c.b16 %v2671, %v2667
      %v2704 = vpack.c.b16 %v2672, %v2668
      %2737 = vmatprep.subr.bf16.mxu0 %v2702
      %2738 = vmatpush1.bf16.msra.mxu0 %v2701
      %2739 = vmatprep.subr.bf16.mxu0 %v2698
      %2740 = vmatpush1.bf16.msra.mxu0 %v2697
      %2741 = vmatprep.subr.bf16.mxu0 %v2694
      %2742 = vmatpush1.bf16.msra.mxu0 %v2693
      %2743 = vmatprep.subr.bf16.mxu0 %v2690
      %2744 = vmatpush1.bf16.msra.mxu0 %v2689
      %2745 = vmatprep.subr.bf16.mxu0 %v2686
      %2746 = vmatpush1.bf16.msra.mxu0 %v2685
      %2747 = vmatprep.subr.bf16.mxu0 %v2682
      %2748 = vmatpush1.bf16.msra.mxu0 %v2681
      %2749 = vmatprep.subr.bf16.mxu0 %v2678
      %2750 = vmatpush1.bf16.msra.mxu0 %v2677
      %2751 = vmatprep.subr.bf16.mxu0 %v2674
      %2752 = vmatpush1.bf16.msra.mxu0 %v2673
      %2753 = vmatprep.subr.bf16.mxu0 0
      %2754 = vmatpush2.bf16.msra.mxu0 0
      %2755 = vmatprep.subr.bf16.mxu0 0
      %2756 = vmatpush2.bf16.msra.mxu0 0
      %2757 = vmatprep.subr.bf16.mxu0 0
      %2758 = vmatpush2.bf16.msra.mxu0 0
      %2759 = vmatprep.subr.bf16.mxu0 0
      %2760 = vmatpush2.bf16.msra.mxu0 0
      %2761 = vmatprep.subr.bf16.mxu0 0
      %2762 = vmatpush2.bf16.msra.mxu0 0
      %2763 = vmatprep.subr.bf16.mxu0 0
      %2764 = vmatpush2.bf16.msra.mxu0 0
      %2765 = vmatprep.subr.bf16.mxu0 0
      %2766 = vmatpush2.bf16.msra.mxu0 0
      %2767 = vmatprep.subr.bf16.mxu0 0
      %2768 = vmatpush2.bf16.msra.mxu0 0
      %2769 = vmatprep.mubr.bf16.mxu0 0
      %2770 = vmatmul.mubr.bf16.gmra.mxu0 %v2544
      %v2771 = vpop.f32.mrf.mxu0
      %v2772 = vadd.f32 0.0, %v2771
      %v2773 = vpop.f32.mrf.mxu0
      %v2774 = vadd.f32 0.0, %v2773
      %v2775 = vpop.f32.mrf.mxu0
      %v2776 = vpop.f32.mrf.mxu0
      %2777 = vdwg.mxu0
      %2778 = vmatprep.subr.bf16.mxu0 %v2704
      %2779 = vmatpush1.bf16.msra.mxu0 %v2703
      %2780 = vmatprep.subr.bf16.mxu0 %v2700
      %2781 = vmatpush1.bf16.msra.mxu0 %v2699
      %2782 = vmatprep.subr.bf16.mxu0 %v2696
      %2783 = vmatpush1.bf16.msra.mxu0 %v2695
      %2784 = vmatprep.subr.bf16.mxu0 %v2692
      %2785 = vmatpush1.bf16.msra.mxu0 %v2691
      %2786 = vmatprep.subr.bf16.mxu0 %v2688
      %2787 = vmatpush1.bf16.msra.mxu0 %v2687
      %2788 = vmatprep.subr.bf16.mxu0 %v2684
      %2789 = vmatpush1.bf16.msra.mxu0 %v2683
      %2790 = vmatprep.subr.bf16.mxu0 %v2680
      %2791 = vmatpush1.bf16.msra.mxu0 %v2679
      %2792 = vmatprep.subr.bf16.mxu0 %v2676
      %2793 = vmatpush1.bf16.msra.mxu0 %v2675
      %2794 = vmatprep.subr.bf16.mxu0 0
      %2795 = vmatpush2.bf16.msra.mxu0 0
      %2796 = vmatprep.subr.bf16.mxu0 0
      %2797 = vmatpush2.bf16.msra.mxu0 0
      %2798 = vmatprep.subr.bf16.mxu0 0
      %2799 = vmatpush2.bf16.msra.mxu0 0
      %2800 = vmatprep.subr.bf16.mxu0 0
      %2801 = vmatpush2.bf16.msra.mxu0 0
      %2802 = vmatprep.subr.bf16.mxu0 0
      %2803 = vmatpush2.bf16.msra.mxu0 0
      %2804 = vmatprep.subr.bf16.mxu0 0
      %2805 = vmatpush2.bf16.msra.mxu0 0
      %2806 = vmatprep.subr.bf16.mxu0 0
      %2807 = vmatpush2.bf16.msra.mxu0 0
      %2808 = vmatprep.subr.bf16.mxu0 0
      %2809 = vmatpush2.bf16.msra.mxu0 0
      %2810 = vmatprep.mubr.bf16.mxu0 0
      %2811 = vmatmul.mubr.bf16.gmra.mxu0 %v2544
      %v2812 = vpop.f32.mrf.mxu0
      %v2813 = vadd.f32 0.0, %v2812
      %v2814 = vpop.f32.mrf.mxu0
      %v2815 = vadd.f32 0.0, %v2814
      %v2816 = vpop.f32.mrf.mxu0
      %v2817 = vpop.f32.mrf.mxu0
      %2818 = vdwg.mxu0
      %v2819 = vadd.f32 %v2539, %v2772
      %v2820 = vadd.f32 %v2540, %v2774
      %v2821 = vadd.f32 %v2541, %v2813
      %v2822 = vadd.f32 %v2542, %v2815
      %v2823 = vsub.f32 0.0, %v2819
      %v2824 = vmul.f32 %v2823, 1.442695
      %v2825 = vpow.pop %v2824
      %v2826 = vadd.f32 %v2825, 1.0
      %v2827 = vrcp.pop %v2826
      %v2828 = vsub.f32 0.0, %v2820
      %v2829 = vmul.f32 %v2828, 1.442695
      %v2830 = vpow.pop %v2829
      %v2831 = vadd.f32 %v2830, 1.0
      %v2832 = vrcp.pop %v2831
      %v2833 = vtanh.pop %v2821
      %v2834 = vsub.f32 0.0, %v2822
      %v2835 = vmul.f32 %v2834, 1.442695
      %v2836 = vpow.pop %v2835
      %v2837 = vadd.f32 %v2836, 1.0
      %v2838 = vrcp.pop %v2837
      %v2839 = vld [vmem:[#allocation3] sm:$0xff]
      %v2840 = vmul.f32 %v2832, %v2839
      %v2841 = vmul.f32 %v2827, %v2833
      %v2842 = vadd.f32 %v2840, %v2841
      %v2843 = vtanh.pop %v2842
      %v2844 = vmul.f32 %v2838, %v2843
      %2845 = vst [vmem:[#allocation3] sm:$0xff] %v2842
      %2846 = vst [vmem:[#allocation2] sm:$0xff] %v2844
      %v2847 = vpack.c.bf16 %v2844, %v2844
      %s2848 = scalar_lea.vmem %s337, 28
      %2849 = vst [vmem:[%s2848] sm:$0xf] %v2847
      %p2850 = scmp.eq.s32.totalorder %s23, 1
      // Predicated region
      $region41: #{forward.6} parent=35 // pred_check
        %p2851 = pneg %p2850
      $region42: #{forward.6} parent=35 // pred_check_branch
        %2853 = sbr.rel (%p2851) target = $region44
      $region43: #{forward.6} parent=35 // pred_region
        %v2854 = vld [vmem:[#allocation2] sm:$0xff]
        %2855 = vst [vmem:[%s342] sm:$0xff] %v2854
        %v2856 = vld [vmem:[#allocation3] sm:$0xff]
        %2857 = vst [vmem:[%s346] sm:$0xff] %v2856
      $region44: #{forward.6} parent=35 // pred_fallthru
        _
      %s2858 = smul.u32 8, %s23
      %p2859 = scmp.lt.s32.totalorder %s2858, 15
      %s2860 = scalar_select %p2859, %s2858, 15
      %p2861 = scmp.lt.s32.totalorder %s22, 0
      %s2862 = scalar_select %p2861, %s22, 0
      %s2863 = sadd.s32 %s2862, %s2860
      %s2864 = smul.addr %s2863, 4
      %s2865 = scalar_lea.vmem %s4, %s2864
      %p2866 = scmp.lt.s32.totalorder %s22, 0
      %s2867 = scalar_select %p2866, %s22, 0
      %s2868 = smul.addr %s2867, 8
      %s2869 = scalar_lea.vmem %s5, %s2868
      %p2870 = scmp.lt.s32.totalorder %s22, 0
      %s2871 = scalar_select %p2870, %s22, 0
      %s2872 = smul.addr %s2871, 8
      %s2873 = scalar_lea.vmem %s6, %s2872
      // Predicated region
      $region45: #{forward.6} parent=35 // pred_check
        %p2874 = pneg %p151
      $region46: #{forward.6} parent=35 // pred_check_branch
        %2876 = sbr.rel (%p2874) target = $region48
      $region47: #{forward.6} parent=35 // pred_region
        %s2877 = smul.u32 8, %s23
      $region48: #{forward.6} parent=35 // pred_fallthru
        _
      // Predicated region
      $region49: #{forward.6} parent=35 // pred_check
        %p2878 = pneg %p177
      $region50: #{forward.6} parent=35 // pred_check_branch
        %2880 = sbr.rel (%p2878) target = $region52
      $region51: #{forward.6} parent=35 // pred_region
        _
      $region52: #{forward.6} parent=35 // pred_fallthru
        _
      // Predicated region
      $region53: #{forward.6} parent=35 // pred_check
        %p2881 = pneg %p203
      $region54: #{forward.6} parent=35 // pred_check_branch
        %2883 = sbr.rel (%p2881) target = $region56
      $region55: #{forward.6} parent=35 // pred_region
        _
      $region56: #{forward.6} parent=35 // pred_fallthru
        _
      // Predicated region
      $region57: #{forward.6} parent=35 // pred_check
        %p2884 = pneg %p177
      $region58: #{forward.6} parent=35 // pred_check_branch
        %2886 = sbr.rel (%p2884) target = $region60
      $region59: #{forward.6} parent=35 // pred_region
        %p2887 = scmp.lt.s32.totalorder %s22, 0
        %s2888 = scalar_select %p2887, %s22, 0
        %s2889 = smul.addr %s2888, 8
        %s2890 = scalar_lea.vmem %s5, %s2889
      $region60: #{forward.6} parent=35 // pred_fallthru
        _
      // Predicated region
      $region61: #{forward.6} parent=35 // pred_check
        %p2891 = pneg %p203
      $region62: #{forward.6} parent=35 // pred_check_branch
        %2893 = sbr.rel (%p2891) target = $region64
      $region63: #{forward.6} parent=35 // pred_region
        %p2894 = scmp.lt.s32.totalorder %s22, 0
        %s2895 = scalar_select %p2894, %s22, 0
        %s2896 = smul.addr %s2895, 8
        %s2897 = scalar_lea.vmem %s6, %s2896
      $region64: #{forward.6} parent=35 // pred_fallthru
        _
    $region36: #{forward.6} parent=5 // pred_fallthru
      _
    %p2898 = scmp.le.s32.totalorder 2, %s13
    // Predicated region
    $region65: #{forward.6} parent=5 // pred_check
      %p2899 = pneg %p2898
    $region66: #{forward.6} parent=5 // pred_check_branch
      %2901 = sbr.rel (%p2899) target = $region68
    $region67: #{forward.6} parent=5 // pred_region
      %s2902 = ssub.s32 %s13, 2
      // Predicated region
      $region69: #{forward.6} parent=67 // pred_check
        %p2903 = pneg %p157
      $region70: #{forward.6} parent=67 // pred_check_branch
        %2905 = sbr.rel (%p2903) target = $region72
      $region71: #{forward.6} parent=67 // pred_region
        %s2906 = smul.u32 8, %s25
        %p2907 = scmp.lt.s32.totalorder %s2906, 15
        %s2908 = scalar_select %p2907, %s2906, 15
        %p2909 = scmp.lt.s32.totalorder %s24, 0
        %s2910 = scalar_select %p2909, %s24, 0
        %s2911 = sadd.s32 %s2910, %s2908
        %s2912 = smul.addr %s2911, 4
        %s2913 = scalar_lea.vmem %s4, %s2912
      $region72: #{forward.6} parent=67 // pred_fallthru
        _
    $region68: #{forward.6} parent=5 // pred_fallthru
      _
  $region6: #{forward.6} parent=0 // loop_footer
    %s17 = sadd.s32 1, %s13
  $region7: #{forward.6} parent=0 // loop_footer_branch
    %12 = sbr.rel target = $region3
  $region8: #{forward.6} parent=0 // loop_exit
    _

</llo_original>
